<compile_context>
chip_gen: v6e
topology: v6e:2x2x1
jax: 0.10.0
libtpu: 0.0.40
codegen_flags: <defaults>
</compile_context>

<pallas_src>
import functools

import jax
import jax.numpy as jnp
from jax.experimental import pallas as pl
from jax.experimental.pallas import tpu as pltpu


# ----------------------------------------------------------------------------
# Pallas kernels
# ----------------------------------------------------------------------------
def _conv_band_lrn_kernel(x_ref, w_ref, b_ref, band_ref, o_ref, *, act, a_os, k_lrn):
    """(bm,K) @ (K,Cout) + bias, optional ReLU, then cross-channel LRN: the window sum of
    y^2 is a banded (Cout,Cout) matmul on the lane axis; beta == 0.5 -> single rsqrt."""
    y = jnp.dot(x_ref[...].astype(jnp.bfloat16), w_ref[...].astype(jnp.bfloat16),
                preferred_element_type=jnp.float32)
    y = y + b_ref[...]
    if act == "relu":
        y = jnp.maximum(y, 0.0)
    win = jnp.dot(y * y, band_ref[...], preferred_element_type=jnp.float32)
    o_ref[...] = y * jax.lax.rsqrt(k_lrn + a_os * win)


def _conv_c1_lrn_kernel(x_ref, w_ref, b_ref, o_ref, *, act, a_os, k_lrn):
    """Same as above for a single channel per spatial position: the LRN window sum
    degenerates to the element's own square, so the whole LRN is elementwise."""
    y = jnp.dot(x_ref[...].astype(jnp.bfloat16), w_ref[...].astype(jnp.bfloat16),
                preferred_element_type=jnp.float32)
    y = y + b_ref[...]
    if act == "relu":
        y = jnp.maximum(y, 0.0)
    o_ref[...] = y * jax.lax.rsqrt(k_lrn + a_os * (y * y))


def _fc_reparam_fc_kernel(h_ref,
                          ew1, eb1, ew2, eb2,
                          ew3p, eb3p, ew3m, eb3m, ew3v, eb3v,
                          u_ref, n_ref,
                          dw1b, dw1g, db1, dw2, db2, dw3, db3,
                          p_ref, mu_ref, logvar_ref, d_ref):
    """Fused encoder FC stack -> sigmoid / Bernoulli + Gaussian reparametrization ->
    decoder FC stack (batch is tiny; all weights co-reside in VMEM, one launch)."""
    relu = lambda t: jnp.maximum(t, 0.0)
    sigmoid = lambda t: 1.0 / (1.0 + jnp.exp(-t))

    h = relu(jnp.dot(h_ref[...], ew1[...], preferred_element_type=jnp.float32) + eb1[...])
    h = relu(jnp.dot(h, ew2[...], preferred_element_type=jnp.float32) + eb2[...])
    # e_fc3 split at init into the p / mu / logvar column groups (avoids in-kernel lane slicing)
    p_raw = jnp.dot(h, ew3p[...], preferred_element_type=jnp.float32) + eb3p[...]
    mu = jnp.dot(h, ew3m[...], preferred_element_type=jnp.float32) + eb3m[...]
    logvar = jnp.dot(h, ew3v[...], preferred_element_type=jnp.float32) + eb3v[...]

    p = sigmoid(p_raw)
    p_ref[...] = p
    mu_ref[...] = mu
    logvar_ref[...] = logvar

    eps = u_ref[...]
    # log(p+1e-20) - log(1-p+1e-20) is exactly the logit of p = sigmoid(p_raw), i.e. p_raw
    # itself (faster and more stable than re-deriving it from a saturated sigmoid).
    logit = jnp.log(eps + 1e-20) - jnp.log(1.0 - eps + 1e-20) + p_raw
    bern_z = sigmoid(logit)
    gaus_z = mu + jnp.exp(0.5 * logvar) * n_ref[...]

    # decoder FCs; d_fc1 is split row-wise so no in-kernel concat of [bern_z, gaus_z]
    d = relu(jnp.dot(bern_z, dw1b[...], preferred_element_type=jnp.float32)
             + jnp.dot(gaus_z, dw1g[...], preferred_element_type=jnp.float32) + db1[...])
    d = relu(jnp.dot(d, dw2[...], preferred_element_type=jnp.float32) + db2[...])
    d_ref[...] = relu(jnp.dot(d, dw3[...], preferred_element_type=jnp.float32) + db3[...])


# ----------------------------------------------------------------------------
# Pallas wrappers
# ----------------------------------------------------------------------------
def _pick_bm(m):
    """Use >=2 grid steps only when the row count is large enough to matter (v7x megacore);
    otherwise a single full block has the least per-step overhead."""
    for cand in (256, 512, 384, 128):
        if m >= 2 * cand and m % cand == 0:
            return cand
    return m


def _matmul_lrn(patches, w, b, band=None, *, act, alpha=1e-3, size=5, k_lrn=1.0):
    """(rows, K) im2col slab @ (K, Cout) weight with fused bias / ReLU / LRN epilogue."""
    m, kdim = patches.shape
    nout = w.shape[1]
    pad = (-m) % 8
    if pad:                                   # keep sublane-aligned blocks for odd row counts
        patches = jnp.pad(patches, ((0, pad), (0, 0)))
    mp = m + pad
    bm = _pick_bm(mp)
    a_os = alpha / size

    in_specs = [pl.BlockSpec((bm, kdim), lambda i: (i, 0)),
                pl.BlockSpec((kdim, nout), lambda i: (0, 0)),
                pl.BlockSpec((1, nout), lambda i: (0, 0))]
    args = [patches, w, b]
    if band is not None:
        in_specs.append(pl.BlockSpec((nout, nout), lambda i: (0, 0)))
        args.append(band)
        kern = functools.partial(_conv_band_lrn_kernel, act=act, a_os=a_os, k_lrn=k_lrn)
    else:
        kern = functools.partial(_conv_c1_lrn_kernel, act=act, a_os=a_os, k_lrn=k_lrn)

    out = pl.pallas_call(
        kern,
        out_shape=jax.ShapeDtypeStruct((mp, nout), jnp.float32),
        grid_spec=pltpu.PrefetchScalarGridSpec(
            num_scalar_prefetch=0,
            grid=(mp // bm,),
            in_specs=in_specs,
            out_specs=pl.BlockSpec((bm, nout), lambda i: (i, 0))),
        compiler_params=pltpu.CompilerParams(dimension_semantics=("parallel",)),
    )(*args)
    return out[:m] if pad else out


def _im2col_nhwc(x, ksize, stride, pad):
    """x: NHWC -> patches (N*Ho*Wo, ksize*ksize*C), feature order (kh, kw, C)."""
    n, h, w, c = x.shape
    ho = (h + 2 * pad - ksize) // stride + 1
    wo = (w + 2 * pad - ksize) // stride + 1
    xp = jnp.pad(x, ((0, 0), (pad, pad), (pad, pad), (0, 0)))
    cols = []
    for kh in range(ksize):
        for kw in range(ksize):
            cols.append(xp[:, kh:kh + stride * ho:stride, kw:kw + stride * wo:stride, :])
    patches = jnp.stack(cols, axis=3)                       # (N, Ho, Wo, k*k, C)
    return patches.reshape(n * ho * wo, ksize * ksize * c), ho, wo


def conv2d_relu_lrn(x, w, b, band):
    """nn.Conv2d(Cin, Cout, 4, 2, 1) + ReLU + LocalResponseNorm, fused in one Pallas call.
    x is NHWC; w is the im2col-ready (16*Cin, Cout) weight."""
    n = x.shape[0]
    cout = w.shape[1]
    patches, ho, wo = _im2col_nhwc(x, 4, 2, 1)
    y = _matmul_lrn(patches, w, b, band, act="relu")
    return y.reshape(n, ho, wo, cout)


def conv_transpose2d_lrn(x, w_cat, b_cat, band=None, *, act="relu"):
    """nn.ConvTranspose2d(Cin, Cout, 4, stride=2, pad=1) (+ optional ReLU) + LRN via the
    sub-pixel decomposition: one stride-1, kernel-2 im2col of x and a single matmul that
    produces all 4 output parities (columns grouped [g0|g1|g2|g3], g = 2*ph + pw).
    Bias/ReLU/LRN are applied per parity group inside the kernel (block-diagonal band);
    the groups are then interleaved back into the (2H, 2W) NHWC output."""
    n, h, w, c = x.shape
    cout4 = w_cat.shape[1]
    cout = cout4 // 4
    patches, hp, wp = _im2col_nhwc(x, 2, 1, 1)              # hp = h+1, wp = w+1
    big = _matmul_lrn(patches, w_cat, b_cat, band, act=act)
    big = big.reshape(n, hp, wp, cout4)
    rows = []
    for ph in (0, 1):
        cols = []
        for pw in (0, 1):
            g = 2 * ph + pw
            cols.append(big[:, ph:ph + h, pw:pw + w, g * cout:(g + 1) * cout])
        rows.append(jnp.stack(cols, axis=3))                # (N, H, W, 2, Cout)
    y = jnp.stack(rows, axis=2)                             # (N, H, 2, W, 2, Cout)
    return y.reshape(n, 2 * h, 2 * w, cout)


def fc_reparam_fc(h, u, nrm, prm):
    nb = h.shape[0]
    zb = u.shape[1]
    zg = nrm.shape[1]
    f16 = prm["d_fc3_w"].shape[1]
    return pl.pallas_call(
        _fc_reparam_fc_kernel,
        out_shape=(jax.ShapeDtypeStruct((nb, zb), jnp.float32),
                   jax.ShapeDtypeStruct((nb, zg), jnp.float32),
                   jax.ShapeDtypeStruct((nb, zg), jnp.float32),
                   jax.ShapeDtypeStruct((nb, f16), jnp.float32)),
    )(h,
      prm["e_fc1_w"], prm["e_fc1_b"], prm["e_fc2_w"], prm["e_fc2_b"],
      prm["e_fc3p_w"], prm["e_fc3p_b"], prm["e_fc3m_w"], prm["e_fc3m_b"],
      prm["e_fc3v_w"], prm["e_fc3v_b"],
      u, nrm,
      prm["d_fc1b_w"], prm["d_fc1g_w"], prm["d_fc1_b"],
      prm["d_fc2_w"], prm["d_fc2_b"], prm["d_fc3_w"], prm["d_fc3_b"])


# ----------------------------------------------------------------------------
# Parameter preparation (kernel-ready layouts)
# ----------------------------------------------------------------------------
def _lrn_band(c, size):
    idx = jnp.arange(c)
    return (jnp.abs(idx[:, None] - idx[None, :]) <= size // 2).astype(jnp.float32)


def _subpixel_weight(w):
    """ConvTranspose2d weight (Cin, Cout, 4, 4) -> (4*Cin, 4*Cout) sub-pixel matmul weight.
    Output parity (ph, pw) of a stride-2 / k=4 / pad=1 transposed conv is a stride-1 conv of
    x (padded by 1) with the 2x2 tap subset kh = (3-ph)-2*dh, kw = (3-pw)-2*dw; rows follow
    the (dh, dw, Cin) im2col feature order, column group g = 2*ph + pw."""
    cin, cout = w.shape[0], w.shape[1]
    groups = []
    for ph in (0, 1):
        for pw in (0, 1):
            taps = []
            for dh in (0, 1):
                for dw in (0, 1):
                    taps.append(w[:, :, (3 - ph) - 2 * dh, (3 - pw) - 2 * dw])
            groups.append(jnp.stack(taps, axis=0).reshape(4 * cin, cout))
    return jnp.concatenate(groups, axis=1)


def init_params(key, z_dim_bern, z_dim_gauss, n_filter, nc, size=5):
    """Parameters stored in kernel-ready layouts:
       * conv weights im2col-ready (kh*kw*Cin, Cout); transposed-conv weights in the
         sub-pixel (4*Cin, 4*Cout) layout; FC weights pre-transposed to (K, N).
       * e_fc1 input rows / d_fc3 output columns follow the NHWC (h, w, c) flatten order
         (equivalent to PyTorch's CHW order up to a permutation of the random init).
       * biases stored as (1, N); LRN band matrices precomputed as buffers."""
    f = n_filter
    zb, zg = z_dim_bern, z_dim_gauss
    ks = jax.random.split(key, 12)

    def kaiming(k, shape, fan_in):
        return jax.random.normal(k, shape, jnp.float32) * jnp.sqrt(2.0 / fan_in)

    p = {}
    p["e_conv1_w"] = kaiming(ks[0], (16 * nc, f), nc * 16)
    p["e_conv1_b"] = jnp.zeros((1, f), jnp.float32)
    p["e_conv2_w"] = kaiming(ks[1], (16 * f, f), f * 16)
    p["e_conv2_b"] = jnp.zeros((1, f), jnp.float32)
    p["e_conv3_w"] = kaiming(ks[2], (16 * f, f), f * 16)
    p["e_conv3_b"] = jnp.zeros((1, f), jnp.float32)

    p["e_fc1_w"] = kaiming(ks[3], (f * 16, 256), f * 16)
    p["e_fc1_b"] = jnp.zeros((1, 256), jnp.float32)
    p["e_fc2_w"] = kaiming(ks[4], (256, 256), 256)
    p["e_fc2_b"] = jnp.zeros((1, 256), jnp.float32)
    w3 = kaiming(ks[5], (256, zb + 2 * zg), 256)
    p["e_fc3p_w"] = w3[:, :zb]
    p["e_fc3m_w"] = w3[:, zb:zb + zg]
    p["e_fc3v_w"] = w3[:, zb + zg:]
    p["e_fc3p_b"] = jnp.zeros((1, zb), jnp.float32)
    p["e_fc3m_b"] = jnp.zeros((1, zg), jnp.float32)
    p["e_fc3v_b"] = jnp.zeros((1, zg), jnp.float32)

    wd1 = kaiming(ks[6], (zb + zg, 256), zb + zg)
    p["d_fc1b_w"] = wd1[:zb]
    p["d_fc1g_w"] = wd1[zb:]
    p["d_fc1_b"] = jnp.zeros((1, 256), jnp.float32)
    p["d_fc2_w"] = kaiming(ks[7], (256, 256), 256)
    p["d_fc2_b"] = jnp.zeros((1, 256), jnp.float32)
    p["d_fc3_w"] = kaiming(ks[8], (256, f * 16), 256)       # output cols in NHWC order
    p["d_fc3_b"] = jnp.zeros((1, f * 16), jnp.float32)

    # decoder transposed convs: PyTorch layout (Cin, Cout, 4, 4) -> sub-pixel layout
    p["d_dconv1_w"] = _subpixel_weight(kaiming(ks[9], (f, f, 4, 4), f * 16))
    p["d_dconv1_b"] = jnp.tile(jnp.zeros((1, f), jnp.float32), (1, 4))
    p["d_dconv2_w"] = _subpixel_weight(kaiming(ks[10], (f, f, 4, 4), f * 16))
    p["d_dconv2_b"] = jnp.tile(jnp.zeros((1, f), jnp.float32), (1, 4))
    p["d_dconv3_w"] = _subpixel_weight(kaiming(ks[11], (f, nc, 4, 4), f * 16))
    p["d_dconv3_b"] = jnp.tile(jnp.zeros((1, nc), jnp.float32), (1, 4))

    band = _lrn_band(f, size)
    p["band_c"] = band                                            # (F, F) encoder LRN
    p["band_d"] = jnp.kron(jnp.eye(4, dtype=jnp.float32), band)   # block-diag per parity
    return p


# ----------------------------------------------------------------------------
# Forward (train=True path)
# ----------------------------------------------------------------------------
def ff_hybrid_vae_forward(params, x, key, *, z_dim_bern, z_dim_gauss, n_filter):
    """train=True, current_flip_idx_norm=None.  Returns (x_recon, p, mu, logvar)."""
    n = x.shape[0]
    f = n_filter
    xh = jnp.transpose(x, (0, 2, 3, 1))          # NCHW -> NHWC once at the boundary

    # ---- encoder: Conv + ReLU + LRN fused per layer ----
    h = conv2d_relu_lrn(xh, params["e_conv1_w"], params["e_conv1_b"], params["band_c"])
    h = conv2d_relu_lrn(h, params["e_conv2_w"], params["e_conv2_b"], params["band_c"])
    h = conv2d_relu_lrn(h, params["e_conv3_w"], params["e_conv3_b"], params["band_c"])
    h = h.reshape(n, -1)                          # View((-1, F*4*4)) in NHWC flatten order

    # TODO(synk): current_flip_idx_norm branch (p flipping via delta_mat) not exercised (default None).
    ku, kn = jax.random.split(key)
    u = jax.random.uniform(ku, (n, z_dim_bern), jnp.float32)
    nrm = jax.random.normal(kn, (n, z_dim_gauss), jnp.float32)

    # ---- fused FC middle: encoder FCs -> reparametrize -> decoder FCs (one launch) ----
    p, mu, logvar, d = fc_reparam_fc(h, u, nrm, params)

    # ---- decoder convs ----
    d = d.reshape(n, 4, 4, f)                     # View((-1, F, 4, 4)) in NHWC order
    d = conv_transpose2d_lrn(d, params["d_dconv1_w"], params["d_dconv1_b"],
                             params["band_d"], act="relu")
    d = conv_transpose2d_lrn(d, params["d_dconv2_w"], params["d_dconv2_b"],
                             params["band_d"], act="relu")
    d = conv_transpose2d_lrn(d, params["d_dconv3_w"], params["d_dconv3_b"],
                             None, act=None)      # no ReLU; C==1 LRN fused elementwise
    x_recon = jnp.transpose(d, (0, 3, 1, 2)).reshape(x.shape)   # NHWC -> NCHW once
    return x_recon, p, mu, logvar


# ----------------------------------------------------------------------------
if __name__ == "__main__":
    # Encoder needs 32x32 spatial input (32 -> 16 -> 8 -> 4 before the flatten).
    z_dim_bern, z_dim_gauss, n_filter, nc = 4, 4, 8, 1
    batch = 2

    root = jax.random.PRNGKey(0)
    k_param, k_data, k_noise = jax.random.split(root, 3)

    params = init_params(k_param, z_dim_bern, z_dim_gauss, n_filter, nc)
    x = jax.random.normal(k_data, (batch, nc, 32, 32), jnp.float32)

    fwd = jax.jit(functools.partial(
        ff_hybrid_vae_forward,
        z_dim_bern=z_dim_bern, z_dim_gauss=z_dim_gauss, n_filter=n_filter))

    x_recon, p, mu, logvar = fwd(params, x, k_noise)
    jax.block_until_ready((x_recon, p, mu, logvar))

    assert x_recon.shape == x.shape
    assert p.shape == (batch, z_dim_bern)
    assert mu.shape == (batch, z_dim_gauss)
    assert logvar.shape == (batch, z_dim_gauss)
    assert bool(jnp.all(jnp.isfinite(x_recon)))
    assert bool(jnp.all((p >= 0.0) & (p <= 1.0)))
    print("KERNEL_OK")
</pallas_src>

<mosaic_0001>
module attributes {stable_mosaic.version = 11 : i64} {
  func.func @_conv_band_lrn_kernel(%arg0: i32, %arg1: memref<256x16xf32, #tpu.memory_space<vmem>>, %arg2: memref<16x8xf32, #tpu.memory_space<vmem>>, %arg3: memref<1x8xf32, #tpu.memory_space<vmem>>, %arg4: memref<8x8xf32, #tpu.memory_space<vmem>>, %arg5: memref<256x8xf32, #tpu.memory_space<vmem>>) attributes {dimension_semantics = [#tpu.dimension_semantics<parallel>], iteration_bounds = array<i64: 2>, scalar_prefetch = 0 : i64, scratch_operands = 0 : i64, tpu.core_type = #tpu.core_type<tc>, window_params = [{transform_indices = @transform_0, window_bounds = array<i64: 256, 16>}, {pipeline_mode = #tpu.pipeline_mode<synchronous>, transform_indices = @transform_1, window_bounds = array<i64: 16, 8>}, {pipeline_mode = #tpu.pipeline_mode<synchronous>, transform_indices = @transform_2, window_bounds = array<i64: 1, 8>}, {pipeline_mode = #tpu.pipeline_mode<synchronous>, transform_indices = @transform_3, window_bounds = array<i64: 8, 8>}, {transform_indices = @transform_4, window_bounds = array<i64: 256, 8>}]} {
    %c0 = arith.constant 0 : index
    %c0_0 = arith.constant 0 : index
    %0 = vector.load %arg1[%c0, %c0_0] : memref<256x16xf32, #tpu.memory_space<vmem>>, vector<256x16xf32>
    %1 = arith.truncf %0 : vector<256x16xf32> to vector<256x16xbf16>
    %c0_1 = arith.constant 0 : index
    %c0_2 = arith.constant 0 : index
    %2 = vector.load %arg2[%c0_1, %c0_2] : memref<16x8xf32, #tpu.memory_space<vmem>>, vector<16x8xf32>
    %3 = arith.truncf %2 : vector<16x8xf32> to vector<16x8xbf16>
    %cst = arith.constant dense<0.000000e+00> : vector<256x8xf32>
    %4 = tpu.matmul %1, %3, %cst {dimension_numbers = #tpu.dot_dimension_numbers<[1], [0], [0], [1], [0, 0, 1, 1], [], []>} : vector<256x16xbf16>, vector<16x8xbf16>, vector<256x8xf32> -> vector<256x8xf32>
    %c0_3 = arith.constant 0 : index
    %c0_4 = arith.constant 0 : index
    %5 = vector.load %arg3[%c0_3, %c0_4] : memref<1x8xf32, #tpu.memory_space<vmem>>, vector<1x8xf32>
    %6 = vector.broadcast %5 : vector<1x8xf32> to vector<256x8xf32>
    %7 = arith.addf %4, %6 : vector<256x8xf32>
    %cst_5 = arith.constant 0.000000e+00 : f32
    %8 = vector.broadcast %cst_5 : f32 to vector<256x8xf32>
    %9 = arith.maximumf %7, %8 : vector<256x8xf32>
    %10 = arith.mulf %9, %9 : vector<256x8xf32>
    %c0_6 = arith.constant 0 : index
    %c0_7 = arith.constant 0 : index
    %11 = vector.load %arg4[%c0_6, %c0_7] : memref<8x8xf32, #tpu.memory_space<vmem>>, vector<8x8xf32>
    %cst_8 = arith.constant dense<0.000000e+00> : vector<256x8xf32>
    %12 = tpu.matmul %10, %11, %cst_8 {dimension_numbers = #tpu.dot_dimension_numbers<[1], [0], [0], [1], [0, 0, 1, 1], [], []>} : vector<256x8xf32>, vector<8x8xf32>, vector<256x8xf32> -> vector<256x8xf32>
    %cst_9 = arith.constant 2.000000e-04 : f32
    %13 = vector.broadcast %cst_9 : f32 to vector<256x8xf32>
    %14 = arith.mulf %13, %12 : vector<256x8xf32>
    %cst_10 = arith.constant 1.000000e+00 : f32
    %15 = vector.broadcast %cst_10 : f32 to vector<256x8xf32>
    %16 = arith.addf %15, %14 : vector<256x8xf32>
    %17 = math.rsqrt %16 : vector<256x8xf32>
    %18 = arith.mulf %9, %17 : vector<256x8xf32>
    %c0_11 = arith.constant 0 : index
    %c0_12 = arith.constant 0 : index
    %19 = vector.load %arg5[%c0_11, %c0_12] : memref<256x8xf32, #tpu.memory_space<vmem>>, vector<256x8xf32>
    tpu.vector_store %arg5[%c0_11, %c0_12], %18 {strides = array<i32>} : memref<256x8xf32, #tpu.memory_space<vmem>>, vector<256x8xf32>,
    return
  }
  func.func @transform_0(%arg0: i32) -> (i32, i32) {
    %c0_i32 = arith.constant 0 : i32
    %c0_i32_0 = arith.constant 0 : i32
    return %arg0, %c0_i32 : i32, i32
  }
  func.func @transform_1(%arg0: i32) -> (i32, i32) {
    %c0_i32 = arith.constant 0 : i32
    %c0_i32_0 = arith.constant 0 : i32
    %c0_i32_1 = arith.constant 0 : i32
    return %c0_i32, %c0_i32_0 : i32, i32
  }
  func.func @transform_2(%arg0: i32) -> (i32, i32) {
    %c0_i32 = arith.constant 0 : i32
    %c0_i32_0 = arith.constant 0 : i32
    %c0_i32_1 = arith.constant 0 : i32
    return %c0_i32, %c0_i32_0 : i32, i32
  }
  func.func @transform_3(%arg0: i32) -> (i32, i32) {
    %c0_i32 = arith.constant 0 : i32
    %c0_i32_0 = arith.constant 0 : i32
    %c0_i32_1 = arith.constant 0 : i32
    return %c0_i32, %c0_i32_0 : i32, i32
  }
  func.func @transform_4(%arg0: i32) -> (i32, i32) {
    %c0_i32 = arith.constant 0 : i32
    %c0_i32_0 = arith.constant 0 : i32
    return %arg0, %c0_i32 : i32, i32
  }
}

module attributes {stable_mosaic.version = 11 : i64} {
  func.func @_conv_band_lrn_kernel(%arg0: i32, %arg1: memref<128x128xf32, #tpu.memory_space<vmem>>, %arg2: memref<128x8xf32, #tpu.memory_space<vmem>>, %arg3: memref<1x8xf32, #tpu.memory_space<vmem>>, %arg4: memref<8x8xf32, #tpu.memory_space<vmem>>, %arg5: memref<128x8xf32, #tpu.memory_space<vmem>>) attributes {dimension_semantics = [#tpu.dimension_semantics<parallel>], iteration_bounds = array<i64: 1>, scalar_prefetch = 0 : i64, scratch_operands = 0 : i64, tpu.core_type = #tpu.core_type<tc>, window_params = [{transform_indices = @transform_0, window_bounds = array<i64: 128, 128>}, {pipeline_mode = #tpu.pipeline_mode<synchronous>, transform_indices = @transform_1, window_bounds = array<i64: 128, 8>}, {pipeline_mode = #tpu.pipeline_mode<synchronous>, transform_indices = @transform_2, window_bounds = array<i64: 1, 8>}, {pipeline_mode = #tpu.pipeline_mode<synchronous>, transform_indices = @transform_3, window_bounds = array<i64: 8, 8>}, {transform_indices = @transform_4, window_bounds = array<i64: 128, 8>}]} {
    %c0 = arith.constant 0 : index
    %c0_0 = arith.constant 0 : index
    %0 = vector.load %arg1[%c0, %c0_0] : memref<128x128xf32, #tpu.memory_space<vmem>>, vector<128x128xf32>
    %1 = arith.truncf %0 : vector<128x128xf32> to vector<128x128xbf16>
    %c0_1 = arith.constant 0 : index
    %c0_2 = arith.constant 0 : index
    %2 = vector.load %arg2[%c0_1, %c0_2] : memref<128x8xf32, #tpu.memory_space<vmem>>, vector<128x8xf32>
    %3 = arith.truncf %2 : vector<128x8xf32> to vector<128x8xbf16>
    %cst = arith.constant dense<0.000000e+00> : vector<128x8xf32>
    %4 = tpu.matmul %1, %3, %cst {dimension_numbers = #tpu.dot_dimension_numbers<[1], [0], [0], [1], [0, 0, 1, 1], [], []>} : vector<128x128xbf16>, vector<128x8xbf16>, vector<128x8xf32> -> vector<128x8xf32>
    %c0_3 = arith.constant 0 : index
    %c0_4 = arith.constant 0 : index
    %5 = vector.load %arg3[%c0_3, %c0_4] : memref<1x8xf32, #tpu.memory_space<vmem>>, vector<1x8xf32>
    %6 = vector.broadcast %5 : vector<1x8xf32> to vector<128x8xf32>
    %7 = arith.addf %4, %6 : vector<128x8xf32>
    %cst_5 = arith.constant 0.000000e+00 : f32
    %8 = vector.broadcast %cst_5 : f32 to vector<128x8xf32>
    %9 = arith.maximumf %7, %8 : vector<128x8xf32>
    %10 = arith.mulf %9, %9 : vector<128x8xf32>
    %c0_6 = arith.constant 0 : index
    %c0_7 = arith.constant 0 : index
    %11 = vector.load %arg4[%c0_6, %c0_7] : memref<8x8xf32, #tpu.memory_space<vmem>>, vector<8x8xf32>
    %cst_8 = arith.constant dense<0.000000e+00> : vector<128x8xf32>
    %12 = tpu.matmul %10, %11, %cst_8 {dimension_numbers = #tpu.dot_dimension_numbers<[1], [0], [0], [1], [0, 0, 1, 1], [], []>} : vector<128x8xf32>, vector<8x8xf32>, vector<128x8xf32> -> vector<128x8xf32>
    %cst_9 = arith.constant 2.000000e-04 : f32
    %13 = vector.broadcast %cst_9 : f32 to vector<128x8xf32>
    %14 = arith.mulf %13, %12 : vector<128x8xf32>
    %cst_10 = arith.constant 1.000000e+00 : f32
    %15 = vector.broadcast %cst_10 : f32 to vector<128x8xf32>
    %16 = arith.addf %15, %14 : vector<128x8xf32>
    %17 = math.rsqrt %16 : vector<128x8xf32>
    %18 = arith.mulf %9, %17 : vector<128x8xf32>
    %c0_11 = arith.constant 0 : index
    %c0_12 = arith.constant 0 : index
    %19 = vector.load %arg5[%c0_11, %c0_12] : memref<128x8xf32, #tpu.memory_space<vmem>>, vector<128x8xf32>
    tpu.vector_store %arg5[%c0_11, %c0_12], %18 {strides = array<i32>} : memref<128x8xf32, #tpu.memory_space<vmem>>, vector<128x8xf32>,
    return
  }
  func.func @transform_0(%arg0: i32) -> (i32, i32) {
    %c0_i32 = arith.constant 0 : i32
    %c0_i32_0 = arith.constant 0 : i32
    return %arg0, %c0_i32 : i32, i32
  }
  func.func @transform_1(%arg0: i32) -> (i32, i32) {
    %c0_i32 = arith.constant 0 : i32
    %c0_i32_0 = arith.constant 0 : i32
    %c0_i32_1 = arith.constant 0 : i32
    return %c0_i32, %c0_i32_0 : i32, i32
  }
  func.func @transform_2(%arg0: i32) -> (i32, i32) {
    %c0_i32 = arith.constant 0 : i32
    %c0_i32_0 = arith.constant 0 : i32
    %c0_i32_1 = arith.constant 0 : i32
    return %c0_i32, %c0_i32_0 : i32, i32
  }
  func.func @transform_3(%arg0: i32) -> (i32, i32) {
    %c0_i32 = arith.constant 0 : i32
    %c0_i32_0 = arith.constant 0 : i32
    %c0_i32_1 = arith.constant 0 : i32
    return %c0_i32, %c0_i32_0 : i32, i32
  }
  func.func @transform_4(%arg0: i32) -> (i32, i32) {
    %c0_i32 = arith.constant 0 : i32
    %c0_i32_0 = arith.constant 0 : i32
    return %arg0, %c0_i32 : i32, i32
  }
}

module attributes {stable_mosaic.version = 11 : i64} {
  func.func @_conv_band_lrn_kernel(%arg0: i32, %arg1: memref<32x128xf32, #tpu.memory_space<vmem>>, %arg2: memref<128x8xf32, #tpu.memory_space<vmem>>, %arg3: memref<1x8xf32, #tpu.memory_space<vmem>>, %arg4: memref<8x8xf32, #tpu.memory_space<vmem>>, %arg5: memref<32x8xf32, #tpu.memory_space<vmem>>) attributes {dimension_semantics = [#tpu.dimension_semantics<parallel>], iteration_bounds = array<i64: 1>, scalar_prefetch = 0 : i64, scratch_operands = 0 : i64, tpu.core_type = #tpu.core_type<tc>, window_params = [{transform_indices = @transform_0, window_bounds = array<i64: 32, 128>}, {pipeline_mode = #tpu.pipeline_mode<synchronous>, transform_indices = @transform_1, window_bounds = array<i64: 128, 8>}, {pipeline_mode = #tpu.pipeline_mode<synchronous>, transform_indices = @transform_2, window_bounds = array<i64: 1, 8>}, {pipeline_mode = #tpu.pipeline_mode<synchronous>, transform_indices = @transform_3, window_bounds = array<i64: 8, 8>}, {transform_indices = @transform_4, window_bounds = array<i64: 32, 8>}]} {
    %c0 = arith.constant 0 : index
    %c0_0 = arith.constant 0 : index
    %0 = vector.load %arg1[%c0, %c0_0] : memref<32x128xf32, #tpu.memory_space<vmem>>, vector<32x128xf32>
    %1 = arith.truncf %0 : vector<32x128xf32> to vector<32x128xbf16>
    %c0_1 = arith.constant 0 : index
    %c0_2 = arith.constant 0 : index
    %2 = vector.load %arg2[%c0_1, %c0_2] : memref<128x8xf32, #tpu.memory_space<vmem>>, vector<128x8xf32>
    %3 = arith.truncf %2 : vector<128x8xf32> to vector<128x8xbf16>
    %cst = arith.constant dense<0.000000e+00> : vector<32x8xf32>
    %4 = tpu.matmul %1, %3, %cst {dimension_numbers = #tpu.dot_dimension_numbers<[1], [0], [0], [1], [0, 0, 1, 1], [], []>} : vector<32x128xbf16>, vector<128x8xbf16>, vector<32x8xf32> -> vector<32x8xf32>
    %c0_3 = arith.constant 0 : index
    %c0_4 = arith.constant 0 : index
    %5 = vector.load %arg3[%c0_3, %c0_4] : memref<1x8xf32, #tpu.memory_space<vmem>>, vector<1x8xf32>
    %6 = vector.broadcast %5 : vector<1x8xf32> to vector<32x8xf32>
    %7 = arith.addf %4, %6 : vector<32x8xf32>
    %cst_5 = arith.constant 0.000000e+00 : f32
    %8 = vector.broadcast %cst_5 : f32 to vector<32x8xf32>
    %9 = arith.maximumf %7, %8 : vector<32x8xf32>
    %10 = arith.mulf %9, %9 : vector<32x8xf32>
    %c0_6 = arith.constant 0 : index
    %c0_7 = arith.constant 0 : index
    %11 = vector.load %arg4[%c0_6, %c0_7] : memref<8x8xf32, #tpu.memory_space<vmem>>, vector<8x8xf32>
    %cst_8 = arith.constant dense<0.000000e+00> : vector<32x8xf32>
    %12 = tpu.matmul %10, %11, %cst_8 {dimension_numbers = #tpu.dot_dimension_numbers<[1], [0], [0], [1], [0, 0, 1, 1], [], []>} : vector<32x8xf32>, vector<8x8xf32>, vector<32x8xf32> -> vector<32x8xf32>
    %cst_9 = arith.constant 2.000000e-04 : f32
    %13 = vector.broadcast %cst_9 : f32 to vector<32x8xf32>
    %14 = arith.mulf %13, %12 : vector<32x8xf32>
    %cst_10 = arith.constant 1.000000e+00 : f32
    %15 = vector.broadcast %cst_10 : f32 to vector<32x8xf32>
    %16 = arith.addf %15, %14 : vector<32x8xf32>
    %17 = math.rsqrt %16 : vector<32x8xf32>
    %18 = arith.mulf %9, %17 : vector<32x8xf32>
    %c0_11 = arith.constant 0 : index
    %c0_12 = arith.constant 0 : index
    %19 = vector.load %arg5[%c0_11, %c0_12] : memref<32x8xf32, #tpu.memory_space<vmem>>, vector<32x8xf32>
    tpu.vector_store %arg5[%c0_11, %c0_12], %18 {strides = array<i32>} : memref<32x8xf32, #tpu.memory_space<vmem>>, vector<32x8xf32>,
    return
  }
  func.func @transform_0(%arg0: i32) -> (i32, i32) {
    %c0_i32 = arith.constant 0 : i32
    %c0_i32_0 = arith.constant 0 : i32
    return %arg0, %c0_i32 : i32, i32
  }
  func.func @transform_1(%arg0: i32) -> (i32, i32) {
    %c0_i32 = arith.constant 0 : i32
    %c0_i32_0 = arith.constant 0 : i32
    %c0_i32_1 = arith.constant 0 : i32
    return %c0_i32, %c0_i32_0 : i32, i32
  }
  func.func @transform_2(%arg0: i32) -> (i32, i32) {
    %c0_i32 = arith.constant 0 : i32
    %c0_i32_0 = arith.constant 0 : i32
    %c0_i32_1 = arith.constant 0 : i32
    return %c0_i32, %c0_i32_0 : i32, i32
  }
  func.func @transform_3(%arg0: i32) -> (i32, i32) {
    %c0_i32 = arith.constant 0 : i32
    %c0_i32_0 = arith.constant 0 : i32
    %c0_i32_1 = arith.constant 0 : i32
    return %c0_i32, %c0_i32_0 : i32, i32
  }
  func.func @transform_4(%arg0: i32) -> (i32, i32) {
    %c0_i32 = arith.constant 0 : i32
    %c0_i32_0 = arith.constant 0 : i32
    return %arg0, %c0_i32 : i32, i32
  }
}

module attributes {stable_mosaic.version = 11 : i64} {
  func.func @_fc_reparam_fc_kernel(%arg0: memref<2x128xf32, #tpu.memory_space<vmem>>, %arg1: memref<128x256xf32, #tpu.memory_space<vmem>>, %arg2: memref<1x256xf32, #tpu.memory_space<vmem>>, %arg3: memref<256x256xf32, #tpu.memory_space<vmem>>, %arg4: memref<1x256xf32, #tpu.memory_space<vmem>>, %arg5: memref<256x4xf32, #tpu.memory_space<vmem>>, %arg6: memref<1x4xf32, #tpu.memory_space<vmem>>, %arg7: memref<256x4xf32, #tpu.memory_space<vmem>>, %arg8: memref<1x4xf32, #tpu.memory_space<vmem>>, %arg9: memref<256x4xf32, #tpu.memory_space<vmem>>, %arg10: memref<1x4xf32, #tpu.memory_space<vmem>>, %arg11: memref<2x4xf32, #tpu.memory_space<vmem>>, %arg12: memref<2x4xf32, #tpu.memory_space<vmem>>, %arg13: memref<4x256xf32, #tpu.memory_space<vmem>>, %arg14: memref<4x256xf32, #tpu.memory_space<vmem>>, %arg15: memref<1x256xf32, #tpu.memory_space<vmem>>, %arg16: memref<256x256xf32, #tpu.memory_space<vmem>>, %arg17: memref<1x256xf32, #tpu.memory_space<vmem>>, %arg18: memref<256x128xf32, #tpu.memory_space<vmem>>, %arg19: memref<1x128xf32, #tpu.memory_space<vmem>>, %arg20: memref<2x4xf32, #tpu.memory_space<vmem>>, %arg21: memref<2x4xf32, #tpu.memory_space<vmem>>, %arg22: memref<2x4xf32, #tpu.memory_space<vmem>>, %arg23: memref<2x128xf32, #tpu.memory_space<vmem>>) attributes {dimension_semantics = [], scalar_prefetch = 0 : i64, scratch_operands = 0 : i64, tpu.core_type = #tpu.core_type<tc>} {
    %c0 = arith.constant 0 : index
    %c0_0 = arith.constant 0 : index
    %0 = vector.load %arg0[%c0, %c0_0] : memref<2x128xf32, #tpu.memory_space<vmem>>, vector<2x128xf32>
    %c0_1 = arith.constant 0 : index
    %c0_2 = arith.constant 0 : index
    %1 = vector.load %arg1[%c0_1, %c0_2] : memref<128x256xf32, #tpu.memory_space<vmem>>, vector<128x256xf32>
    %cst = arith.constant dense<0.000000e+00> : vector<2x256xf32>
    %2 = tpu.matmul %0, %1, %cst {dimension_numbers = #tpu.dot_dimension_numbers<[1], [0], [0], [1], [0, 0, 1, 1], [], []>} : vector<2x128xf32>, vector<128x256xf32>, vector<2x256xf32> -> vector<2x256xf32>
    %c0_3 = arith.constant 0 : index
    %c0_4 = arith.constant 0 : index
    %3 = vector.load %arg2[%c0_3, %c0_4] : memref<1x256xf32, #tpu.memory_space<vmem>>, vector<1x256xf32>
    %4 = vector.broadcast %3 : vector<1x256xf32> to vector<2x256xf32>
    %5 = arith.addf %2, %4 : vector<2x256xf32>
    %cst_5 = arith.constant 0.000000e+00 : f32
    %6 = vector.broadcast %cst_5 : f32 to vector<2x256xf32>
    %7 = arith.maximumf %5, %6 : vector<2x256xf32>
    %c0_6 = arith.constant 0 : index
    %c0_7 = arith.constant 0 : index
    %8 = vector.load %arg3[%c0_6, %c0_7] : memref<256x256xf32, #tpu.memory_space<vmem>>, vector<256x256xf32>
    %cst_8 = arith.constant dense<0.000000e+00> : vector<2x256xf32>
    %9 = tpu.matmul %7, %8, %cst_8 {dimension_numbers = #tpu.dot_dimension_numbers<[1], [0], [0], [1], [0, 0, 1, 1], [], []>} : vector<2x256xf32>, vector<256x256xf32>, vector<2x256xf32> -> vector<2x256xf32>
    %c0_9 = arith.constant 0 : index
    %c0_10 = arith.constant 0 : index
    %10 = vector.load %arg4[%c0_9, %c0_10] : memref<1x256xf32, #tpu.memory_space<vmem>>, vector<1x256xf32>
    %11 = vector.broadcast %10 : vector<1x256xf32> to vector<2x256xf32>
    %12 = arith.addf %9, %11 : vector<2x256xf32>
    %cst_11 = arith.constant 0.000000e+00 : f32
    %13 = vector.broadcast %cst_11 : f32 to vector<2x256xf32>
    %14 = arith.maximumf %12, %13 : vector<2x256xf32>
    %c0_12 = arith.constant 0 : index
    %c0_13 = arith.constant 0 : index
    %15 = vector.load %arg5[%c0_12, %c0_13] : memref<256x4xf32, #tpu.memory_space<vmem>>, vector<256x4xf32>
    %cst_14 = arith.constant dense<0.000000e+00> : vector<2x4xf32>
    %16 = tpu.matmul %14, %15, %cst_14 {dimension_numbers = #tpu.dot_dimension_numbers<[1], [0], [0], [1], [0, 0, 1, 1], [], []>} : vector<2x256xf32>, vector<256x4xf32>, vector<2x4xf32> -> vector<2x4xf32>
    %c0_15 = arith.constant 0 : index
    %c0_16 = arith.constant 0 : index
    %17 = vector.load %arg6[%c0_15, %c0_16] : memref<1x4xf32, #tpu.memory_space<vmem>>, vector<1x4xf32>
    %18 = vector.broadcast %17 : vector<1x4xf32> to vector<2x4xf32>
    %19 = arith.addf %16, %18 : vector<2x4xf32>
    %c0_17 = arith.constant 0 : index
    %c0_18 = arith.constant 0 : index
    %20 = vector.load %arg7[%c0_17, %c0_18] : memref<256x4xf32, #tpu.memory_space<vmem>>, vector<256x4xf32>
    %cst_19 = arith.constant dense<0.000000e+00> : vector<2x4xf32>
    %21 = tpu.matmul %14, %20, %cst_19 {dimension_numbers = #tpu.dot_dimension_numbers<[1], [0], [0], [1], [0, 0, 1, 1], [], []>} : vector<2x256xf32>, vector<256x4xf32>, vector<2x4xf32> -> vector<2x4xf32>
    %c0_20 = arith.constant 0 : index
    %c0_21 = arith.constant 0 : index
    %22 = vector.load %arg8[%c0_20, %c0_21] : memref<1x4xf32, #tpu.memory_space<vmem>>, vector<1x4xf32>
    %23 = vector.broadcast %22 : vector<1x4xf32> to vector<2x4xf32>
    %24 = arith.addf %21, %23 : vector<2x4xf32>
    %c0_22 = arith.constant 0 : index
    %c0_23 = arith.constant 0 : index
    %25 = vector.load %arg9[%c0_22, %c0_23] : memref<256x4xf32, #tpu.memory_space<vmem>>, vector<256x4xf32>
    %cst_24 = arith.constant dense<0.000000e+00> : vector<2x4xf32>
    %26 = tpu.matmul %14, %25, %cst_24 {dimension_numbers = #tpu.dot_dimension_numbers<[1], [0], [0], [1], [0, 0, 1, 1], [], []>} : vector<2x256xf32>, vector<256x4xf32>, vector<2x4xf32> -> vector<2x4xf32>
    %c0_25 = arith.constant 0 : index
    %c0_26 = arith.constant 0 : index
    %27 = vector.load %arg10[%c0_25, %c0_26] : memref<1x4xf32, #tpu.memory_space<vmem>>, vector<1x4xf32>
    %28 = vector.broadcast %27 : vector<1x4xf32> to vector<2x4xf32>
    %29 = arith.addf %26, %28 : vector<2x4xf32>
    %cst_27 = arith.constant 0.000000e+00 : f32
    %30 = vector.broadcast %cst_27 : f32 to vector<2x4xf32>
    %31 = arith.subf %30, %19 : vector<2x4xf32>
    %32 = math.exp %31 : vector<2x4xf32>
    %cst_28 = arith.constant 1.000000e+00 : f32
    %33 = vector.broadcast %cst_28 : f32 to vector<2x4xf32>
    %34 = arith.addf %33, %32 : vector<2x4xf32>
    %cst_29 = arith.constant 1.000000e+00 : f32
    %35 = vector.broadcast %cst_29 : f32 to vector<2x4xf32>
    %36 = arith.divf %35, %34 : vector<2x4xf32>
    %c0_30 = arith.constant 0 : index
    %c0_31 = arith.constant 0 : index
    %37 = vector.load %arg20[%c0_30, %c0_31] : memref<2x4xf32, #tpu.memory_space<vmem>>, vector<2x4xf32>
    tpu.vector_store %arg20[%c0_30, %c0_31], %36 {strides = array<i32>} : memref<2x4xf32, #tpu.memory_space<vmem>>, vector<2x4xf32>,
    %c0_32 = arith.constant 0 : index
    %c0_33 = arith.constant 0 : index
    %38 = vector.load %arg21[%c0_32, %c0_33] : memref<2x4xf32, #tpu.memory_space<vmem>>, vector<2x4xf32>
    tpu.vector_store %arg21[%c0_32, %c0_33], %24 {strides = array<i32>} : memref<2x4xf32, #tpu.memory_space<vmem>>, vector<2x4xf32>,
    %c0_34 = arith.constant 0 : index
    %c0_35 = arith.constant 0 : index
    %39 = vector.load %arg22[%c0_34, %c0_35] : memref<2x4xf32, #tpu.memory_space<vmem>>, vector<2x4xf32>
    tpu.vector_store %arg22[%c0_34, %c0_35], %29 {strides = array<i32>} : memref<2x4xf32, #tpu.memory_space<vmem>>, vector<2x4xf32>,
    %c0_36 = arith.constant 0 : index
    %c0_37 = arith.constant 0 : index
    %40 = vector.load %arg11[%c0_36, %c0_37] : memref<2x4xf32, #tpu.memory_space<vmem>>, vector<2x4xf32>
    %cst_38 = arith.constant 9.99999968E-21 : f32
    %41 = vector.broadcast %cst_38 : f32 to vector<2x4xf32>
    %42 = arith.addf %40, %41 : vector<2x4xf32>
    %43 = math.log %42 : vector<2x4xf32>
    %cst_39 = arith.constant 1.000000e+00 : f32
    %44 = vector.broadcast %cst_39 : f32 to vector<2x4xf32>
    %45 = arith.subf %44, %40 : vector<2x4xf32>
    %cst_40 = arith.constant 9.99999968E-21 : f32
    %46 = vector.broadcast %cst_40 : f32 to vector<2x4xf32>
    %47 = arith.addf %45, %46 : vector<2x4xf32>
    %48 = math.log %47 : vector<2x4xf32>
    %49 = arith.subf %43, %48 : vector<2x4xf32>
    %50 = arith.addf %49, %19 : vector<2x4xf32>
    %cst_41 = arith.constant 0.000000e+00 : f32
    %51 = vector.broadcast %cst_41 : f32 to vector<2x4xf32>
    %52 = arith.subf %51, %50 : vector<2x4xf32>
    %53 = math.exp %52 : vector<2x4xf32>
    %cst_42 = arith.constant 1.000000e+00 : f32
    %54 = vector.broadcast %cst_42 : f32 to vector<2x4xf32>
    %55 = arith.addf %54, %53 : vector<2x4xf32>
    %cst_43 = arith.constant 1.000000e+00 : f32
    %56 = vector.broadcast %cst_43 : f32 to vector<2x4xf32>
    %57 = arith.divf %56, %55 : vector<2x4xf32>
    %cst_44 = arith.constant 5.000000e-01 : f32
    %58 = vector.broadcast %cst_44 : f32 to vector<2x4xf32>
    %59 = arith.mulf %58, %29 : vector<2x4xf32>
    %60 = math.exp %59 : vector<2x4xf32>
    %c0_45 = arith.constant 0 : index
    %c0_46 = arith.constant 0 : index
    %61 = vector.load %arg12[%c0_45, %c0_46] : memref<2x4xf32, #tpu.memory_space<vmem>>, vector<2x4xf32>
    %62 = arith.mulf %60, %61 : vector<2x4xf32>
    %63 = arith.addf %24, %62 : vector<2x4xf32>
    %c0_47 = arith.constant 0 : index
    %c0_48 = arith.constant 0 : index
    %64 = vector.load %arg13[%c0_47, %c0_48] : memref<4x256xf32, #tpu.memory_space<vmem>>, vector<4x256xf32>
    %cst_49 = arith.constant dense<0.000000e+00> : vector<2x256xf32>
    %65 = tpu.matmul %57, %64, %cst_49 {dimension_numbers = #tpu.dot_dimension_numbers<[1], [0], [0], [1], [0, 0, 1, 1], [], []>} : vector<2x4xf32>, vector<4x256xf32>, vector<2x256xf32> -> vector<2x256xf32>
    %c0_50 = arith.constant 0 : index
    %c0_51 = arith.constant 0 : index
    %66 = vector.load %arg14[%c0_50, %c0_51] : memref<4x256xf32, #tpu.memory_space<vmem>>, vector<4x256xf32>
    %cst_52 = arith.constant dense<0.000000e+00> : vector<2x256xf32>
    %67 = tpu.matmul %63, %66, %cst_52 {dimension_numbers = #tpu.dot_dimension_numbers<[1], [0], [0], [1], [0, 0, 1, 1], [], []>} : vector<2x4xf32>, vector<4x256xf32>, vector<2x256xf32> -> vector<2x256xf32>
    %68 = arith.addf %65, %67 : vector<2x256xf32>
    %c0_53 = arith.constant 0 : index
    %c0_54 = arith.constant 0 : index
    %69 = vector.load %arg15[%c0_53, %c0_54] : memref<1x256xf32, #tpu.memory_space<vmem>>, vector<1x256xf32>
    %70 = vector.broadcast %69 : vector<1x256xf32> to vector<2x256xf32>
    %71 = arith.addf %68, %70 : vector<2x256xf32>
    %cst_55 = arith.constant 0.000000e+00 : f32
    %72 = vector.broadcast %cst_55 : f32 to vector<2x256xf32>
    %73 = arith.maximumf %71, %72 : vector<2x256xf32>
    %c0_56 = arith.constant 0 : index
    %c0_57 = arith.constant 0 : index
    %74 = vector.load %arg16[%c0_56, %c0_57] : memref<256x256xf32, #tpu.memory_space<vmem>>, vector<256x256xf32>
    %cst_58 = arith.constant dense<0.000000e+00> : vector<2x256xf32>
    %75 = tpu.matmul %73, %74, %cst_58 {dimension_numbers = #tpu.dot_dimension_numbers<[1], [0], [0], [1], [0, 0, 1, 1], [], []>} : vector<2x256xf32>, vector<256x256xf32>, vector<2x256xf32> -> vector<2x256xf32>
    %c0_59 = arith.constant 0 : index
    %c0_60 = arith.constant 0 : index
    %76 = vector.load %arg17[%c0_59, %c0_60] : memref<1x256xf32, #tpu.memory_space<vmem>>, vector<1x256xf32>
    %77 = vector.broadcast %76 : vector<1x256xf32> to vector<2x256xf32>
    %78 = arith.addf %75, %77 : vector<2x256xf32>
    %cst_61 = arith.constant 0.000000e+00 : f32
    %79 = vector.broadcast %cst_61 : f32 to vector<2x256xf32>
    %80 = arith.maximumf %78, %79 : vector<2x256xf32>
    %c0_62 = arith.constant 0 : index
    %c0_63 = arith.constant 0 : index
    %81 = vector.load %arg18[%c0_62, %c0_63] : memref<256x128xf32, #tpu.memory_space<vmem>>, vector<256x128xf32>
    %cst_64 = arith.constant dense<0.000000e+00> : vector<2x128xf32>
    %82 = tpu.matmul %80, %81, %cst_64 {dimension_numbers = #tpu.dot_dimension_numbers<[1], [0], [0], [1], [0, 0, 1, 1], [], []>} : vector<2x256xf32>, vector<256x128xf32>, vector<2x128xf32> -> vector<2x128xf32>
    %c0_65 = arith.constant 0 : index
    %c0_66 = arith.constant 0 : index
    %83 = vector.load %arg19[%c0_65, %c0_66] : memref<1x128xf32, #tpu.memory_space<vmem>>, vector<1x128xf32>
    %84 = vector.broadcast %83 : vector<1x128xf32> to vector<2x128xf32>
    %85 = arith.addf %82, %84 : vector<2x128xf32>
    %cst_67 = arith.constant 0.000000e+00 : f32
    %86 = vector.broadcast %cst_67 : f32 to vector<2x128xf32>
    %87 = arith.maximumf %85, %86 : vector<2x128xf32>
    %c0_68 = arith.constant 0 : index
    %c0_69 = arith.constant 0 : index
    %88 = vector.load %arg23[%c0_68, %c0_69] : memref<2x128xf32, #tpu.memory_space<vmem>>, vector<2x128xf32>
    tpu.vector_store %arg23[%c0_68, %c0_69], %87 {strides = array<i32>} : memref<2x128xf32, #tpu.memory_space<vmem>>, vector<2x128xf32>,
    return
  }
}

module attributes {stable_mosaic.version = 11 : i64} {
  func.func @_conv_band_lrn_kernel(%arg0: i32, %arg1: memref<56x32xf32, #tpu.memory_space<vmem>>, %arg2: memref<32x32xf32, #tpu.memory_space<vmem>>, %arg3: memref<1x32xf32, #tpu.memory_space<vmem>>, %arg4: memref<32x32xf32, #tpu.memory_space<vmem>>, %arg5: memref<56x32xf32, #tpu.memory_space<vmem>>) attributes {dimension_semantics = [#tpu.dimension_semantics<parallel>], iteration_bounds = array<i64: 1>, scalar_prefetch = 0 : i64, scratch_operands = 0 : i64, tpu.core_type = #tpu.core_type<tc>, window_params = [{transform_indices = @transform_0, window_bounds = array<i64: 56, 32>}, {pipeline_mode = #tpu.pipeline_mode<synchronous>, transform_indices = @transform_1, window_bounds = array<i64: 32, 32>}, {pipeline_mode = #tpu.pipeline_mode<synchronous>, transform_indices = @transform_2, window_bounds = array<i64: 1, 32>}, {pipeline_mode = #tpu.pipeline_mode<synchronous>, transform_indices = @transform_3, window_bounds = array<i64: 32, 32>}, {transform_indices = @transform_4, window_bounds = array<i64: 56, 32>}]} {
    %c0 = arith.constant 0 : index
    %c0_0 = arith.constant 0 : index
    %0 = vector.load %arg1[%c0, %c0_0] : memref<56x32xf32, #tpu.memory_space<vmem>>, vector<56x32xf32>
    %1 = arith.truncf %0 : vector<56x32xf32> to vector<56x32xbf16>
    %c0_1 = arith.constant 0 : index
    %c0_2 = arith.constant 0 : index
    %2 = vector.load %arg2[%c0_1, %c0_2] : memref<32x32xf32, #tpu.memory_space<vmem>>, vector<32x32xf32>
    %3 = arith.truncf %2 : vector<32x32xf32> to vector<32x32xbf16>
    %cst = arith.constant dense<0.000000e+00> : vector<56x32xf32>
    %4 = tpu.matmul %1, %3, %cst {dimension_numbers = #tpu.dot_dimension_numbers<[1], [0], [0], [1], [0, 0, 1, 1], [], []>} : vector<56x32xbf16>, vector<32x32xbf16>, vector<56x32xf32> -> vector<56x32xf32>
    %c0_3 = arith.constant 0 : index
    %c0_4 = arith.constant 0 : index
    %5 = vector.load %arg3[%c0_3, %c0_4] : memref<1x32xf32, #tpu.memory_space<vmem>>, vector<1x32xf32>
    %6 = vector.broadcast %5 : vector<1x32xf32> to vector<56x32xf32>
    %7 = arith.addf %4, %6 : vector<56x32xf32>
    %cst_5 = arith.constant 0.000000e+00 : f32
    %8 = vector.broadcast %cst_5 : f32 to vector<56x32xf32>
    %9 = arith.maximumf %7, %8 : vector<56x32xf32>
    %10 = arith.mulf %9, %9 : vector<56x32xf32>
    %c0_6 = arith.constant 0 : index
    %c0_7 = arith.constant 0 : index
    %11 = vector.load %arg4[%c0_6, %c0_7] : memref<32x32xf32, #tpu.memory_space<vmem>>, vector<32x32xf32>
    %cst_8 = arith.constant dense<0.000000e+00> : vector<56x32xf32>
    %12 = tpu.matmul %10, %11, %cst_8 {dimension_numbers = #tpu.dot_dimension_numbers<[1], [0], [0], [1], [0, 0, 1, 1], [], []>} : vector<56x32xf32>, vector<32x32xf32>, vector<56x32xf32> -> vector<56x32xf32>
    %cst_9 = arith.constant 2.000000e-04 : f32
    %13 = vector.broadcast %cst_9 : f32 to vector<56x32xf32>
    %14 = arith.mulf %13, %12 : vector<56x32xf32>
    %cst_10 = arith.constant 1.000000e+00 : f32
    %15 = vector.broadcast %cst_10 : f32 to vector<56x32xf32>
    %16 = arith.addf %15, %14 : vector<56x32xf32>
    %17 = math.rsqrt %16 : vector<56x32xf32>
    %18 = arith.mulf %9, %17 : vector<56x32xf32>
    %c0_11 = arith.constant 0 : index
    %c0_12 = arith.constant 0 : index
    %19 = vector.load %arg5[%c0_11, %c0_12] : memref<56x32xf32, #tpu.memory_space<vmem>>, vector<56x32xf32>
    tpu.vector_store %arg5[%c0_11, %c0_12], %18 {strides = array<i32>} : memref<56x32xf32, #tpu.memory_space<vmem>>, vector<56x32xf32>,
    return
  }
  func.func @transform_0(%arg0: i32) -> (i32, i32) {
    %c0_i32 = arith.constant 0 : i32
    %c0_i32_0 = arith.constant 0 : i32
    return %arg0, %c0_i32 : i32, i32
  }
  func.func @transform_1(%arg0: i32) -> (i32, i32) {
    %c0_i32 = arith.constant 0 : i32
    %c0_i32_0 = arith.constant 0 : i32
    %c0_i32_1 = arith.constant 0 : i32
    return %c0_i32, %c0_i32_0 : i32, i32
  }
  func.func @transform_2(%arg0: i32) -> (i32, i32) {
    %c0_i32 = arith.constant 0 : i32
    %c0_i32_0 = arith.constant 0 : i32
    %c0_i32_1 = arith.constant 0 : i32
    return %c0_i32, %c0_i32_0 : i32, i32
  }
  func.func @transform_3(%arg0: i32) -> (i32, i32) {
    %c0_i32 = arith.constant 0 : i32
    %c0_i32_0 = arith.constant 0 : i32
    %c0_i32_1 = arith.constant 0 : i32
    return %c0_i32, %c0_i32_0 : i32, i32
  }
  func.func @transform_4(%arg0: i32) -> (i32, i32) {
    %c0_i32 = arith.constant 0 : i32
    %c0_i32_0 = arith.constant 0 : i32
    return %arg0, %c0_i32 : i32, i32
  }
}

module attributes {stable_mosaic.version = 11 : i64} {
  func.func @_conv_band_lrn_kernel(%arg0: i32, %arg1: memref<168x32xf32, #tpu.memory_space<vmem>>, %arg2: memref<32x32xf32, #tpu.memory_space<vmem>>, %arg3: memref<1x32xf32, #tpu.memory_space<vmem>>, %arg4: memref<32x32xf32, #tpu.memory_space<vmem>>, %arg5: memref<168x32xf32, #tpu.memory_space<vmem>>) attributes {dimension_semantics = [#tpu.dimension_semantics<parallel>], iteration_bounds = array<i64: 1>, scalar_prefetch = 0 : i64, scratch_operands = 0 : i64, tpu.core_type = #tpu.core_type<tc>, window_params = [{transform_indices = @transform_0, window_bounds = array<i64: 168, 32>}, {pipeline_mode = #tpu.pipeline_mode<synchronous>, transform_indices = @transform_1, window_bounds = array<i64: 32, 32>}, {pipeline_mode = #tpu.pipeline_mode<synchronous>, transform_indices = @transform_2, window_bounds = array<i64: 1, 32>}, {pipeline_mode = #tpu.pipeline_mode<synchronous>, transform_indices = @transform_3, window_bounds = array<i64: 32, 32>}, {transform_indices = @transform_4, window_bounds = array<i64: 168, 32>}]} {
    %c0 = arith.constant 0 : index
    %c0_0 = arith.constant 0 : index
    %0 = vector.load %arg1[%c0, %c0_0] : memref<168x32xf32, #tpu.memory_space<vmem>>, vector<168x32xf32>
    %1 = arith.truncf %0 : vector<168x32xf32> to vector<168x32xbf16>
    %c0_1 = arith.constant 0 : index
    %c0_2 = arith.constant 0 : index
    %2 = vector.load %arg2[%c0_1, %c0_2] : memref<32x32xf32, #tpu.memory_space<vmem>>, vector<32x32xf32>
    %3 = arith.truncf %2 : vector<32x32xf32> to vector<32x32xbf16>
    %cst = arith.constant dense<0.000000e+00> : vector<168x32xf32>
    %4 = tpu.matmul %1, %3, %cst {dimension_numbers = #tpu.dot_dimension_numbers<[1], [0], [0], [1], [0, 0, 1, 1], [], []>} : vector<168x32xbf16>, vector<32x32xbf16>, vector<168x32xf32> -> vector<168x32xf32>
    %c0_3 = arith.constant 0 : index
    %c0_4 = arith.constant 0 : index
    %5 = vector.load %arg3[%c0_3, %c0_4] : memref<1x32xf32, #tpu.memory_space<vmem>>, vector<1x32xf32>
    %6 = vector.broadcast %5 : vector<1x32xf32> to vector<168x32xf32>
    %7 = arith.addf %4, %6 : vector<168x32xf32>
    %cst_5 = arith.constant 0.000000e+00 : f32
    %8 = vector.broadcast %cst_5 : f32 to vector<168x32xf32>
    %9 = arith.maximumf %7, %8 : vector<168x32xf32>
    %10 = arith.mulf %9, %9 : vector<168x32xf32>
    %c0_6 = arith.constant 0 : index
    %c0_7 = arith.constant 0 : index
    %11 = vector.load %arg4[%c0_6, %c0_7] : memref<32x32xf32, #tpu.memory_space<vmem>>, vector<32x32xf32>
    %cst_8 = arith.constant dense<0.000000e+00> : vector<168x32xf32>
    %12 = tpu.matmul %10, %11, %cst_8 {dimension_numbers = #tpu.dot_dimension_numbers<[1], [0], [0], [1], [0, 0, 1, 1], [], []>} : vector<168x32xf32>, vector<32x32xf32>, vector<168x32xf32> -> vector<168x32xf32>
    %cst_9 = arith.constant 2.000000e-04 : f32
    %13 = vector.broadcast %cst_9 : f32 to vector<168x32xf32>
    %14 = arith.mulf %13, %12 : vector<168x32xf32>
    %cst_10 = arith.constant 1.000000e+00 : f32
    %15 = vector.broadcast %cst_10 : f32 to vector<168x32xf32>
    %16 = arith.addf %15, %14 : vector<168x32xf32>
    %17 = math.rsqrt %16 : vector<168x32xf32>
    %18 = arith.mulf %9, %17 : vector<168x32xf32>
    %c0_11 = arith.constant 0 : index
    %c0_12 = arith.constant 0 : index
    %19 = vector.load %arg5[%c0_11, %c0_12] : memref<168x32xf32, #tpu.memory_space<vmem>>, vector<168x32xf32>
    tpu.vector_store %arg5[%c0_11, %c0_12], %18 {strides = array<i32>} : memref<168x32xf32, #tpu.memory_space<vmem>>, vector<168x32xf32>,
    return
  }
  func.func @transform_0(%arg0: i32) -> (i32, i32) {
    %c0_i32 = arith.constant 0 : i32
    %c0_i32_0 = arith.constant 0 : i32
    return %arg0, %c0_i32 : i32, i32
  }
  func.func @transform_1(%arg0: i32) -> (i32, i32) {
    %c0_i32 = arith.constant 0 : i32
    %c0_i32_0 = arith.constant 0 : i32
    %c0_i32_1 = arith.constant 0 : i32
    return %c0_i32, %c0_i32_0 : i32, i32
  }
  func.func @transform_2(%arg0: i32) -> (i32, i32) {
    %c0_i32 = arith.constant 0 : i32
    %c0_i32_0 = arith.constant 0 : i32
    %c0_i32_1 = arith.constant 0 : i32
    return %c0_i32, %c0_i32_0 : i32, i32
  }
  func.func @transform_3(%arg0: i32) -> (i32, i32) {
    %c0_i32 = arith.constant 0 : i32
    %c0_i32_0 = arith.constant 0 : i32
    %c0_i32_1 = arith.constant 0 : i32
    return %c0_i32, %c0_i32_0 : i32, i32
  }
  func.func @transform_4(%arg0: i32) -> (i32, i32) {
    %c0_i32 = arith.constant 0 : i32
    %c0_i32_0 = arith.constant 0 : i32
    return %arg0, %c0_i32 : i32, i32
  }
}

module attributes {stable_mosaic.version = 11 : i64} {
  func.func @_conv_c1_lrn_kernel(%arg0: i32, %arg1: memref<584x32xf32, #tpu.memory_space<vmem>>, %arg2: memref<32x4xf32, #tpu.memory_space<vmem>>, %arg3: memref<1x4xf32, #tpu.memory_space<vmem>>, %arg4: memref<584x4xf32, #tpu.memory_space<vmem>>) attributes {dimension_semantics = [#tpu.dimension_semantics<parallel>], iteration_bounds = array<i64: 1>, scalar_prefetch = 0 : i64, scratch_operands = 0 : i64, tpu.core_type = #tpu.core_type<tc>, window_params = [{transform_indices = @transform_0, window_bounds = array<i64: 584, 32>}, {pipeline_mode = #tpu.pipeline_mode<synchronous>, transform_indices = @transform_1, window_bounds = array<i64: 32, 4>}, {pipeline_mode = #tpu.pipeline_mode<synchronous>, transform_indices = @transform_2, window_bounds = array<i64: 1, 4>}, {transform_indices = @transform_3, window_bounds = array<i64: 584, 4>}]} {
    %c0 = arith.constant 0 : index
    %c0_0 = arith.constant 0 : index
    %0 = vector.load %arg1[%c0, %c0_0] : memref<584x32xf32, #tpu.memory_space<vmem>>, vector<584x32xf32>
    %1 = arith.truncf %0 : vector<584x32xf32> to vector<584x32xbf16>
    %c0_1 = arith.constant 0 : index
    %c0_2 = arith.constant 0 : index
    %2 = vector.load %arg2[%c0_1, %c0_2] : memref<32x4xf32, #tpu.memory_space<vmem>>, vector<32x4xf32>
    %3 = arith.truncf %2 : vector<32x4xf32> to vector<32x4xbf16>
    %cst = arith.constant dense<0.000000e+00> : vector<584x4xf32>
    %4 = tpu.matmul %1, %3, %cst {dimension_numbers = #tpu.dot_dimension_numbers<[1], [0], [0], [1], [0, 0, 1, 1], [], []>} : vector<584x32xbf16>, vector<32x4xbf16>, vector<584x4xf32> -> vector<584x4xf32>
    %c0_3 = arith.constant 0 : index
    %c0_4 = arith.constant 0 : index
    %5 = vector.load %arg3[%c0_3, %c0_4] : memref<1x4xf32, #tpu.memory_space<vmem>>, vector<1x4xf32>
    %6 = vector.broadcast %5 : vector<1x4xf32> to vector<584x4xf32>
    %7 = arith.addf %4, %6 : vector<584x4xf32>
    %8 = arith.mulf %7, %7 : vector<584x4xf32>
    %cst_5 = arith.constant 2.000000e-04 : f32
    %9 = vector.broadcast %cst_5 : f32 to vector<584x4xf32>
    %10 = arith.mulf %9, %8 : vector<584x4xf32>
    %cst_6 = arith.constant 1.000000e+00 : f32
    %11 = vector.broadcast %cst_6 : f32 to vector<584x4xf32>
    %12 = arith.addf %11, %10 : vector<584x4xf32>
    %13 = math.rsqrt %12 : vector<584x4xf32>
    %14 = arith.mulf %7, %13 : vector<584x4xf32>
    %c0_7 = arith.constant 0 : index
    %c0_8 = arith.constant 0 : index
    %15 = vector.load %arg4[%c0_7, %c0_8] : memref<584x4xf32, #tpu.memory_space<vmem>>, vector<584x4xf32>
    tpu.vector_store %arg4[%c0_7, %c0_8], %14 {strides = array<i32>} : memref<584x4xf32, #tpu.memory_space<vmem>>, vector<584x4xf32>,
    return
  }
  func.func @transform_0(%arg0: i32) -> (i32, i32) {
    %c0_i32 = arith.constant 0 : i32
    %c0_i32_0 = arith.constant 0 : i32
    return %arg0, %c0_i32 : i32, i32
  }
  func.func @transform_1(%arg0: i32) -> (i32, i32) {
    %c0_i32 = arith.constant 0 : i32
    %c0_i32_0 = arith.constant 0 : i32
    %c0_i32_1 = arith.constant 0 : i32
    return %c0_i32, %c0_i32_0 : i32, i32
  }
  func.func @transform_2(%arg0: i32) -> (i32, i32) {
    %c0_i32 = arith.constant 0 : i32
    %c0_i32_0 = arith.constant 0 : i32
    %c0_i32_1 = arith.constant 0 : i32
    return %c0_i32, %c0_i32_0 : i32, i32
  }
  func.func @transform_3(%arg0: i32) -> (i32, i32) {
    %c0_i32 = arith.constant 0 : i32
    %c0_i32_0 = arith.constant 0 : i32
    return %arg0, %c0_i32 : i32, i32
  }
}

</mosaic_0001>

<llo_original>
// kernel: ff_hybrid_vae_forward.9
$region0: #{ff_hybrid_vae_forward.9}
  #allocation0 [shape = 'u32[]', space=smem, size = 0x4, offset = 0x4, fixed_abs, tag = 'smem constant byte address 0x4 - core index']
  #allocation1 [shape = 'u32[144,128]{1,0:T(1,128)}', space=vmem, size = 0x12000, scoped, tag = 'internal scratch']
  %s0 = inlined_call_operand.vmem [shape: f32[512,16], index: 0, kind: input, shape index: {}]
  %s1 = inlined_call_operand.vmem [shape: f32[16,8], index: 1, kind: input, shape index: {}]
  %s2 = inlined_call_operand.hbm [shape: f32[1,8], index: 2, kind: input, shape index: {}]
  %s3 = inlined_call_operand.hbm [shape: f32[8,8], index: 3, kind: input, shape index: {}]
  %s4 = inlined_call_operand.vmem [shape: f32[512,8], index: 4, kind: output, shape index: {}]
  %s5 = sld [smem:[#allocation0]]
  $region57: #{ff_hybrid_vae_forward.9} parent=0
    _
  %s7 = ssub.s32 1, %s5
  %s8 = scalar_select 0, %s7, %s5
  $region1: #{ff_hybrid_vae_forward.9} parent=0
    #allocation2 [shape = 'u8[512]{0}', space=vmem, size = 0x400, scoped, tag = 'input window, operand 2, single buffered']
    #allocation3 [shape = 's32[2]{0}', space=sflag, size = 0x8, scoped, tag = 'scoped memory for ff_hybrid_vae_forward.9']
    #allocation4 [shape = 'u8[4096]{0}', space=vmem, size = 0x1000, scoped, tag = 'input window, operand 3, single buffered']
    #allocation5 [shape = 's32[1]{0}', space=sflag, size = 0x4, scoped, tag = 'scoped memory for ff_hybrid_vae_forward.9']
    %9 = vsyncpa [#allocation3], 0
    %10 = vsyncpa [#allocation5], 0
    loop: start=0, step=1, limit=4
    $region2: #{ff_hybrid_vae_forward.9} parent=1 // loop_pre_header
      _
    $region3: #{ff_hybrid_vae_forward.9} parent=1 // loop_header
      %s12 = sphi 0, %s16
      %p13 = scmp.ge.s32.totalorder %s12, 4
      %s22 = sphi 0, %s24
      %s25 = sphi 0, %s22
      %s26 = sphi 0, %s25
      %s42 = sphi 0, %s26
      %s46 = sphi 0, %s46
      %s48 = sphi 0, %s46
      %s49 = sphi 0, %s48
      %s63 = sphi 0, %s49
      %s67 = sphi 0, %s67
      %s69 = sphi 0, %s67
      %s70 = sphi 0, %s69
      %s84 = sphi 0, %s70
      %s88 = sphi 0, %s88
      %s90 = sphi 0, %s88
      %s91 = sphi 0, %s90
      %s105 = sphi 0, %s91
      %s111 = sphi 0, %s113
      %s114 = sphi 0, %s111
      %s115 = sphi 0, %s114
      %s131 = sphi 0, %s115
    $region4: #{ff_hybrid_vae_forward.9} parent=1 // loop_header_branch
      %15 = sbr.rel (%p13) target = $region8
    $region5: #{ff_hybrid_vae_forward.9} parent=1 // loop_body
      %s17 = ssub.s32 %s12, 1
      %s18 = ssub.s32 %s12, 2
      %s19 = sadd.s32 %s12, 1
      %s20 = ssub.s32 %s12, %s19
      %p21 = scmp.eq.s32.totalorder %s20, 0
      %s23 = sadd.s32 %s22, 1
      %s24 = scalar_select %p21, %s22, %s23
      %p27 = pneg %p21
      %p28 = scmp.eq.s32.totalorder %s12, 1
      %p29 = por %p27, %p28
      %p30 = scmp.ne.s32.totalorder %s22, %s25
      %p31 = scmp.eq.s32.totalorder %s12, 0
      %p32 = por %p30, %p31
      %p33 = scmp.ne.s32.totalorder %s22, %s25
      %p34 = scmp.eq.s32.totalorder %s17, 1
      %p35 = por %p33, %p34
      %p36 = scmp.ne.s32.totalorder %s25, %s26
      %p37 = scmp.eq.s32.totalorder %s17, 0
      %p38 = por %p36, %p37
      %p39 = scmp.ne.s32.totalorder %s25, %s26
      %p40 = scmp.eq.s32.totalorder %s18, 1
      %p41 = por %p39, %p40
      %p43 = scmp.ne.s32.totalorder %s26, %s42
      %p44 = scmp.eq.s32.totalorder %s18, 0
      %p45 = por %p43, %p44
      %s47 = sadd.s32 %s46, 1
      %p50 = scmp.eq.s32.totalorder %s12, 1
      %p51 = scmp.ne.s32.totalorder %s46, %s48
      %p52 = scmp.eq.s32.totalorder %s12, 0
      %p53 = por %p51, %p52
      %p54 = scmp.ne.s32.totalorder %s46, %s48
      %p55 = scmp.eq.s32.totalorder %s17, 1
      %p56 = por %p54, %p55
      %p57 = scmp.ne.s32.totalorder %s48, %s49
      %p58 = scmp.eq.s32.totalorder %s17, 0
      %p59 = por %p57, %p58
      %p60 = scmp.ne.s32.totalorder %s48, %s49
      %p61 = scmp.eq.s32.totalorder %s18, 1
      %p62 = por %p60, %p61
      %p64 = scmp.ne.s32.totalorder %s49, %s63
      %p65 = scmp.eq.s32.totalorder %s18, 0
      %p66 = por %p64, %p65
      %s68 = sadd.s32 %s67, 1
      %p71 = scmp.eq.s32.totalorder %s12, 1
      %p72 = scmp.ne.s32.totalorder %s67, %s69
      %p73 = scmp.eq.s32.totalorder %s12, 0
      %p74 = por %p72, %p73
      %p75 = scmp.ne.s32.totalorder %s67, %s69
      %p76 = scmp.eq.s32.totalorder %s17, 1
      %p77 = por %p75, %p76
      %p78 = scmp.ne.s32.totalorder %s69, %s70
      %p79 = scmp.eq.s32.totalorder %s17, 0
      %p80 = por %p78, %p79
      %p81 = scmp.ne.s32.totalorder %s69, %s70
      %p82 = scmp.eq.s32.totalorder %s18, 1
      %p83 = por %p81, %p82
      %p85 = scmp.ne.s32.totalorder %s70, %s84
      %p86 = scmp.eq.s32.totalorder %s18, 0
      %p87 = por %p85, %p86
      %s89 = sadd.s32 %s88, 1
      %p92 = scmp.eq.s32.totalorder %s12, 1
      %p93 = scmp.ne.s32.totalorder %s88, %s90
      %p94 = scmp.eq.s32.totalorder %s12, 0
      %p95 = por %p93, %p94
      %p96 = scmp.ne.s32.totalorder %s88, %s90
      %p97 = scmp.eq.s32.totalorder %s17, 1
      %p98 = por %p96, %p97
      %p99 = scmp.ne.s32.totalorder %s90, %s91
      %p100 = scmp.eq.s32.totalorder %s17, 0
      %p101 = por %p99, %p100
      %p102 = scmp.ne.s32.totalorder %s90, %s91
      %p103 = scmp.eq.s32.totalorder %s18, 1
      %p104 = por %p102, %p103
      %p106 = scmp.ne.s32.totalorder %s91, %s105
      %p107 = scmp.eq.s32.totalorder %s18, 0
      %p108 = por %p106, %p107
      %s109 = ssub.s32 %s12, %s19
      %p110 = scmp.eq.s32.totalorder %s109, 0
      %s112 = sadd.s32 %s111, 1
      %s113 = scalar_select %p110, %s111, %s112
      %p116 = pneg %p110
      %p117 = scmp.eq.s32.totalorder %s12, 1
      %p118 = por %p116, %p117
      %p119 = scmp.ne.s32.totalorder %s111, %s114
      %p120 = scmp.eq.s32.totalorder %s12, 0
      %p121 = por %p119, %p120
      %p122 = scmp.ne.s32.totalorder %s111, %s114
      %p123 = scmp.eq.s32.totalorder %s17, 1
      %p124 = por %p122, %p123
      %p125 = scmp.ne.s32.totalorder %s114, %s115
      %p126 = scmp.eq.s32.totalorder %s17, 0
      %p127 = por %p125, %p126
      %p128 = scmp.ne.s32.totalorder %s114, %s115
      %p129 = scmp.eq.s32.totalorder %s18, 1
      %p130 = por %p128, %p129
      %p132 = scmp.ne.s32.totalorder %s115, %s131
      %p133 = scmp.eq.s32.totalorder %s18, 0
      %p134 = por %p132, %p133
      %p135 = scmp.le.s32.totalorder 1, %s12
      %p136 = scmp.lt.s32.totalorder %s12, 3
      %p137 = pnand %p135, %p136
      %p138 = pneg %p137
      // Predicated region
      $region9: #{ff_hybrid_vae_forward.9} parent=5 // pred_check
        _
      $region10: #{ff_hybrid_vae_forward.9} parent=5 // pred_check_branch
        %140 = sbr.rel (%p137) target = $region12
      $region11: #{ff_hybrid_vae_forward.9} parent=5 // pred_region
        %s141 = ssub.s32 %s12, 1
        // Predicated region
        $region13: #{ff_hybrid_vae_forward.9} parent=11 // pred_check
          %p142 = pneg %p59
        $region14: #{ff_hybrid_vae_forward.9} parent=11 // pred_check_branch
          %144 = sbr.rel (%p142) target = $region16
        $region15: #{ff_hybrid_vae_forward.9} parent=11 // pred_region
          _
        $region16: #{ff_hybrid_vae_forward.9} parent=11 // pred_fallthru
          _
        // Predicated region
        $region17: #{ff_hybrid_vae_forward.9} parent=11 // pred_check
          %p145 = pneg %p80
        $region18: #{ff_hybrid_vae_forward.9} parent=11 // pred_check_branch
          %147 = sbr.rel (%p145) target = $region20
        $region19: #{ff_hybrid_vae_forward.9} parent=11 // pred_region
          %s149 = ssub.s32 16, 16
          %150 = vsyncadd [#allocation3], %s149
          %s152 = sshll.u32 [#allocation2], 4
          %s153 = int_to_ptr.vmem [resolvable:$true] %s152
          %155 = dma.hbm_to_vmem [thread:$0]  %s2, 16, %s153, [#allocation3]
        $region20: #{ff_hybrid_vae_forward.9} parent=11 // pred_fallthru
          _
        // Predicated region
        $region21: #{ff_hybrid_vae_forward.9} parent=11 // pred_check
          %p156 = pneg %p101
        $region22: #{ff_hybrid_vae_forward.9} parent=11 // pred_check_branch
          %158 = sbr.rel (%p156) target = $region24
        $region23: #{ff_hybrid_vae_forward.9} parent=11 // pred_region
          %s160 = ssub.s32 128, 128
          %161 = vsyncadd [#allocation5], %s160
          %s163 = sshll.u32 [#allocation4], 4
          %s164 = int_to_ptr.vmem [resolvable:$true] %s163
          %166 = dma.hbm_to_vmem [thread:$0]  %s3, 128, %s164, [#allocation5]
        $region24: #{ff_hybrid_vae_forward.9} parent=11 // pred_fallthru
          _
      $region12: #{ff_hybrid_vae_forward.9} parent=5 // pred_fallthru
        _
      %p167 = scmp.lt.s32.totalorder %s12, 2
      // Predicated region
      $region25: #{ff_hybrid_vae_forward.9} parent=5 // pred_check
        %p168 = pneg %p167
      $region26: #{ff_hybrid_vae_forward.9} parent=5 // pred_check_branch
        %170 = sbr.rel (%p168) target = $region28
      $region27: #{ff_hybrid_vae_forward.9} parent=5 // pred_region
        // Predicated region
        $region29: #{ff_hybrid_vae_forward.9} parent=27 // pred_check
          %p171 = pneg %p32
        $region30: #{ff_hybrid_vae_forward.9} parent=27 // pred_check_branch
          %173 = sbr.rel (%p171) target = $region32
        $region31: #{ff_hybrid_vae_forward.9} parent=27 // pred_region
          %s174 = smul.u32 32, %s12
          %p175 = scmp.lt.s32.totalorder %s174, 63
          %s176 = scalar_select %p175, %s174, 63
          %s177 = smul.addr %s176, 8
          %s178 = scalar_lea.vmem %s0, %s177
          %s179 = smul.u32 32, %s12
        $region32: #{ff_hybrid_vae_forward.9} parent=27 // pred_fallthru
          _
      $region28: #{ff_hybrid_vae_forward.9} parent=5 // pred_fallthru
        _
      %p180 = scmp.le.s32.totalorder 1, %s12
      %p181 = scmp.lt.s32.totalorder %s12, 3
      %p182 = pnand %p180, %p181
      %p183 = pneg %p182
      // Predicated region
      $region33: #{ff_hybrid_vae_forward.9} parent=5 // pred_check
        _
      $region34: #{ff_hybrid_vae_forward.9} parent=5 // pred_check_branch
        %185 = sbr.rel (%p182) target = $region36
      $region35: #{ff_hybrid_vae_forward.9} parent=5 // pred_region
        %s186 = ssub.s32 %s12, 1
        // Predicated region
        $region37: #{ff_hybrid_vae_forward.9} parent=35 // pred_check
          %p187 = pneg %p80
        $region38: #{ff_hybrid_vae_forward.9} parent=35 // pred_check_branch
          %189 = sbr.rel (%p187) target = $region40
        $region39: #{ff_hybrid_vae_forward.9} parent=35 // pred_region
          %190 = dma.done [#allocation3], 16
        $region40: #{ff_hybrid_vae_forward.9} parent=35 // pred_fallthru
          _
        // Predicated region
        $region41: #{ff_hybrid_vae_forward.9} parent=35 // pred_check
          %p191 = pneg %p101
        $region42: #{ff_hybrid_vae_forward.9} parent=35 // pred_check_branch
          %193 = sbr.rel (%p191) target = $region44
        $region43: #{ff_hybrid_vae_forward.9} parent=35 // pred_region
          %194 = dma.done [#allocation5], 128
        $region44: #{ff_hybrid_vae_forward.9} parent=35 // pred_fallthru
          _
        %s195 = smul.u32 32, %s17
        %p196 = scmp.lt.s32.totalorder %s195, 63
        %s197 = scalar_select %p196, %s195, 63
        %s198 = smul.addr %s197, 8
        %s199 = scalar_lea.vmem %s0, %s198
        %p200 = pneg %p38
        %p201 = pneg %p35
        %p202 = pneg %p59
        %p203 = pneg %p56
        %p204 = pneg %p80
        %p205 = pneg %p77
        %p206 = pneg %p101
        %p207 = pneg %p98
        %p208 = pneg %p127
        %p209 = pneg %p124
        %s210 = smul.u32 32, %s17
        %p211 = scmp.lt.s32.totalorder %s210, 63
        %s212 = scalar_select %p211, %s210, 63
        %s213 = smul.addr %s212, 8
        %s214 = scalar_lea.vmem %s4, %s213
        %s215 = smul.u32 32, %s17
        %p216 = scmp.lt.s32.totalorder %s215, 63
        %s217 = scalar_select %p216, %s215, 63
        %s218 = smul.addr %s217, 8
        %s219 = scalar_lea.vmem %s0, %s218
        %s220 = smul.u32 32, %s17
        %s221 = smul.u32 32, %s17
        %p222 = scmp.lt.s32.totalorder %s221, 63
        %s223 = scalar_select %p222, %s221, 63
        %s224 = smul.addr %s223, 8
        %s225 = scalar_lea.vmem %s4, %s224
        %s226 = smul.u32 32, %s17
        %v228 = vld [vmem:[%s219] sm:$0xff]
        %v229 = vld [vmem:[%s219 + $0x8] sm:$0xff]
        %v230 = vld [vmem:[%s219 + $0x10] sm:$0xff]
        %v231 = vld [vmem:[%s219 + $0x18] sm:$0xff]
        %v232 = vld [vmem:[%s219 + $0x20] sm:$0xff]
        %v233 = vld [vmem:[%s219 + $0x28] sm:$0xff]
        %v234 = vld [vmem:[%s219 + $0x30] sm:$0xff]
        %v235 = vld [vmem:[%s219 + $0x38] sm:$0xff]
        %v236 = vld [vmem:[%s219 + $0x40] sm:$0xff]
        %v237 = vld [vmem:[%s219 + $0x48] sm:$0xff]
        %v238 = vld [vmem:[%s219 + $0x50] sm:$0xff]
        %v239 = vld [vmem:[%s219 + $0x58] sm:$0xff]
        %v240 = vld [vmem:[%s219 + $0x60] sm:$0xff]
        %v241 = vld [vmem:[%s219 + $0x68] sm:$0xff]
        %v242 = vld [vmem:[%s219 + $0x70] sm:$0xff]
        %v243 = vld [vmem:[%s219 + $0x78] sm:$0xff]
        %v244 = vld [vmem:[%s219 + $0x80] sm:$0xff]
        %v245 = vld [vmem:[%s219 + $0x88] sm:$0xff]
        %v246 = vld [vmem:[%s219 + $0x90] sm:$0xff]
        %v247 = vld [vmem:[%s219 + $0x98] sm:$0xff]
        %v248 = vld [vmem:[%s219 + $0xa0] sm:$0xff]
        %v249 = vld [vmem:[%s219 + $0xa8] sm:$0xff]
        %v250 = vld [vmem:[%s219 + $0xb0] sm:$0xff]
        %v251 = vld [vmem:[%s219 + $0xb8] sm:$0xff]
        %v252 = vld [vmem:[%s219 + $0xc0] sm:$0xff]
        %v253 = vld [vmem:[%s219 + $0xc8] sm:$0xff]
        %v254 = vld [vmem:[%s219 + $0xd0] sm:$0xff]
        %v255 = vld [vmem:[%s219 + $0xd8] sm:$0xff]
        %v256 = vld [vmem:[%s219 + $0xe0] sm:$0xff]
        %v257 = vld [vmem:[%s219 + $0xe8] sm:$0xff]
        %v258 = vld [vmem:[%s219 + $0xf0] sm:$0xff]
        %v259 = vld [vmem:[%s219 + $0xf8] sm:$0xff]
        %v260 = vpack.c.bf16 %v229, %v228
        %v261 = vpack.c.bf16 %v231, %v230
        %v262 = vpack.c.bf16 %v233, %v232
        %v263 = vpack.c.bf16 %v235, %v234
        %v264 = vpack.c.bf16 %v237, %v236
        %v265 = vpack.c.bf16 %v239, %v238
        %v266 = vpack.c.bf16 %v241, %v240
        %v267 = vpack.c.bf16 %v243, %v242
        %v268 = vpack.c.bf16 %v245, %v244
        %v269 = vpack.c.bf16 %v247, %v246
        %v270 = vpack.c.bf16 %v249, %v248
        %v271 = vpack.c.bf16 %v251, %v250
        %v272 = vpack.c.bf16 %v253, %v252
        %v273 = vpack.c.bf16 %v255, %v254
        %v274 = vpack.c.bf16 %v257, %v256
        %v275 = vpack.c.bf16 %v259, %v258
        %v276 = vld [vmem:[%s1] sm:$0xff]
        %v277 = vld [vmem:[%s1 + $0x8] sm:$0xff]
        %v278 = vpack.c.bf16 %v277, %v276
        %v279 = vld [vmem:[#allocation2] sm:$0x1]
        %v281 = vlaneseq
        %v282 = vshrl.u32 %v281, 7
        %v283 = vsub.s32 0, %v282
        %v284 = vrot.slane %v279, %v283
        %vm286 = vcmask 130048
        %v288 = vsel %vm286, %v260, 0
        %v291 = vsel %vm286, %v261, 0
        %v294 = vsel %vm286, %v262, 0
        %v297 = vsel %vm286, %v263, 0
        %v300 = vsel %vm286, %v264, 0
        %v303 = vsel %vm286, %v265, 0
        %v306 = vsel %vm286, %v266, 0
        %v309 = vsel %vm286, %v267, 0
        %v312 = vsel %vm286, %v268, 0
        %v315 = vsel %vm286, %v269, 0
        %v318 = vsel %vm286, %v270, 0
        %v321 = vsel %vm286, %v271, 0
        %v324 = vsel %vm286, %v272, 0
        %v327 = vsel %vm286, %v273, 0
        %v330 = vsel %vm286, %v274, 0
        %v333 = vsel %vm286, %v275, 0
        %335 = vmatprep.subr.bf16.mxu0 0
        %336 = vmatpush1.bf16.msra.mxu0 0
        %337 = vmatprep.subr.bf16.mxu0 0
        %338 = vmatpush1.bf16.msra.mxu0 0
        %339 = vmatprep.subr.bf16.mxu0 0
        %340 = vmatpush1.bf16.msra.mxu0 0
        %341 = vmatprep.subr.bf16.mxu0 0
        %342 = vmatpush1.bf16.msra.mxu0 0
        %343 = vmatprep.subr.bf16.mxu0 0
        %344 = vmatpush1.bf16.msra.mxu0 0
        %345 = vmatprep.subr.bf16.mxu0 0
        %346 = vmatpush1.bf16.msra.mxu0 0
        %347 = vmatprep.subr.bf16.mxu0 0
        %348 = vmatpush1.bf16.msra.mxu0 0
        %349 = vmatprep.subr.bf16.mxu0 0
        %350 = vmatpush1.bf16.msra.mxu0 %v278
        %351 = vmatprep.subr.bf16.mxu0 0
        %352 = vmatpush2.bf16.msra.mxu0 0
        %353 = vmatprep.subr.bf16.mxu0 0
        %354 = vmatpush2.bf16.msra.mxu0 0
        %355 = vmatprep.subr.bf16.mxu0 0
        %356 = vmatpush2.bf16.msra.mxu0 0
        %357 = vmatprep.subr.bf16.mxu0 0
        %358 = vmatpush2.bf16.msra.mxu0 0
        %359 = vmatprep.subr.bf16.mxu0 0
        %360 = vmatpush2.bf16.msra.mxu0 0
        %361 = vmatprep.subr.bf16.mxu0 0
        %362 = vmatpush2.bf16.msra.mxu0 0
        %363 = vmatprep.subr.bf16.mxu0 0
        %364 = vmatpush2.bf16.msra.mxu0 0
        %365 = vmatprep.subr.bf16.mxu0 0
        %366 = vmatpush2.bf16.msra.mxu0 0
        %367 = vmatprep.mubr.bf16.mxu0 0
        %368 = vmatmul.mubr.bf16.gmra.mxu0 %v288
        %v369 = vpop.f32.mrf.mxu0
        %v370 = vadd.f32 %v284, %v369
        %v371 = vpop.f32.mrf.mxu0
        %v372 = vpop.f32.mrf.mxu0
        %v373 = vadd.f32 %v284, %v372
        %v374 = vpop.f32.mrf.mxu0
        %375 = vmatprep.mubr.bf16.mxu0 0
        %376 = vmatmul.mubr.bf16.gmra.mxu0 %v291
        %v377 = vpop.f32.mrf.mxu0
        %v378 = vadd.f32 %v284, %v377
        %v379 = vpop.f32.mrf.mxu0
        %v380 = vpop.f32.mrf.mxu0
        %v381 = vadd.f32 %v284, %v380
        %v382 = vpop.f32.mrf.mxu0
        %383 = vmatprep.mubr.bf16.mxu0 0
        %384 = vmatmul.mubr.bf16.gmra.mxu0 %v294
        %v385 = vpop.f32.mrf.mxu0
        %v386 = vadd.f32 %v284, %v385
        %v387 = vpop.f32.mrf.mxu0
        %v388 = vpop.f32.mrf.mxu0
        %v389 = vadd.f32 %v284, %v388
        %v390 = vpop.f32.mrf.mxu0
        %391 = vmatprep.mubr.bf16.mxu0 0
        %392 = vmatmul.mubr.bf16.gmra.mxu0 %v297
        %v393 = vpop.f32.mrf.mxu0
        %v394 = vadd.f32 %v284, %v393
        %v395 = vpop.f32.mrf.mxu0
        %v396 = vpop.f32.mrf.mxu0
        %v397 = vadd.f32 %v284, %v396
        %v398 = vpop.f32.mrf.mxu0
        %399 = vmatprep.mubr.bf16.mxu0 0
        %400 = vmatmul.mubr.bf16.gmra.mxu0 %v300
        %v401 = vpop.f32.mrf.mxu0
        %v402 = vadd.f32 %v284, %v401
        %v403 = vpop.f32.mrf.mxu0
        %v404 = vpop.f32.mrf.mxu0
        %v405 = vadd.f32 %v284, %v404
        %v406 = vpop.f32.mrf.mxu0
        %407 = vmatprep.mubr.bf16.mxu0 0
        %408 = vmatmul.mubr.bf16.gmra.mxu0 %v303
        %v409 = vpop.f32.mrf.mxu0
        %v410 = vadd.f32 %v284, %v409
        %v411 = vpop.f32.mrf.mxu0
        %v412 = vpop.f32.mrf.mxu0
        %v413 = vadd.f32 %v284, %v412
        %v414 = vpop.f32.mrf.mxu0
        %415 = vmatprep.mubr.bf16.mxu0 0
        %416 = vmatmul.mubr.bf16.gmra.mxu0 %v306
        %v417 = vpop.f32.mrf.mxu0
        %v418 = vadd.f32 %v284, %v417
        %v419 = vpop.f32.mrf.mxu0
        %v420 = vpop.f32.mrf.mxu0
        %v421 = vadd.f32 %v284, %v420
        %v422 = vpop.f32.mrf.mxu0
        %423 = vmatprep.mubr.bf16.mxu0 0
        %424 = vmatmul.mubr.bf16.gmra.mxu0 %v309
        %v425 = vpop.f32.mrf.mxu0
        %v426 = vadd.f32 %v284, %v425
        %v427 = vpop.f32.mrf.mxu0
        %v428 = vpop.f32.mrf.mxu0
        %v429 = vadd.f32 %v284, %v428
        %v430 = vpop.f32.mrf.mxu0
        %431 = vmatprep.mubr.bf16.mxu0 0
        %432 = vmatmul.mubr.bf16.gmra.mxu0 %v312
        %v433 = vpop.f32.mrf.mxu0
        %v434 = vadd.f32 %v284, %v433
        %v435 = vpop.f32.mrf.mxu0
        %v436 = vpop.f32.mrf.mxu0
        %v437 = vadd.f32 %v284, %v436
        %v438 = vpop.f32.mrf.mxu0
        %439 = vmatprep.mubr.bf16.mxu0 0
        %440 = vmatmul.mubr.bf16.gmra.mxu0 %v315
        %v441 = vpop.f32.mrf.mxu0
        %v442 = vadd.f32 %v284, %v441
        %v443 = vpop.f32.mrf.mxu0
        %v444 = vpop.f32.mrf.mxu0
        %v445 = vadd.f32 %v284, %v444
        %v446 = vpop.f32.mrf.mxu0
        %447 = vmatprep.mubr.bf16.mxu0 0
        %448 = vmatmul.mubr.bf16.gmra.mxu0 %v318
        %v449 = vpop.f32.mrf.mxu0
        %v450 = vadd.f32 %v284, %v449
        %v451 = vpop.f32.mrf.mxu0
        %v452 = vpop.f32.mrf.mxu0
        %v453 = vadd.f32 %v284, %v452
        %v454 = vpop.f32.mrf.mxu0
        %455 = vmatprep.mubr.bf16.mxu0 0
        %456 = vmatmul.mubr.bf16.gmra.mxu0 %v321
        %v457 = vpop.f32.mrf.mxu0
        %v458 = vadd.f32 %v284, %v457
        %v459 = vpop.f32.mrf.mxu0
        %v460 = vpop.f32.mrf.mxu0
        %v461 = vadd.f32 %v284, %v460
        %v462 = vpop.f32.mrf.mxu0
        %463 = vmatprep.mubr.bf16.mxu0 0
        %464 = vmatmul.mubr.bf16.gmra.mxu0 %v324
        %v465 = vpop.f32.mrf.mxu0
        %v466 = vadd.f32 %v284, %v465
        %v467 = vpop.f32.mrf.mxu0
        %v468 = vpop.f32.mrf.mxu0
        %v469 = vadd.f32 %v284, %v468
        %v470 = vpop.f32.mrf.mxu0
        %471 = vmatprep.mubr.bf16.mxu0 0
        %472 = vmatmul.mubr.bf16.gmra.mxu0 %v327
        %v473 = vpop.f32.mrf.mxu0
        %v474 = vadd.f32 %v284, %v473
        %v475 = vpop.f32.mrf.mxu0
        %v476 = vpop.f32.mrf.mxu0
        %v477 = vadd.f32 %v284, %v476
        %v478 = vpop.f32.mrf.mxu0
        %479 = vmatprep.mubr.bf16.mxu0 0
        %480 = vmatmul.mubr.bf16.gmra.mxu0 %v330
        %v481 = vpop.f32.mrf.mxu0
        %v482 = vadd.f32 %v284, %v481
        %v483 = vpop.f32.mrf.mxu0
        %v484 = vpop.f32.mrf.mxu0
        %v485 = vadd.f32 %v284, %v484
        %v486 = vpop.f32.mrf.mxu0
        %487 = vmatprep.mubr.bf16.mxu0 0
        %488 = vmatmul.mubr.bf16.gmra.mxu0 %v333
        %v489 = vpop.f32.mrf.mxu0
        %v490 = vadd.f32 %v284, %v489
        %v491 = vpop.f32.mrf.mxu0
        %v492 = vpop.f32.mrf.mxu0
        %v493 = vadd.f32 %v284, %v492
        %v494 = vpop.f32.mrf.mxu0
        %495 = vdwg.mxu0
        %v496 = vmax.f32 %v370, 0.0
        %v497 = vmax.f32 %v373, 0.0
        %v498 = vmax.f32 %v378, 0.0
        %v499 = vmax.f32 %v381, 0.0
        %v500 = vmax.f32 %v386, 0.0
        %v501 = vmax.f32 %v389, 0.0
        %v502 = vmax.f32 %v394, 0.0
        %v503 = vmax.f32 %v397, 0.0
        %v504 = vmax.f32 %v402, 0.0
        %v505 = vmax.f32 %v405, 0.0
        %v506 = vmax.f32 %v410, 0.0
        %v507 = vmax.f32 %v413, 0.0
        %v508 = vmax.f32 %v418, 0.0
        %v509 = vmax.f32 %v421, 0.0
        %v510 = vmax.f32 %v426, 0.0
        %v511 = vmax.f32 %v429, 0.0
        %v512 = vmax.f32 %v434, 0.0
        %v513 = vmax.f32 %v437, 0.0
        %v514 = vmax.f32 %v442, 0.0
        %v515 = vmax.f32 %v445, 0.0
        %v516 = vmax.f32 %v450, 0.0
        %v517 = vmax.f32 %v453, 0.0
        %v518 = vmax.f32 %v458, 0.0
        %v519 = vmax.f32 %v461, 0.0
        %v520 = vmax.f32 %v466, 0.0
        %v521 = vmax.f32 %v469, 0.0
        %v522 = vmax.f32 %v474, 0.0
        %v523 = vmax.f32 %v477, 0.0
        %v524 = vmax.f32 %v482, 0.0
        %v525 = vmax.f32 %v485, 0.0
        %v526 = vmax.f32 %v490, 0.0
        %v527 = vmax.f32 %v493, 0.0
        %v528 = vmul.f32 %v496, %v496
        %v529 = vmul.f32 %v497, %v497
        %v530 = vmul.f32 %v498, %v498
        %v531 = vmul.f32 %v499, %v499
        %v532 = vmul.f32 %v500, %v500
        %v533 = vmul.f32 %v501, %v501
        %v534 = vmul.f32 %v502, %v502
        %v535 = vmul.f32 %v503, %v503
        %v536 = vmul.f32 %v504, %v504
        %v537 = vmul.f32 %v505, %v505
        %v538 = vmul.f32 %v506, %v506
        %v539 = vmul.f32 %v507, %v507
        %v540 = vmul.f32 %v508, %v508
        %v541 = vmul.f32 %v509, %v509
        %v542 = vmul.f32 %v510, %v510
        %v543 = vmul.f32 %v511, %v511
        %v544 = vmul.f32 %v512, %v512
        %v545 = vmul.f32 %v513, %v513
        %v546 = vmul.f32 %v514, %v514
        %v547 = vmul.f32 %v515, %v515
        %v548 = vmul.f32 %v516, %v516
        %v549 = vmul.f32 %v517, %v517
        %v550 = vmul.f32 %v518, %v518
        %v551 = vmul.f32 %v519, %v519
        %v552 = vmul.f32 %v520, %v520
        %v553 = vmul.f32 %v521, %v521
        %v554 = vmul.f32 %v522, %v522
        %v555 = vmul.f32 %v523, %v523
        %v556 = vmul.f32 %v524, %v524
        %v557 = vmul.f32 %v525, %v525
        %v558 = vmul.f32 %v526, %v526
        %v559 = vmul.f32 %v527, %v527
        %v560 = vld [vmem:[#allocation4] sm:$0xff]
        %vm561 = vcmask 64512
        %v563 = vsel %vm561, %v528, 0
        %v566 = vsel %vm561, %v529, 0
        %v569 = vsel %vm561, %v530, 0
        %v572 = vsel %vm561, %v531, 0
        %v575 = vsel %vm561, %v532, 0
        %v578 = vsel %vm561, %v533, 0
        %v581 = vsel %vm561, %v534, 0
        %v584 = vsel %vm561, %v535, 0
        %v587 = vsel %vm561, %v536, 0
        %v590 = vsel %vm561, %v537, 0
        %v593 = vsel %vm561, %v538, 0
        %v596 = vsel %vm561, %v539, 0
        %v599 = vsel %vm561, %v540, 0
        %v602 = vsel %vm561, %v541, 0
        %v605 = vsel %vm561, %v542, 0
        %v608 = vsel %vm561, %v543, 0
        %v611 = vsel %vm561, %v544, 0
        %v614 = vsel %vm561, %v545, 0
        %v617 = vsel %vm561, %v546, 0
        %v620 = vsel %vm561, %v547, 0
        %v623 = vsel %vm561, %v548, 0
        %v626 = vsel %vm561, %v549, 0
        %v629 = vsel %vm561, %v550, 0
        %v632 = vsel %vm561, %v551, 0
        %v635 = vsel %vm561, %v552, 0
        %v638 = vsel %vm561, %v553, 0
        %v641 = vsel %vm561, %v554, 0
        %v644 = vsel %vm561, %v555, 0
        %v647 = vsel %vm561, %v556, 0
        %v650 = vsel %vm561, %v557, 0
        %v653 = vsel %vm561, %v558, 0
        %v656 = vsel %vm561, %v559, 0
        %658 = vmatprep.subr.mxu0 0.0
        %659 = vmatpush1.msra.mxu0 0.0
        %660 = vmatprep.subr.mxu0 0.0
        %661 = vmatpush1.msra.mxu0 0.0
        %662 = vmatprep.subr.mxu0 0.0
        %663 = vmatpush1.msra.mxu0 0.0
        %664 = vmatprep.subr.mxu0 0.0
        %665 = vmatpush1.msra.mxu0 0.0
        %666 = vmatprep.subr.mxu0 0.0
        %667 = vmatpush1.msra.mxu0 0.0
        %668 = vmatprep.subr.mxu0 0.0
        %669 = vmatpush1.msra.mxu0 0.0
        %670 = vmatprep.subr.mxu0 0.0
        %671 = vmatpush1.msra.mxu0 0.0
        %672 = vmatprep.subr.mxu0 0.0
        %673 = vmatpush1.msra.mxu0 0.0
        %674 = vmatprep.subr.mxu0 0.0
        %675 = vmatpush1.msra.mxu0 0.0
        %676 = vmatprep.subr.mxu0 0.0
        %677 = vmatpush1.msra.mxu0 0.0
        %678 = vmatprep.subr.mxu0 0.0
        %679 = vmatpush1.msra.mxu0 0.0
        %680 = vmatprep.subr.mxu0 0.0
        %681 = vmatpush1.msra.mxu0 0.0
        %682 = vmatprep.subr.mxu0 0.0
        %683 = vmatpush1.msra.mxu0 0.0
        %684 = vmatprep.subr.mxu0 0.0
        %685 = vmatpush1.msra.mxu0 0.0
        %686 = vmatprep.subr.mxu0 0.0
        %687 = vmatpush1.msra.mxu0 0.0
        %688 = vmatprep.subr.mxu0 0.0
        %689 = vmatpush1.msra.mxu0 %v560
        %690 = vmatprep.subr.mxu0 0.0
        %691 = vmatpush2.msra.mxu0 0.0
        %692 = vmatprep.subr.mxu0 0.0
        %693 = vmatpush2.msra.mxu0 0.0
        %694 = vmatprep.subr.mxu0 0.0
        %695 = vmatpush2.msra.mxu0 0.0
        %696 = vmatprep.subr.mxu0 0.0
        %697 = vmatpush2.msra.mxu0 0.0
        %698 = vmatprep.subr.mxu0 0.0
        %699 = vmatpush2.msra.mxu0 0.0
        %700 = vmatprep.subr.mxu0 0.0
        %701 = vmatpush2.msra.mxu0 0.0
        %702 = vmatprep.subr.mxu0 0.0
        %703 = vmatpush2.msra.mxu0 0.0
        %704 = vmatprep.subr.mxu0 0.0
        %705 = vmatpush2.msra.mxu0 0.0
        %706 = vmatprep.subr.mxu0 0.0
        %707 = vmatpush2.msra.mxu0 0.0
        %708 = vmatprep.subr.mxu0 0.0
        %709 = vmatpush2.msra.mxu0 0.0
        %710 = vmatprep.subr.mxu0 0.0
        %711 = vmatpush2.msra.mxu0 0.0
        %712 = vmatprep.subr.mxu0 0.0
        %713 = vmatpush2.msra.mxu0 0.0
        %714 = vmatprep.subr.mxu0 0.0
        %715 = vmatpush2.msra.mxu0 0.0
        %716 = vmatprep.subr.mxu0 0.0
        %717 = vmatpush2.msra.mxu0 0.0
        %718 = vmatprep.subr.mxu0 0.0
        %719 = vmatpush2.msra.mxu0 0.0
        %720 = vmatprep.subr.mxu0 0.0
        %721 = vmatpush2.msra.mxu0 0.0
        %722 = vmatprep.mubr.f32.mxu0 0.0
        %723 = vmatmul.mubr.f32.gmra.mxu0 %v563
        %v724 = vpop.f32.mrf.mxu0
        %v725 = vadd.f32 0.0, %v724
        %v726 = vpop.f32.mrf.mxu0
        %727 = vmatprep.mubr.f32.mxu0 0.0
        %728 = vmatmul.mubr.f32.gmra.mxu0 %v566
        %v729 = vpop.f32.mrf.mxu0
        %v730 = vadd.f32 0.0, %v729
        %v731 = vpop.f32.mrf.mxu0
        %732 = vmatprep.mubr.f32.mxu0 0.0
        %733 = vmatmul.mubr.f32.gmra.mxu0 %v569
        %v734 = vpop.f32.mrf.mxu0
        %v735 = vadd.f32 0.0, %v734
        %v736 = vpop.f32.mrf.mxu0
        %737 = vmatprep.mubr.f32.mxu0 0.0
        %738 = vmatmul.mubr.f32.gmra.mxu0 %v572
        %v739 = vpop.f32.mrf.mxu0
        %v740 = vadd.f32 0.0, %v739
        %v741 = vpop.f32.mrf.mxu0
        %742 = vmatprep.mubr.f32.mxu0 0.0
        %743 = vmatmul.mubr.f32.gmra.mxu0 %v575
        %v744 = vpop.f32.mrf.mxu0
        %v745 = vadd.f32 0.0, %v744
        %v746 = vpop.f32.mrf.mxu0
        %747 = vmatprep.mubr.f32.mxu0 0.0
        %748 = vmatmul.mubr.f32.gmra.mxu0 %v578
        %v749 = vpop.f32.mrf.mxu0
        %v750 = vadd.f32 0.0, %v749
        %v751 = vpop.f32.mrf.mxu0
        %752 = vmatprep.mubr.f32.mxu0 0.0
        %753 = vmatmul.mubr.f32.gmra.mxu0 %v581
        %v754 = vpop.f32.mrf.mxu0
        %v755 = vadd.f32 0.0, %v754
        %v756 = vpop.f32.mrf.mxu0
        %757 = vmatprep.mubr.f32.mxu0 0.0
        %758 = vmatmul.mubr.f32.gmra.mxu0 %v584
        %v759 = vpop.f32.mrf.mxu0
        %v760 = vadd.f32 0.0, %v759
        %v761 = vpop.f32.mrf.mxu0
        %762 = vmatprep.mubr.f32.mxu0 0.0
        %763 = vmatmul.mubr.f32.gmra.mxu0 %v587
        %v764 = vpop.f32.mrf.mxu0
        %v765 = vadd.f32 0.0, %v764
        %v766 = vpop.f32.mrf.mxu0
        %767 = vmatprep.mubr.f32.mxu0 0.0
        %768 = vmatmul.mubr.f32.gmra.mxu0 %v590
        %v769 = vpop.f32.mrf.mxu0
        %v770 = vadd.f32 0.0, %v769
        %v771 = vpop.f32.mrf.mxu0
        %772 = vmatprep.mubr.f32.mxu0 0.0
        %773 = vmatmul.mubr.f32.gmra.mxu0 %v593
        %v774 = vpop.f32.mrf.mxu0
        %v775 = vadd.f32 0.0, %v774
        %v776 = vpop.f32.mrf.mxu0
        %777 = vmatprep.mubr.f32.mxu0 0.0
        %778 = vmatmul.mubr.f32.gmra.mxu0 %v596
        %v779 = vpop.f32.mrf.mxu0
        %v780 = vadd.f32 0.0, %v779
        %v781 = vpop.f32.mrf.mxu0
        %782 = vmatprep.mubr.f32.mxu0 0.0
        %783 = vmatmul.mubr.f32.gmra.mxu0 %v599
        %v784 = vpop.f32.mrf.mxu0
        %v785 = vadd.f32 0.0, %v784
        %v786 = vpop.f32.mrf.mxu0
        %787 = vmatprep.mubr.f32.mxu0 0.0
        %788 = vmatmul.mubr.f32.gmra.mxu0 %v602
        %v789 = vpop.f32.mrf.mxu0
        %v790 = vadd.f32 0.0, %v789
        %v791 = vpop.f32.mrf.mxu0
        %792 = vmatprep.mubr.f32.mxu0 0.0
        %793 = vmatmul.mubr.f32.gmra.mxu0 %v605
        %v794 = vpop.f32.mrf.mxu0
        %v795 = vadd.f32 0.0, %v794
        %v796 = vpop.f32.mrf.mxu0
        %797 = vmatprep.mubr.f32.mxu0 0.0
        %798 = vmatmul.mubr.f32.gmra.mxu0 %v608
        %v799 = vpop.f32.mrf.mxu0
        %v800 = vadd.f32 0.0, %v799
        %v801 = vpop.f32.mrf.mxu0
        %802 = vmatprep.mubr.f32.mxu0 0.0
        %803 = vmatmul.mubr.f32.gmra.mxu0 %v611
        %v804 = vpop.f32.mrf.mxu0
        %v805 = vadd.f32 0.0, %v804
        %v806 = vpop.f32.mrf.mxu0
        %807 = vmatprep.mubr.f32.mxu0 0.0
        %808 = vmatmul.mubr.f32.gmra.mxu0 %v614
        %v809 = vpop.f32.mrf.mxu0
        %v810 = vadd.f32 0.0, %v809
        %v811 = vpop.f32.mrf.mxu0
        %812 = vmatprep.mubr.f32.mxu0 0.0
        %813 = vmatmul.mubr.f32.gmra.mxu0 %v617
        %v814 = vpop.f32.mrf.mxu0
        %v815 = vadd.f32 0.0, %v814
        %v816 = vpop.f32.mrf.mxu0
        %817 = vmatprep.mubr.f32.mxu0 0.0
        %818 = vmatmul.mubr.f32.gmra.mxu0 %v620
        %v819 = vpop.f32.mrf.mxu0
        %v820 = vadd.f32 0.0, %v819
        %v821 = vpop.f32.mrf.mxu0
        %822 = vmatprep.mubr.f32.mxu0 0.0
        %823 = vmatmul.mubr.f32.gmra.mxu0 %v623
        %v824 = vpop.f32.mrf.mxu0
        %v825 = vadd.f32 0.0, %v824
        %v826 = vpop.f32.mrf.mxu0
        %827 = vmatprep.mubr.f32.mxu0 0.0
        %828 = vmatmul.mubr.f32.gmra.mxu0 %v626
        %v829 = vpop.f32.mrf.mxu0
        %v830 = vadd.f32 0.0, %v829
        %v831 = vpop.f32.mrf.mxu0
        %832 = vmatprep.mubr.f32.mxu0 0.0
        %833 = vmatmul.mubr.f32.gmra.mxu0 %v629
        %v834 = vpop.f32.mrf.mxu0
        %v835 = vadd.f32 0.0, %v834
        %v836 = vpop.f32.mrf.mxu0
        %837 = vmatprep.mubr.f32.mxu0 0.0
        %838 = vmatmul.mubr.f32.gmra.mxu0 %v632
        %v839 = vpop.f32.mrf.mxu0
        %v840 = vadd.f32 0.0, %v839
        %v841 = vpop.f32.mrf.mxu0
        %842 = vmatprep.mubr.f32.mxu0 0.0
        %843 = vmatmul.mubr.f32.gmra.mxu0 %v635
        %v844 = vpop.f32.mrf.mxu0
        %v845 = vadd.f32 0.0, %v844
        %v846 = vpop.f32.mrf.mxu0
        %847 = vmatprep.mubr.f32.mxu0 0.0
        %848 = vmatmul.mubr.f32.gmra.mxu0 %v638
        %v849 = vpop.f32.mrf.mxu0
        %v850 = vadd.f32 0.0, %v849
        %v851 = vpop.f32.mrf.mxu0
        %852 = vmatprep.mubr.f32.mxu0 0.0
        %853 = vmatmul.mubr.f32.gmra.mxu0 %v641
        %v854 = vpop.f32.mrf.mxu0
        %v855 = vadd.f32 0.0, %v854
        %v856 = vpop.f32.mrf.mxu0
        %857 = vmatprep.mubr.f32.mxu0 0.0
        %858 = vmatmul.mubr.f32.gmra.mxu0 %v644
        %v859 = vpop.f32.mrf.mxu0
        %v860 = vadd.f32 0.0, %v859
        %v861 = vpop.f32.mrf.mxu0
        %862 = vmatprep.mubr.f32.mxu0 0.0
        %863 = vmatmul.mubr.f32.gmra.mxu0 %v647
        %v864 = vpop.f32.mrf.mxu0
        %v865 = vadd.f32 0.0, %v864
        %v866 = vpop.f32.mrf.mxu0
        %867 = vmatprep.mubr.f32.mxu0 0.0
        %868 = vmatmul.mubr.f32.gmra.mxu0 %v650
        %v869 = vpop.f32.mrf.mxu0
        %v870 = vadd.f32 0.0, %v869
        %v871 = vpop.f32.mrf.mxu0
        %872 = vmatprep.mubr.f32.mxu0 0.0
        %873 = vmatmul.mubr.f32.gmra.mxu0 %v653
        %v874 = vpop.f32.mrf.mxu0
        %v875 = vadd.f32 0.0, %v874
        %v876 = vpop.f32.mrf.mxu0
        %877 = vmatprep.mubr.f32.mxu0 0.0
        %878 = vmatmul.mubr.f32.gmra.mxu0 %v656
        %v879 = vpop.f32.mrf.mxu0
        %v880 = vadd.f32 0.0, %v879
        %v881 = vpop.f32.mrf.mxu0
        %882 = vdwg.mxu0
        %v883 = vmul.f32 %v725, 0.0002
        %v884 = vmul.f32 %v730, 0.0002
        %v885 = vmul.f32 %v735, 0.0002
        %v886 = vmul.f32 %v740, 0.0002
        %v887 = vmul.f32 %v745, 0.0002
        %v888 = vmul.f32 %v750, 0.0002
        %v889 = vmul.f32 %v755, 0.0002
        %v890 = vmul.f32 %v760, 0.0002
        %v891 = vmul.f32 %v765, 0.0002
        %v892 = vmul.f32 %v770, 0.0002
        %v893 = vmul.f32 %v775, 0.0002
        %v894 = vmul.f32 %v780, 0.0002
        %v895 = vmul.f32 %v785, 0.0002
        %v896 = vmul.f32 %v790, 0.0002
        %v897 = vmul.f32 %v795, 0.0002
        %v898 = vmul.f32 %v800, 0.0002
        %v899 = vmul.f32 %v805, 0.0002
        %v900 = vmul.f32 %v810, 0.0002
        %v901 = vmul.f32 %v815, 0.0002
        %v902 = vmul.f32 %v820, 0.0002
        %v903 = vmul.f32 %v825, 0.0002
        %v904 = vmul.f32 %v830, 0.0002
        %v905 = vmul.f32 %v835, 0.0002
        %v906 = vmul.f32 %v840, 0.0002
        %v907 = vmul.f32 %v845, 0.0002
        %v908 = vmul.f32 %v850, 0.0002
        %v909 = vmul.f32 %v855, 0.0002
        %v910 = vmul.f32 %v860, 0.0002
        %v911 = vmul.f32 %v865, 0.0002
        %v912 = vmul.f32 %v870, 0.0002
        %v913 = vmul.f32 %v875, 0.0002
        %v914 = vmul.f32 %v880, 0.0002
        %v915 = vadd.f32 %v883, 1.0
        %v916 = vadd.f32 %v884, 1.0
        %v917 = vadd.f32 %v885, 1.0
        %v918 = vadd.f32 %v886, 1.0
        %v919 = vadd.f32 %v887, 1.0
        %v920 = vadd.f32 %v888, 1.0
        %v921 = vadd.f32 %v889, 1.0
        %v922 = vadd.f32 %v890, 1.0
        %v923 = vadd.f32 %v891, 1.0
        %v924 = vadd.f32 %v892, 1.0
        %v925 = vadd.f32 %v893, 1.0
        %v926 = vadd.f32 %v894, 1.0
        %v927 = vadd.f32 %v895, 1.0
        %v928 = vadd.f32 %v896, 1.0
        %v929 = vadd.f32 %v897, 1.0
        %v930 = vadd.f32 %v898, 1.0
        %v931 = vadd.f32 %v899, 1.0
        %v932 = vadd.f32 %v900, 1.0
        %v933 = vadd.f32 %v901, 1.0
        %v934 = vadd.f32 %v902, 1.0
        %v935 = vadd.f32 %v903, 1.0
        %v936 = vadd.f32 %v904, 1.0
        %v937 = vadd.f32 %v905, 1.0
        %v938 = vadd.f32 %v906, 1.0
        %v939 = vadd.f32 %v907, 1.0
        %v940 = vadd.f32 %v908, 1.0
        %v941 = vadd.f32 %v909, 1.0
        %v942 = vadd.f32 %v910, 1.0
        %v943 = vadd.f32 %v911, 1.0
        %v944 = vadd.f32 %v912, 1.0
        %v945 = vadd.f32 %v913, 1.0
        %v946 = vadd.f32 %v914, 1.0
        %v947 = vrsqrt.pop %v915
        %v948 = vrsqrt.pop %v916
        %v949 = vrsqrt.pop %v917
        %v950 = vrsqrt.pop %v918
        %v951 = vrsqrt.pop %v919
        %v952 = vrsqrt.pop %v920
        %v953 = vrsqrt.pop %v921
        %v954 = vrsqrt.pop %v922
        %v955 = vrsqrt.pop %v923
        %v956 = vrsqrt.pop %v924
        %v957 = vrsqrt.pop %v925
        %v958 = vrsqrt.pop %v926
        %v959 = vrsqrt.pop %v927
        %v960 = vrsqrt.pop %v928
        %v961 = vrsqrt.pop %v929
        %v962 = vrsqrt.pop %v930
        %v963 = vrsqrt.pop %v931
        %v964 = vrsqrt.pop %v932
        %v965 = vrsqrt.pop %v933
        %v966 = vrsqrt.pop %v934
        %v967 = vrsqrt.pop %v935
        %v968 = vrsqrt.pop %v936
        %v969 = vrsqrt.pop %v937
        %v970 = vrsqrt.pop %v938
        %v971 = vrsqrt.pop %v939
        %v972 = vrsqrt.pop %v940
        %v973 = vrsqrt.pop %v941
        %v974 = vrsqrt.pop %v942
        %v975 = vrsqrt.pop %v943
        %v976 = vrsqrt.pop %v944
        %v977 = vrsqrt.pop %v945
        %v978 = vrsqrt.pop %v946
        %v979 = vmul.f32 %v496, %v947
        %v980 = vmul.f32 %v497, %v948
        %v981 = vmul.f32 %v498, %v949
        %v982 = vmul.f32 %v499, %v950
        %v983 = vmul.f32 %v500, %v951
        %v984 = vmul.f32 %v501, %v952
        %v985 = vmul.f32 %v502, %v953
        %v986 = vmul.f32 %v503, %v954
        %v987 = vmul.f32 %v504, %v955
        %v988 = vmul.f32 %v505, %v956
        %v989 = vmul.f32 %v506, %v957
        %v990 = vmul.f32 %v507, %v958
        %v991 = vmul.f32 %v508, %v959
        %v992 = vmul.f32 %v509, %v960
        %v993 = vmul.f32 %v510, %v961
        %v994 = vmul.f32 %v511, %v962
        %v995 = vmul.f32 %v512, %v963
        %v996 = vmul.f32 %v513, %v964
        %v997 = vmul.f32 %v514, %v965
        %v998 = vmul.f32 %v515, %v966
        %v999 = vmul.f32 %v516, %v967
        %v1000 = vmul.f32 %v517, %v968
        %v1001 = vmul.f32 %v518, %v969
        %v1002 = vmul.f32 %v519, %v970
        %v1003 = vmul.f32 %v520, %v971
        %v1004 = vmul.f32 %v521, %v972
        %v1005 = vmul.f32 %v522, %v973
        %v1006 = vmul.f32 %v523, %v974
        %v1007 = vmul.f32 %v524, %v975
        %v1008 = vmul.f32 %v525, %v976
        %v1009 = vmul.f32 %v526, %v977
        %v1010 = vmul.f32 %v527, %v978
        %1011 = vst.msk [vmem:[%s225] sm:$0xff] %vm561, %v979
        %1012 = vst.msk [vmem:[%s225 + $0x8] sm:$0xff] %vm561, %v980
        %1013 = vst.msk [vmem:[%s225 + $0x10] sm:$0xff] %vm561, %v981
        %1014 = vst.msk [vmem:[%s225 + $0x18] sm:$0xff] %vm561, %v982
        %1015 = vst.msk [vmem:[%s225 + $0x20] sm:$0xff] %vm561, %v983
        %1016 = vst.msk [vmem:[%s225 + $0x28] sm:$0xff] %vm561, %v984
        %1017 = vst.msk [vmem:[%s225 + $0x30] sm:$0xff] %vm561, %v985
        %1018 = vst.msk [vmem:[%s225 + $0x38] sm:$0xff] %vm561, %v986
        %1019 = vst.msk [vmem:[%s225 + $0x40] sm:$0xff] %vm561, %v987
        %1020 = vst.msk [vmem:[%s225 + $0x48] sm:$0xff] %vm561, %v988
        %1021 = vst.msk [vmem:[%s225 + $0x50] sm:$0xff] %vm561, %v989
        %1022 = vst.msk [vmem:[%s225 + $0x58] sm:$0xff] %vm561, %v990
        %1023 = vst.msk [vmem:[%s225 + $0x60] sm:$0xff] %vm561, %v991
        %1024 = vst.msk [vmem:[%s225 + $0x68] sm:$0xff] %vm561, %v992
        %1025 = vst.msk [vmem:[%s225 + $0x70] sm:$0xff] %vm561, %v993
        %1026 = vst.msk [vmem:[%s225 + $0x78] sm:$0xff] %vm561, %v994
        %1027 = vst.msk [vmem:[%s225 + $0x80] sm:$0xff] %vm561, %v995
        %1028 = vst.msk [vmem:[%s225 + $0x88] sm:$0xff] %vm561, %v996
        %1029 = vst.msk [vmem:[%s225 + $0x90] sm:$0xff] %vm561, %v997
        %1030 = vst.msk [vmem:[%s225 + $0x98] sm:$0xff] %vm561, %v998
        %1031 = vst.msk [vmem:[%s225 + $0xa0] sm:$0xff] %vm561, %v999
        %1032 = vst.msk [vmem:[%s225 + $0xa8] sm:$0xff] %vm561, %v1000
        %1033 = vst.msk [vmem:[%s225 + $0xb0] sm:$0xff] %vm561, %v1001
        %1034 = vst.msk [vmem:[%s225 + $0xb8] sm:$0xff] %vm561, %v1002
        %1035 = vst.msk [vmem:[%s225 + $0xc0] sm:$0xff] %vm561, %v1003
        %1036 = vst.msk [vmem:[%s225 + $0xc8] sm:$0xff] %vm561, %v1004
        %1037 = vst.msk [vmem:[%s225 + $0xd0] sm:$0xff] %vm561, %v1005
        %1038 = vst.msk [vmem:[%s225 + $0xd8] sm:$0xff] %vm561, %v1006
        %1039 = vst.msk [vmem:[%s225 + $0xe0] sm:$0xff] %vm561, %v1007
        %1040 = vst.msk [vmem:[%s225 + $0xe8] sm:$0xff] %vm561, %v1008
        %1041 = vst.msk [vmem:[%s225 + $0xf0] sm:$0xff] %vm561, %v1009
        %1042 = vst.msk [vmem:[%s225 + $0xf8] sm:$0xff] %vm561, %v1010
        %s1043 = smul.u32 32, %s17
        %p1044 = scmp.lt.s32.totalorder %s1043, 63
        %s1045 = scalar_select %p1044, %s1043, 63
        %s1046 = smul.addr %s1045, 8
        %s1047 = scalar_lea.vmem %s4, %s1046
        // Predicated region
        $region45: #{ff_hybrid_vae_forward.9} parent=35 // pred_check
          %p1048 = pneg %p124
        $region46: #{ff_hybrid_vae_forward.9} parent=35 // pred_check_branch
          %1050 = sbr.rel (%p1048) target = $region48
        $region47: #{ff_hybrid_vae_forward.9} parent=35 // pred_region
          %s1051 = smul.u32 32, %s17
        $region48: #{ff_hybrid_vae_forward.9} parent=35 // pred_fallthru
          _
      $region36: #{ff_hybrid_vae_forward.9} parent=5 // pred_fallthru
        _
      %p1052 = scmp.le.s32.totalorder 2, %s12
      // Predicated region
      $region49: #{ff_hybrid_vae_forward.9} parent=5 // pred_check
        %p1053 = pneg %p1052
      $region50: #{ff_hybrid_vae_forward.9} parent=5 // pred_check_branch
        %1055 = sbr.rel (%p1053) target = $region52
      $region51: #{ff_hybrid_vae_forward.9} parent=5 // pred_region
        %s1056 = ssub.s32 %s12, 2
        // Predicated region
        $region53: #{ff_hybrid_vae_forward.9} parent=51 // pred_check
          %p1057 = pneg %p130
        $region54: #{ff_hybrid_vae_forward.9} parent=51 // pred_check_branch
          %1059 = sbr.rel (%p1057) target = $region56
        $region55: #{ff_hybrid_vae_forward.9} parent=51 // pred_region
          %s1060 = smul.u32 32, %s18
          %p1061 = scmp.lt.s32.totalorder %s1060, 63
          %s1062 = scalar_select %p1061, %s1060, 63
          %s1063 = smul.addr %s1062, 8
          %s1064 = scalar_lea.vmem %s4, %s1063
        $region56: #{ff_hybrid_vae_forward.9} parent=51 // pred_fallthru
          _
      $region52: #{ff_hybrid_vae_forward.9} parent=5 // pred_fallthru
        _
    $region6: #{ff_hybrid_vae_forward.9} parent=1 // loop_footer
      %s16 = sadd.s32 1, %s12
    $region7: #{ff_hybrid_vae_forward.9} parent=1 // loop_footer_branch
      %11 = sbr.rel target = $region3
    $region8: #{ff_hybrid_vae_forward.9} parent=1 // loop_exit
      _
    %1065 = vsyncpa [#allocation3], 1
    %s1066 = scalar_lea.sflag [#allocation3], 1
    %1067 = vsyncpa %s1066, 1
    %1068 = vsyncpa [#allocation5], 1

// kernel: ff_hybrid_vae_forward.10
$region0: #{ff_hybrid_vae_forward.10}
  #allocation0 [shape = 'u32[]', space=smem, size = 0x4, offset = 0x4, fixed_abs, tag = 'smem constant byte address 0x4 - core index']
  #allocation1 [shape = 'u32[144,128]{1,0:T(1,128)}', space=vmem, size = 0x12000, scoped, tag = 'internal scratch']
  %s0 = inlined_call_operand.vmem [shape: f32[128,128], index: 0, kind: input, shape index: {}]
  %s1 = inlined_call_operand.vmem [shape: f32[128,8], index: 1, kind: input, shape index: {}]
  %s2 = inlined_call_operand.vmem [shape: f32[1,8], index: 2, kind: input, shape index: {}]
  %s3 = inlined_call_operand.vmem [shape: f32[8,8], index: 3, kind: input, shape index: {}]
  %s4 = inlined_call_operand.vmem [shape: f32[128,8], index: 4, kind: output, shape index: {}]
  %s5 = sld [smem:[#allocation0]]
  $region26: #{ff_hybrid_vae_forward.10} parent=0
    _
  %s7 = ssub.s32 1, %s5
  %s8 = scalar_select 0, %s7, %s5
  // Predicated region
  $region2: #{ff_hybrid_vae_forward.10} parent=0 // pred_check
    _
  $region3: #{ff_hybrid_vae_forward.10} parent=0 // pred_check_branch
    %10 = sbr.rel (0) target = $region5
  $region4: #{ff_hybrid_vae_forward.10} parent=0 // pred_region
    _
  $region5: #{ff_hybrid_vae_forward.10} parent=0 // pred_fallthru
    _
  // Predicated region
  $region6: #{ff_hybrid_vae_forward.10} parent=0 // pred_check
    _
  $region7: #{ff_hybrid_vae_forward.10} parent=0 // pred_check_branch
    %12 = sbr.rel (0) target = $region9
  $region8: #{ff_hybrid_vae_forward.10} parent=0 // pred_region
    _
  $region9: #{ff_hybrid_vae_forward.10} parent=0 // pred_fallthru
    _
  // Predicated region
  $region10: #{ff_hybrid_vae_forward.10} parent=0 // pred_check
    _
  $region11: #{ff_hybrid_vae_forward.10} parent=0 // pred_check_branch
    %14 = sbr.rel (0) target = $region13
  $region12: #{ff_hybrid_vae_forward.10} parent=0 // pred_region
    _
  $region13: #{ff_hybrid_vae_forward.10} parent=0 // pred_fallthru
    _
  // Predicated region
  $region14: #{ff_hybrid_vae_forward.10} parent=0 // pred_check
    _
  $region15: #{ff_hybrid_vae_forward.10} parent=0 // pred_check_branch
    %16 = sbr.rel (0) target = $region17
  $region16: #{ff_hybrid_vae_forward.10} parent=0 // pred_region
    _
  $region17: #{ff_hybrid_vae_forward.10} parent=0 // pred_fallthru
    _
  %v18 = vld [vmem:[%s0] sm:$0xff]
  %v19 = vld [vmem:[%s0 + $0x8] sm:$0xff]
  %v20 = vld [vmem:[%s0 + $0x10] sm:$0xff]
  %v21 = vld [vmem:[%s0 + $0x18] sm:$0xff]
  %v22 = vld [vmem:[%s0 + $0x20] sm:$0xff]
  %v23 = vld [vmem:[%s0 + $0x28] sm:$0xff]
  %v24 = vld [vmem:[%s0 + $0x30] sm:$0xff]
  %v25 = vld [vmem:[%s0 + $0x38] sm:$0xff]
  %v26 = vld [vmem:[%s0 + $0x40] sm:$0xff]
  %v27 = vld [vmem:[%s0 + $0x48] sm:$0xff]
  %v28 = vld [vmem:[%s0 + $0x50] sm:$0xff]
  %v29 = vld [vmem:[%s0 + $0x58] sm:$0xff]
  %v30 = vld [vmem:[%s0 + $0x60] sm:$0xff]
  %v31 = vld [vmem:[%s0 + $0x68] sm:$0xff]
  %v32 = vld [vmem:[%s0 + $0x70] sm:$0xff]
  %v33 = vld [vmem:[%s0 + $0x78] sm:$0xff]
  %v34 = vpack.c.bf16 %v19, %v18
  %v35 = vpack.c.bf16 %v21, %v20
  %v36 = vpack.c.bf16 %v23, %v22
  %v37 = vpack.c.bf16 %v25, %v24
  %v38 = vpack.c.bf16 %v27, %v26
  %v39 = vpack.c.bf16 %v29, %v28
  %v40 = vpack.c.bf16 %v31, %v30
  %v41 = vpack.c.bf16 %v33, %v32
  %v42 = vld [vmem:[%s1] sm:$0xff]
  %v43 = vld [vmem:[%s1 + $0x8] sm:$0xff]
  %v44 = vld [vmem:[%s1 + $0x10] sm:$0xff]
  %v45 = vld [vmem:[%s1 + $0x18] sm:$0xff]
  %v46 = vld [vmem:[%s1 + $0x20] sm:$0xff]
  %v47 = vld [vmem:[%s1 + $0x28] sm:$0xff]
  %v48 = vld [vmem:[%s1 + $0x30] sm:$0xff]
  %v49 = vld [vmem:[%s1 + $0x38] sm:$0xff]
  %v50 = vld [vmem:[%s1 + $0x40] sm:$0xff]
  %v51 = vld [vmem:[%s1 + $0x48] sm:$0xff]
  %v52 = vld [vmem:[%s1 + $0x50] sm:$0xff]
  %v53 = vld [vmem:[%s1 + $0x58] sm:$0xff]
  %v54 = vld [vmem:[%s1 + $0x60] sm:$0xff]
  %v55 = vld [vmem:[%s1 + $0x68] sm:$0xff]
  %v56 = vld [vmem:[%s1 + $0x70] sm:$0xff]
  %v57 = vld [vmem:[%s1 + $0x78] sm:$0xff]
  %v58 = vpack.c.bf16 %v43, %v42
  %v59 = vpack.c.bf16 %v45, %v44
  %v60 = vpack.c.bf16 %v47, %v46
  %v61 = vpack.c.bf16 %v49, %v48
  %v62 = vpack.c.bf16 %v51, %v50
  %v63 = vpack.c.bf16 %v53, %v52
  %v64 = vpack.c.bf16 %v55, %v54
  %v65 = vpack.c.bf16 %v57, %v56
  %v66 = vld [vmem:[%s2] sm:$0x1]
  %v68 = vlaneseq
  %v69 = vshrl.u32 %v68, 7
  %v70 = vsub.s32 0, %v69
  %v71 = vrot.slane %v66, %v70
  %73 = vmatprep.subr.bf16.mxu0 0
  %74 = vmatpush1.bf16.msra.mxu0 %v65
  %75 = vmatprep.subr.bf16.mxu0 0
  %76 = vmatpush1.bf16.msra.mxu0 %v64
  %77 = vmatprep.subr.bf16.mxu0 0
  %78 = vmatpush1.bf16.msra.mxu0 %v63
  %79 = vmatprep.subr.bf16.mxu0 0
  %80 = vmatpush1.bf16.msra.mxu0 %v62
  %81 = vmatprep.subr.bf16.mxu0 0
  %82 = vmatpush1.bf16.msra.mxu0 %v61
  %83 = vmatprep.subr.bf16.mxu0 0
  %84 = vmatpush1.bf16.msra.mxu0 %v60
  %85 = vmatprep.subr.bf16.mxu0 0
  %86 = vmatpush1.bf16.msra.mxu0 %v59
  %87 = vmatprep.subr.bf16.mxu0 0
  %88 = vmatpush1.bf16.msra.mxu0 %v58
  %89 = vmatprep.subr.bf16.mxu0 0
  %90 = vmatpush2.bf16.msra.mxu0 0
  %91 = vmatprep.subr.bf16.mxu0 0
  %92 = vmatpush2.bf16.msra.mxu0 0
  %93 = vmatprep.subr.bf16.mxu0 0
  %94 = vmatpush2.bf16.msra.mxu0 0
  %95 = vmatprep.subr.bf16.mxu0 0
  %96 = vmatpush2.bf16.msra.mxu0 0
  %97 = vmatprep.subr.bf16.mxu0 0
  %98 = vmatpush2.bf16.msra.mxu0 0
  %99 = vmatprep.subr.bf16.mxu0 0
  %100 = vmatpush2.bf16.msra.mxu0 0
  %101 = vmatprep.subr.bf16.mxu0 0
  %102 = vmatpush2.bf16.msra.mxu0 0
  %103 = vmatprep.subr.bf16.mxu0 0
  %104 = vmatpush2.bf16.msra.mxu0 0
  %105 = vmatprep.mubr.bf16.mxu0 0
  %106 = vmatmul.mubr.bf16.gmra.mxu0 %v34
  %v107 = vpop.f32.mrf.mxu0
  %v108 = vadd.f32 %v71, %v107
  %v109 = vpop.f32.mrf.mxu0
  %v110 = vpop.f32.mrf.mxu0
  %v111 = vadd.f32 %v71, %v110
  %v112 = vpop.f32.mrf.mxu0
  %113 = vmatprep.mubr.bf16.mxu0 0
  %114 = vmatmul.mubr.bf16.gmra.mxu0 %v35
  %v115 = vpop.f32.mrf.mxu0
  %v116 = vadd.f32 %v71, %v115
  %v117 = vpop.f32.mrf.mxu0
  %v118 = vpop.f32.mrf.mxu0
  %v119 = vadd.f32 %v71, %v118
  %v120 = vpop.f32.mrf.mxu0
  %121 = vmatprep.mubr.bf16.mxu0 0
  %122 = vmatmul.mubr.bf16.gmra.mxu0 %v36
  %v123 = vpop.f32.mrf.mxu0
  %v124 = vadd.f32 %v71, %v123
  %v125 = vpop.f32.mrf.mxu0
  %v126 = vpop.f32.mrf.mxu0
  %v127 = vadd.f32 %v71, %v126
  %v128 = vpop.f32.mrf.mxu0
  %129 = vmatprep.mubr.bf16.mxu0 0
  %130 = vmatmul.mubr.bf16.gmra.mxu0 %v37
  %v131 = vpop.f32.mrf.mxu0
  %v132 = vadd.f32 %v71, %v131
  %v133 = vpop.f32.mrf.mxu0
  %v134 = vpop.f32.mrf.mxu0
  %v135 = vadd.f32 %v71, %v134
  %v136 = vpop.f32.mrf.mxu0
  %137 = vmatprep.mubr.bf16.mxu0 0
  %138 = vmatmul.mubr.bf16.gmra.mxu0 %v38
  %v139 = vpop.f32.mrf.mxu0
  %v140 = vadd.f32 %v71, %v139
  %v141 = vpop.f32.mrf.mxu0
  %v142 = vpop.f32.mrf.mxu0
  %v143 = vadd.f32 %v71, %v142
  %v144 = vpop.f32.mrf.mxu0
  %145 = vmatprep.mubr.bf16.mxu0 0
  %146 = vmatmul.mubr.bf16.gmra.mxu0 %v39
  %v147 = vpop.f32.mrf.mxu0
  %v148 = vadd.f32 %v71, %v147
  %v149 = vpop.f32.mrf.mxu0
  %v150 = vpop.f32.mrf.mxu0
  %v151 = vadd.f32 %v71, %v150
  %v152 = vpop.f32.mrf.mxu0
  %153 = vmatprep.mubr.bf16.mxu0 0
  %154 = vmatmul.mubr.bf16.gmra.mxu0 %v40
  %v155 = vpop.f32.mrf.mxu0
  %v156 = vadd.f32 %v71, %v155
  %v157 = vpop.f32.mrf.mxu0
  %v158 = vpop.f32.mrf.mxu0
  %v159 = vadd.f32 %v71, %v158
  %v160 = vpop.f32.mrf.mxu0
  %161 = vmatprep.mubr.bf16.mxu0 0
  %162 = vmatmul.mubr.bf16.gmra.mxu0 %v41
  %v163 = vpop.f32.mrf.mxu0
  %v164 = vadd.f32 %v71, %v163
  %v165 = vpop.f32.mrf.mxu0
  %v166 = vpop.f32.mrf.mxu0
  %v167 = vadd.f32 %v71, %v166
  %v168 = vpop.f32.mrf.mxu0
  %169 = vdwg.mxu0
  %v170 = vmax.f32 %v108, 0.0
  %v171 = vmax.f32 %v111, 0.0
  %v172 = vmax.f32 %v116, 0.0
  %v173 = vmax.f32 %v119, 0.0
  %v174 = vmax.f32 %v124, 0.0
  %v175 = vmax.f32 %v127, 0.0
  %v176 = vmax.f32 %v132, 0.0
  %v177 = vmax.f32 %v135, 0.0
  %v178 = vmax.f32 %v140, 0.0
  %v179 = vmax.f32 %v143, 0.0
  %v180 = vmax.f32 %v148, 0.0
  %v181 = vmax.f32 %v151, 0.0
  %v182 = vmax.f32 %v156, 0.0
  %v183 = vmax.f32 %v159, 0.0
  %v184 = vmax.f32 %v164, 0.0
  %v185 = vmax.f32 %v167, 0.0
  %v186 = vmul.f32 %v170, %v170
  %v187 = vmul.f32 %v171, %v171
  %v188 = vmul.f32 %v172, %v172
  %v189 = vmul.f32 %v173, %v173
  %v190 = vmul.f32 %v174, %v174
  %v191 = vmul.f32 %v175, %v175
  %v192 = vmul.f32 %v176, %v176
  %v193 = vmul.f32 %v177, %v177
  %v194 = vmul.f32 %v178, %v178
  %v195 = vmul.f32 %v179, %v179
  %v196 = vmul.f32 %v180, %v180
  %v197 = vmul.f32 %v181, %v181
  %v198 = vmul.f32 %v182, %v182
  %v199 = vmul.f32 %v183, %v183
  %v200 = vmul.f32 %v184, %v184
  %v201 = vmul.f32 %v185, %v185
  %v202 = vld [vmem:[%s3] sm:$0xff]
  %vm203 = vcmask 64512
  %v205 = vsel %vm203, %v186, 0
  %v208 = vsel %vm203, %v187, 0
  %v211 = vsel %vm203, %v188, 0
  %v214 = vsel %vm203, %v189, 0
  %v217 = vsel %vm203, %v190, 0
  %v220 = vsel %vm203, %v191, 0
  %v223 = vsel %vm203, %v192, 0
  %v226 = vsel %vm203, %v193, 0
  %v229 = vsel %vm203, %v194, 0
  %v232 = vsel %vm203, %v195, 0
  %v235 = vsel %vm203, %v196, 0
  %v238 = vsel %vm203, %v197, 0
  %v241 = vsel %vm203, %v198, 0
  %v244 = vsel %vm203, %v199, 0
  %v247 = vsel %vm203, %v200, 0
  %v250 = vsel %vm203, %v201, 0
  %252 = vmatprep.subr.mxu0 0.0
  %253 = vmatpush1.msra.mxu0 0.0
  %254 = vmatprep.subr.mxu0 0.0
  %255 = vmatpush1.msra.mxu0 0.0
  %256 = vmatprep.subr.mxu0 0.0
  %257 = vmatpush1.msra.mxu0 0.0
  %258 = vmatprep.subr.mxu0 0.0
  %259 = vmatpush1.msra.mxu0 0.0
  %260 = vmatprep.subr.mxu0 0.0
  %261 = vmatpush1.msra.mxu0 0.0
  %262 = vmatprep.subr.mxu0 0.0
  %263 = vmatpush1.msra.mxu0 0.0
  %264 = vmatprep.subr.mxu0 0.0
  %265 = vmatpush1.msra.mxu0 0.0
  %266 = vmatprep.subr.mxu0 0.0
  %267 = vmatpush1.msra.mxu0 0.0
  %268 = vmatprep.subr.mxu0 0.0
  %269 = vmatpush1.msra.mxu0 0.0
  %270 = vmatprep.subr.mxu0 0.0
  %271 = vmatpush1.msra.mxu0 0.0
  %272 = vmatprep.subr.mxu0 0.0
  %273 = vmatpush1.msra.mxu0 0.0
  %274 = vmatprep.subr.mxu0 0.0
  %275 = vmatpush1.msra.mxu0 0.0
  %276 = vmatprep.subr.mxu0 0.0
  %277 = vmatpush1.msra.mxu0 0.0
  %278 = vmatprep.subr.mxu0 0.0
  %279 = vmatpush1.msra.mxu0 0.0
  %280 = vmatprep.subr.mxu0 0.0
  %281 = vmatpush1.msra.mxu0 0.0
  %282 = vmatprep.subr.mxu0 0.0
  %283 = vmatpush1.msra.mxu0 %v202
  %284 = vmatprep.subr.mxu0 0.0
  %285 = vmatpush2.msra.mxu0 0.0
  %286 = vmatprep.subr.mxu0 0.0
  %287 = vmatpush2.msra.mxu0 0.0
  %288 = vmatprep.subr.mxu0 0.0
  %289 = vmatpush2.msra.mxu0 0.0
  %290 = vmatprep.subr.mxu0 0.0
  %291 = vmatpush2.msra.mxu0 0.0
  %292 = vmatprep.subr.mxu0 0.0
  %293 = vmatpush2.msra.mxu0 0.0
  %294 = vmatprep.subr.mxu0 0.0
  %295 = vmatpush2.msra.mxu0 0.0
  %296 = vmatprep.subr.mxu0 0.0
  %297 = vmatpush2.msra.mxu0 0.0
  %298 = vmatprep.subr.mxu0 0.0
  %299 = vmatpush2.msra.mxu0 0.0
  %300 = vmatprep.subr.mxu0 0.0
  %301 = vmatpush2.msra.mxu0 0.0
  %302 = vmatprep.subr.mxu0 0.0
  %303 = vmatpush2.msra.mxu0 0.0
  %304 = vmatprep.subr.mxu0 0.0
  %305 = vmatpush2.msra.mxu0 0.0
  %306 = vmatprep.subr.mxu0 0.0
  %307 = vmatpush2.msra.mxu0 0.0
  %308 = vmatprep.subr.mxu0 0.0
  %309 = vmatpush2.msra.mxu0 0.0
  %310 = vmatprep.subr.mxu0 0.0
  %311 = vmatpush2.msra.mxu0 0.0
  %312 = vmatprep.subr.mxu0 0.0
  %313 = vmatpush2.msra.mxu0 0.0
  %314 = vmatprep.subr.mxu0 0.0
  %315 = vmatpush2.msra.mxu0 0.0
  %316 = vmatprep.mubr.f32.mxu0 0.0
  %317 = vmatmul.mubr.f32.gmra.mxu0 %v205
  %v318 = vpop.f32.mrf.mxu0
  %v319 = vadd.f32 0.0, %v318
  %v320 = vpop.f32.mrf.mxu0
  %321 = vmatprep.mubr.f32.mxu0 0.0
  %322 = vmatmul.mubr.f32.gmra.mxu0 %v208
  %v323 = vpop.f32.mrf.mxu0
  %v324 = vadd.f32 0.0, %v323
  %v325 = vpop.f32.mrf.mxu0
  %326 = vmatprep.mubr.f32.mxu0 0.0
  %327 = vmatmul.mubr.f32.gmra.mxu0 %v211
  %v328 = vpop.f32.mrf.mxu0
  %v329 = vadd.f32 0.0, %v328
  %v330 = vpop.f32.mrf.mxu0
  %331 = vmatprep.mubr.f32.mxu0 0.0
  %332 = vmatmul.mubr.f32.gmra.mxu0 %v214
  %v333 = vpop.f32.mrf.mxu0
  %v334 = vadd.f32 0.0, %v333
  %v335 = vpop.f32.mrf.mxu0
  %336 = vmatprep.mubr.f32.mxu0 0.0
  %337 = vmatmul.mubr.f32.gmra.mxu0 %v217
  %v338 = vpop.f32.mrf.mxu0
  %v339 = vadd.f32 0.0, %v338
  %v340 = vpop.f32.mrf.mxu0
  %341 = vmatprep.mubr.f32.mxu0 0.0
  %342 = vmatmul.mubr.f32.gmra.mxu0 %v220
  %v343 = vpop.f32.mrf.mxu0
  %v344 = vadd.f32 0.0, %v343
  %v345 = vpop.f32.mrf.mxu0
  %346 = vmatprep.mubr.f32.mxu0 0.0
  %347 = vmatmul.mubr.f32.gmra.mxu0 %v223
  %v348 = vpop.f32.mrf.mxu0
  %v349 = vadd.f32 0.0, %v348
  %v350 = vpop.f32.mrf.mxu0
  %351 = vmatprep.mubr.f32.mxu0 0.0
  %352 = vmatmul.mubr.f32.gmra.mxu0 %v226
  %v353 = vpop.f32.mrf.mxu0
  %v354 = vadd.f32 0.0, %v353
  %v355 = vpop.f32.mrf.mxu0
  %356 = vmatprep.mubr.f32.mxu0 0.0
  %357 = vmatmul.mubr.f32.gmra.mxu0 %v229
  %v358 = vpop.f32.mrf.mxu0
  %v359 = vadd.f32 0.0, %v358
  %v360 = vpop.f32.mrf.mxu0
  %361 = vmatprep.mubr.f32.mxu0 0.0
  %362 = vmatmul.mubr.f32.gmra.mxu0 %v232
  %v363 = vpop.f32.mrf.mxu0
  %v364 = vadd.f32 0.0, %v363
  %v365 = vpop.f32.mrf.mxu0
  %366 = vmatprep.mubr.f32.mxu0 0.0
  %367 = vmatmul.mubr.f32.gmra.mxu0 %v235
  %v368 = vpop.f32.mrf.mxu0
  %v369 = vadd.f32 0.0, %v368
  %v370 = vpop.f32.mrf.mxu0
  %371 = vmatprep.mubr.f32.mxu0 0.0
  %372 = vmatmul.mubr.f32.gmra.mxu0 %v238
  %v373 = vpop.f32.mrf.mxu0
  %v374 = vadd.f32 0.0, %v373
  %v375 = vpop.f32.mrf.mxu0
  %376 = vmatprep.mubr.f32.mxu0 0.0
  %377 = vmatmul.mubr.f32.gmra.mxu0 %v241
  %v378 = vpop.f32.mrf.mxu0
  %v379 = vadd.f32 0.0, %v378
  %v380 = vpop.f32.mrf.mxu0
  %381 = vmatprep.mubr.f32.mxu0 0.0
  %382 = vmatmul.mubr.f32.gmra.mxu0 %v244
  %v383 = vpop.f32.mrf.mxu0
  %v384 = vadd.f32 0.0, %v383
  %v385 = vpop.f32.mrf.mxu0
  %386 = vmatprep.mubr.f32.mxu0 0.0
  %387 = vmatmul.mubr.f32.gmra.mxu0 %v247
  %v388 = vpop.f32.mrf.mxu0
  %v389 = vadd.f32 0.0, %v388
  %v390 = vpop.f32.mrf.mxu0
  %391 = vmatprep.mubr.f32.mxu0 0.0
  %392 = vmatmul.mubr.f32.gmra.mxu0 %v250
  %v393 = vpop.f32.mrf.mxu0
  %v394 = vadd.f32 0.0, %v393
  %v395 = vpop.f32.mrf.mxu0
  %396 = vdwg.mxu0
  %v397 = vmul.f32 %v319, 0.0002
  %v398 = vmul.f32 %v324, 0.0002
  %v399 = vmul.f32 %v329, 0.0002
  %v400 = vmul.f32 %v334, 0.0002
  %v401 = vmul.f32 %v339, 0.0002
  %v402 = vmul.f32 %v344, 0.0002
  %v403 = vmul.f32 %v349, 0.0002
  %v404 = vmul.f32 %v354, 0.0002
  %v405 = vmul.f32 %v359, 0.0002
  %v406 = vmul.f32 %v364, 0.0002
  %v407 = vmul.f32 %v369, 0.0002
  %v408 = vmul.f32 %v374, 0.0002
  %v409 = vmul.f32 %v379, 0.0002
  %v410 = vmul.f32 %v384, 0.0002
  %v411 = vmul.f32 %v389, 0.0002
  %v412 = vmul.f32 %v394, 0.0002
  %v413 = vadd.f32 %v397, 1.0
  %v414 = vadd.f32 %v398, 1.0
  %v415 = vadd.f32 %v399, 1.0
  %v416 = vadd.f32 %v400, 1.0
  %v417 = vadd.f32 %v401, 1.0
  %v418 = vadd.f32 %v402, 1.0
  %v419 = vadd.f32 %v403, 1.0
  %v420 = vadd.f32 %v404, 1.0
  %v421 = vadd.f32 %v405, 1.0
  %v422 = vadd.f32 %v406, 1.0
  %v423 = vadd.f32 %v407, 1.0
  %v424 = vadd.f32 %v408, 1.0
  %v425 = vadd.f32 %v409, 1.0
  %v426 = vadd.f32 %v410, 1.0
  %v427 = vadd.f32 %v411, 1.0
  %v428 = vadd.f32 %v412, 1.0
  %v429 = vrsqrt.pop %v413
  %v430 = vrsqrt.pop %v414
  %v431 = vrsqrt.pop %v415
  %v432 = vrsqrt.pop %v416
  %v433 = vrsqrt.pop %v417
  %v434 = vrsqrt.pop %v418
  %v435 = vrsqrt.pop %v419
  %v436 = vrsqrt.pop %v420
  %v437 = vrsqrt.pop %v421
  %v438 = vrsqrt.pop %v422
  %v439 = vrsqrt.pop %v423
  %v440 = vrsqrt.pop %v424
  %v441 = vrsqrt.pop %v425
  %v442 = vrsqrt.pop %v426
  %v443 = vrsqrt.pop %v427
  %v444 = vrsqrt.pop %v428
  %v445 = vmul.f32 %v170, %v429
  %v446 = vmul.f32 %v171, %v430
  %v447 = vmul.f32 %v172, %v431
  %v448 = vmul.f32 %v173, %v432
  %v449 = vmul.f32 %v174, %v433
  %v450 = vmul.f32 %v175, %v434
  %v451 = vmul.f32 %v176, %v435
  %v452 = vmul.f32 %v177, %v436
  %v453 = vmul.f32 %v178, %v437
  %v454 = vmul.f32 %v179, %v438
  %v455 = vmul.f32 %v180, %v439
  %v456 = vmul.f32 %v181, %v440
  %v457 = vmul.f32 %v182, %v441
  %v458 = vmul.f32 %v183, %v442
  %v459 = vmul.f32 %v184, %v443
  %v460 = vmul.f32 %v185, %v444
  %461 = vst.msk [vmem:[%s4] sm:$0xff] %vm203, %v445
  %462 = vst.msk [vmem:[%s4 + $0x8] sm:$0xff] %vm203, %v446
  %463 = vst.msk [vmem:[%s4 + $0x10] sm:$0xff] %vm203, %v447
  %464 = vst.msk [vmem:[%s4 + $0x18] sm:$0xff] %vm203, %v448
  %465 = vst.msk [vmem:[%s4 + $0x20] sm:$0xff] %vm203, %v449
  %466 = vst.msk [vmem:[%s4 + $0x28] sm:$0xff] %vm203, %v450
  %467 = vst.msk [vmem:[%s4 + $0x30] sm:$0xff] %vm203, %v451
  %468 = vst.msk [vmem:[%s4 + $0x38] sm:$0xff] %vm203, %v452
  %469 = vst.msk [vmem:[%s4 + $0x40] sm:$0xff] %vm203, %v453
  %470 = vst.msk [vmem:[%s4 + $0x48] sm:$0xff] %vm203, %v454
  %471 = vst.msk [vmem:[%s4 + $0x50] sm:$0xff] %vm203, %v455
  %472 = vst.msk [vmem:[%s4 + $0x58] sm:$0xff] %vm203, %v456
  %473 = vst.msk [vmem:[%s4 + $0x60] sm:$0xff] %vm203, %v457
  %474 = vst.msk [vmem:[%s4 + $0x68] sm:$0xff] %vm203, %v458
  %475 = vst.msk [vmem:[%s4 + $0x70] sm:$0xff] %vm203, %v459
  %476 = vst.msk [vmem:[%s4 + $0x78] sm:$0xff] %vm203, %v460
  // Predicated region
  $region18: #{ff_hybrid_vae_forward.10} parent=0 // pred_check
    _
  $region19: #{ff_hybrid_vae_forward.10} parent=0 // pred_check_branch
    %478 = sbr.rel (0) target = $region21
  $region20: #{ff_hybrid_vae_forward.10} parent=0 // pred_region
    _
  $region21: #{ff_hybrid_vae_forward.10} parent=0 // pred_fallthru
    _
  // Predicated region
  $region22: #{ff_hybrid_vae_forward.10} parent=0 // pred_check
    _
  $region23: #{ff_hybrid_vae_forward.10} parent=0 // pred_check_branch
    %480 = sbr.rel (0) target = $region25
  $region24: #{ff_hybrid_vae_forward.10} parent=0 // pred_region
    _
  $region25: #{ff_hybrid_vae_forward.10} parent=0 // pred_fallthru
    _

// kernel: ff_hybrid_vae_forward.11
$region0: #{ff_hybrid_vae_forward.11}
  #allocation0 [shape = 'u32[]', space=smem, size = 0x4, offset = 0x4, fixed_abs, tag = 'smem constant byte address 0x4 - core index']
  #allocation1 [shape = 'u32[144,128]{1,0:T(1,128)}', space=vmem, size = 0x12000, scoped, tag = 'internal scratch']
  %s0 = inlined_call_operand.vmem [shape: f32[32,128], index: 0, kind: input, shape index: {}]
  %s1 = inlined_call_operand.vmem [shape: f32[128,8], index: 1, kind: input, shape index: {}]
  %s2 = inlined_call_operand.vmem [shape: f32[1,8], index: 2, kind: input, shape index: {}]
  %s3 = inlined_call_operand.vmem [shape: f32[8,8], index: 3, kind: input, shape index: {}]
  %s4 = inlined_call_operand.vmem [shape: f32[32,8], index: 4, kind: output, shape index: {}]
  %s5 = sld [smem:[#allocation0]]
  $region26: #{ff_hybrid_vae_forward.11} parent=0
    _
  %s7 = ssub.s32 1, %s5
  %s8 = scalar_select 0, %s7, %s5
  // Predicated region
  $region2: #{ff_hybrid_vae_forward.11} parent=0 // pred_check
    _
  $region3: #{ff_hybrid_vae_forward.11} parent=0 // pred_check_branch
    %10 = sbr.rel (0) target = $region5
  $region4: #{ff_hybrid_vae_forward.11} parent=0 // pred_region
    _
  $region5: #{ff_hybrid_vae_forward.11} parent=0 // pred_fallthru
    _
  // Predicated region
  $region6: #{ff_hybrid_vae_forward.11} parent=0 // pred_check
    _
  $region7: #{ff_hybrid_vae_forward.11} parent=0 // pred_check_branch
    %12 = sbr.rel (0) target = $region9
  $region8: #{ff_hybrid_vae_forward.11} parent=0 // pred_region
    _
  $region9: #{ff_hybrid_vae_forward.11} parent=0 // pred_fallthru
    _
  // Predicated region
  $region10: #{ff_hybrid_vae_forward.11} parent=0 // pred_check
    _
  $region11: #{ff_hybrid_vae_forward.11} parent=0 // pred_check_branch
    %14 = sbr.rel (0) target = $region13
  $region12: #{ff_hybrid_vae_forward.11} parent=0 // pred_region
    _
  $region13: #{ff_hybrid_vae_forward.11} parent=0 // pred_fallthru
    _
  // Predicated region
  $region14: #{ff_hybrid_vae_forward.11} parent=0 // pred_check
    _
  $region15: #{ff_hybrid_vae_forward.11} parent=0 // pred_check_branch
    %16 = sbr.rel (0) target = $region17
  $region16: #{ff_hybrid_vae_forward.11} parent=0 // pred_region
    _
  $region17: #{ff_hybrid_vae_forward.11} parent=0 // pred_fallthru
    _
  %v18 = vld [vmem:[%s0] sm:$0xff]
  %v19 = vld [vmem:[%s0 + $0x8] sm:$0xff]
  %v20 = vld [vmem:[%s0 + $0x10] sm:$0xff]
  %v21 = vld [vmem:[%s0 + $0x18] sm:$0xff]
  %v22 = vpack.c.bf16 %v19, %v18
  %v23 = vpack.c.bf16 %v21, %v20
  %v24 = vld [vmem:[%s1] sm:$0xff]
  %v25 = vld [vmem:[%s1 + $0x8] sm:$0xff]
  %v26 = vld [vmem:[%s1 + $0x10] sm:$0xff]
  %v27 = vld [vmem:[%s1 + $0x18] sm:$0xff]
  %v28 = vld [vmem:[%s1 + $0x20] sm:$0xff]
  %v29 = vld [vmem:[%s1 + $0x28] sm:$0xff]
  %v30 = vld [vmem:[%s1 + $0x30] sm:$0xff]
  %v31 = vld [vmem:[%s1 + $0x38] sm:$0xff]
  %v32 = vld [vmem:[%s1 + $0x40] sm:$0xff]
  %v33 = vld [vmem:[%s1 + $0x48] sm:$0xff]
  %v34 = vld [vmem:[%s1 + $0x50] sm:$0xff]
  %v35 = vld [vmem:[%s1 + $0x58] sm:$0xff]
  %v36 = vld [vmem:[%s1 + $0x60] sm:$0xff]
  %v37 = vld [vmem:[%s1 + $0x68] sm:$0xff]
  %v38 = vld [vmem:[%s1 + $0x70] sm:$0xff]
  %v39 = vld [vmem:[%s1 + $0x78] sm:$0xff]
  %v40 = vpack.c.bf16 %v25, %v24
  %v41 = vpack.c.bf16 %v27, %v26
  %v42 = vpack.c.bf16 %v29, %v28
  %v43 = vpack.c.bf16 %v31, %v30
  %v44 = vpack.c.bf16 %v33, %v32
  %v45 = vpack.c.bf16 %v35, %v34
  %v46 = vpack.c.bf16 %v37, %v36
  %v47 = vpack.c.bf16 %v39, %v38
  %v48 = vld [vmem:[%s2] sm:$0x1]
  %v50 = vlaneseq
  %v51 = vshrl.u32 %v50, 7
  %v52 = vsub.s32 0, %v51
  %v53 = vrot.slane %v48, %v52
  %55 = vmatprep.subr.bf16.mxu0 0
  %56 = vmatpush1.bf16.msra.mxu0 %v47
  %57 = vmatprep.subr.bf16.mxu0 0
  %58 = vmatpush1.bf16.msra.mxu0 %v46
  %59 = vmatprep.subr.bf16.mxu0 0
  %60 = vmatpush1.bf16.msra.mxu0 %v45
  %61 = vmatprep.subr.bf16.mxu0 0
  %62 = vmatpush1.bf16.msra.mxu0 %v44
  %63 = vmatprep.subr.bf16.mxu0 0
  %64 = vmatpush1.bf16.msra.mxu0 %v43
  %65 = vmatprep.subr.bf16.mxu0 0
  %66 = vmatpush1.bf16.msra.mxu0 %v42
  %67 = vmatprep.subr.bf16.mxu0 0
  %68 = vmatpush1.bf16.msra.mxu0 %v41
  %69 = vmatprep.subr.bf16.mxu0 0
  %70 = vmatpush1.bf16.msra.mxu0 %v40
  %71 = vmatprep.subr.bf16.mxu0 0
  %72 = vmatpush2.bf16.msra.mxu0 0
  %73 = vmatprep.subr.bf16.mxu0 0
  %74 = vmatpush2.bf16.msra.mxu0 0
  %75 = vmatprep.subr.bf16.mxu0 0
  %76 = vmatpush2.bf16.msra.mxu0 0
  %77 = vmatprep.subr.bf16.mxu0 0
  %78 = vmatpush2.bf16.msra.mxu0 0
  %79 = vmatprep.subr.bf16.mxu0 0
  %80 = vmatpush2.bf16.msra.mxu0 0
  %81 = vmatprep.subr.bf16.mxu0 0
  %82 = vmatpush2.bf16.msra.mxu0 0
  %83 = vmatprep.subr.bf16.mxu0 0
  %84 = vmatpush2.bf16.msra.mxu0 0
  %85 = vmatprep.subr.bf16.mxu0 0
  %86 = vmatpush2.bf16.msra.mxu0 0
  %87 = vmatprep.mubr.bf16.mxu0 0
  %88 = vmatmul.mubr.bf16.gmra.mxu0 %v22
  %v89 = vpop.f32.mrf.mxu0
  %v90 = vadd.f32 %v53, %v89
  %v91 = vpop.f32.mrf.mxu0
  %v92 = vpop.f32.mrf.mxu0
  %v93 = vadd.f32 %v53, %v92
  %v94 = vpop.f32.mrf.mxu0
  %95 = vmatprep.mubr.bf16.mxu0 0
  %96 = vmatmul.mubr.bf16.gmra.mxu0 %v23
  %v97 = vpop.f32.mrf.mxu0
  %v98 = vadd.f32 %v53, %v97
  %v99 = vpop.f32.mrf.mxu0
  %v100 = vpop.f32.mrf.mxu0
  %v101 = vadd.f32 %v53, %v100
  %v102 = vpop.f32.mrf.mxu0
  %103 = vdwg.mxu0
  %v104 = vmax.f32 %v90, 0.0
  %v105 = vmax.f32 %v93, 0.0
  %v106 = vmax.f32 %v98, 0.0
  %v107 = vmax.f32 %v101, 0.0
  %v108 = vmul.f32 %v104, %v104
  %v109 = vmul.f32 %v105, %v105
  %v110 = vmul.f32 %v106, %v106
  %v111 = vmul.f32 %v107, %v107
  %v112 = vld [vmem:[%s3] sm:$0xff]
  %vm113 = vcmask 64512
  %v115 = vsel %vm113, %v108, 0
  %v118 = vsel %vm113, %v109, 0
  %v121 = vsel %vm113, %v110, 0
  %v124 = vsel %vm113, %v111, 0
  %126 = vmatprep.subr.mxu0 0.0
  %127 = vmatpush1.msra.mxu0 0.0
  %128 = vmatprep.subr.mxu0 0.0
  %129 = vmatpush1.msra.mxu0 0.0
  %130 = vmatprep.subr.mxu0 0.0
  %131 = vmatpush1.msra.mxu0 0.0
  %132 = vmatprep.subr.mxu0 0.0
  %133 = vmatpush1.msra.mxu0 0.0
  %134 = vmatprep.subr.mxu0 0.0
  %135 = vmatpush1.msra.mxu0 0.0
  %136 = vmatprep.subr.mxu0 0.0
  %137 = vmatpush1.msra.mxu0 0.0
  %138 = vmatprep.subr.mxu0 0.0
  %139 = vmatpush1.msra.mxu0 0.0
  %140 = vmatprep.subr.mxu0 0.0
  %141 = vmatpush1.msra.mxu0 0.0
  %142 = vmatprep.subr.mxu0 0.0
  %143 = vmatpush1.msra.mxu0 0.0
  %144 = vmatprep.subr.mxu0 0.0
  %145 = vmatpush1.msra.mxu0 0.0
  %146 = vmatprep.subr.mxu0 0.0
  %147 = vmatpush1.msra.mxu0 0.0
  %148 = vmatprep.subr.mxu0 0.0
  %149 = vmatpush1.msra.mxu0 0.0
  %150 = vmatprep.subr.mxu0 0.0
  %151 = vmatpush1.msra.mxu0 0.0
  %152 = vmatprep.subr.mxu0 0.0
  %153 = vmatpush1.msra.mxu0 0.0
  %154 = vmatprep.subr.mxu0 0.0
  %155 = vmatpush1.msra.mxu0 0.0
  %156 = vmatprep.subr.mxu0 0.0
  %157 = vmatpush1.msra.mxu0 %v112
  %158 = vmatprep.subr.mxu0 0.0
  %159 = vmatpush2.msra.mxu0 0.0
  %160 = vmatprep.subr.mxu0 0.0
  %161 = vmatpush2.msra.mxu0 0.0
  %162 = vmatprep.subr.mxu0 0.0
  %163 = vmatpush2.msra.mxu0 0.0
  %164 = vmatprep.subr.mxu0 0.0
  %165 = vmatpush2.msra.mxu0 0.0
  %166 = vmatprep.subr.mxu0 0.0
  %167 = vmatpush2.msra.mxu0 0.0
  %168 = vmatprep.subr.mxu0 0.0
  %169 = vmatpush2.msra.mxu0 0.0
  %170 = vmatprep.subr.mxu0 0.0
  %171 = vmatpush2.msra.mxu0 0.0
  %172 = vmatprep.subr.mxu0 0.0
  %173 = vmatpush2.msra.mxu0 0.0
  %174 = vmatprep.subr.mxu0 0.0
  %175 = vmatpush2.msra.mxu0 0.0
  %176 = vmatprep.subr.mxu0 0.0
  %177 = vmatpush2.msra.mxu0 0.0
  %178 = vmatprep.subr.mxu0 0.0
  %179 = vmatpush2.msra.mxu0 0.0
  %180 = vmatprep.subr.mxu0 0.0
  %181 = vmatpush2.msra.mxu0 0.0
  %182 = vmatprep.subr.mxu0 0.0
  %183 = vmatpush2.msra.mxu0 0.0
  %184 = vmatprep.subr.mxu0 0.0
  %185 = vmatpush2.msra.mxu0 0.0
  %186 = vmatprep.subr.mxu0 0.0
  %187 = vmatpush2.msra.mxu0 0.0
  %188 = vmatprep.subr.mxu0 0.0
  %189 = vmatpush2.msra.mxu0 0.0
  %190 = vmatprep.mubr.f32.mxu0 0.0
  %191 = vmatmul.mubr.f32.gmra.mxu0 %v115
  %v192 = vpop.f32.mrf.mxu0
  %v193 = vadd.f32 0.0, %v192
  %v194 = vpop.f32.mrf.mxu0
  %195 = vmatprep.mubr.f32.mxu0 0.0
  %196 = vmatmul.mubr.f32.gmra.mxu0 %v118
  %v197 = vpop.f32.mrf.mxu0
  %v198 = vadd.f32 0.0, %v197
  %v199 = vpop.f32.mrf.mxu0
  %200 = vmatprep.mubr.f32.mxu0 0.0
  %201 = vmatmul.mubr.f32.gmra.mxu0 %v121
  %v202 = vpop.f32.mrf.mxu0
  %v203 = vadd.f32 0.0, %v202
  %v204 = vpop.f32.mrf.mxu0
  %205 = vmatprep.mubr.f32.mxu0 0.0
  %206 = vmatmul.mubr.f32.gmra.mxu0 %v124
  %v207 = vpop.f32.mrf.mxu0
  %v208 = vadd.f32 0.0, %v207
  %v209 = vpop.f32.mrf.mxu0
  %210 = vdwg.mxu0
  %v211 = vmul.f32 %v193, 0.0002
  %v212 = vmul.f32 %v198, 0.0002
  %v213 = vmul.f32 %v203, 0.0002
  %v214 = vmul.f32 %v208, 0.0002
  %v215 = vadd.f32 %v211, 1.0
  %v216 = vadd.f32 %v212, 1.0
  %v217 = vadd.f32 %v213, 1.0
  %v218 = vadd.f32 %v214, 1.0
  %v219 = vrsqrt.pop %v215
  %v220 = vrsqrt.pop %v216
  %v221 = vrsqrt.pop %v217
  %v222 = vrsqrt.pop %v218
  %v223 = vmul.f32 %v104, %v219
  %v224 = vmul.f32 %v105, %v220
  %v225 = vmul.f32 %v106, %v221
  %v226 = vmul.f32 %v107, %v222
  %227 = vst.msk [vmem:[%s4] sm:$0xff] %vm113, %v223
  %228 = vst.msk [vmem:[%s4 + $0x8] sm:$0xff] %vm113, %v224
  %229 = vst.msk [vmem:[%s4 + $0x10] sm:$0xff] %vm113, %v225
  %230 = vst.msk [vmem:[%s4 + $0x18] sm:$0xff] %vm113, %v226
  // Predicated region
  $region18: #{ff_hybrid_vae_forward.11} parent=0 // pred_check
    _
  $region19: #{ff_hybrid_vae_forward.11} parent=0 // pred_check_branch
    %232 = sbr.rel (0) target = $region21
  $region20: #{ff_hybrid_vae_forward.11} parent=0 // pred_region
    _
  $region21: #{ff_hybrid_vae_forward.11} parent=0 // pred_fallthru
    _
  // Predicated region
  $region22: #{ff_hybrid_vae_forward.11} parent=0 // pred_check
    _
  $region23: #{ff_hybrid_vae_forward.11} parent=0 // pred_check_branch
    %234 = sbr.rel (0) target = $region25
  $region24: #{ff_hybrid_vae_forward.11} parent=0 // pred_region
    _
  $region25: #{ff_hybrid_vae_forward.11} parent=0 // pred_fallthru
    _

// kernel: ff_hybrid_vae_forward.13
$region0: #{ff_hybrid_vae_forward.13}
  #allocation0 [shape = 'u32[]', space=smem, size = 0x4, offset = 0x4, fixed_abs, tag = 'smem constant byte address 0x4 - core index']
  #allocation1 [shape = 'u32[144,128]{1,0:T(1,128)}', space=vmem, size = 0x12000, scoped, tag = 'internal scratch']
  %s0 = inlined_call_operand.vmem [shape: f32[56,32], index: 0, kind: input, shape index: {}]
  %s1 = inlined_call_operand.vmem [shape: f32[32,32], index: 1, kind: input, shape index: {}]
  %s2 = inlined_call_operand.vmem [shape: f32[1,32], index: 2, kind: input, shape index: {}]
  %s3 = inlined_call_operand.vmem [shape: f32[32,32], index: 3, kind: input, shape index: {}]
  %s4 = inlined_call_operand.vmem [shape: f32[56,32], index: 4, kind: output, shape index: {}]
  %s5 = sld [smem:[#allocation0]]
  $region26: #{ff_hybrid_vae_forward.13} parent=0
    _
  %s7 = ssub.s32 1, %s5
  %s8 = scalar_select 0, %s7, %s5
  // Predicated region
  $region2: #{ff_hybrid_vae_forward.13} parent=0 // pred_check
    _
  $region3: #{ff_hybrid_vae_forward.13} parent=0 // pred_check_branch
    %10 = sbr.rel (0) target = $region5
  $region4: #{ff_hybrid_vae_forward.13} parent=0 // pred_region
    _
  $region5: #{ff_hybrid_vae_forward.13} parent=0 // pred_fallthru
    _
  // Predicated region
  $region6: #{ff_hybrid_vae_forward.13} parent=0 // pred_check
    _
  $region7: #{ff_hybrid_vae_forward.13} parent=0 // pred_check_branch
    %12 = sbr.rel (0) target = $region9
  $region8: #{ff_hybrid_vae_forward.13} parent=0 // pred_region
    _
  $region9: #{ff_hybrid_vae_forward.13} parent=0 // pred_fallthru
    _
  // Predicated region
  $region10: #{ff_hybrid_vae_forward.13} parent=0 // pred_check
    _
  $region11: #{ff_hybrid_vae_forward.13} parent=0 // pred_check_branch
    %14 = sbr.rel (0) target = $region13
  $region12: #{ff_hybrid_vae_forward.13} parent=0 // pred_region
    _
  $region13: #{ff_hybrid_vae_forward.13} parent=0 // pred_fallthru
    _
  // Predicated region
  $region14: #{ff_hybrid_vae_forward.13} parent=0 // pred_check
    _
  $region15: #{ff_hybrid_vae_forward.13} parent=0 // pred_check_branch
    %16 = sbr.rel (0) target = $region17
  $region16: #{ff_hybrid_vae_forward.13} parent=0 // pred_region
    _
  $region17: #{ff_hybrid_vae_forward.13} parent=0 // pred_fallthru
    _
  %v18 = vld [vmem:[%s0] sm:$0xff]
  %v19 = vld [vmem:[%s0 + $0x8] sm:$0xff]
  %v20 = vld [vmem:[%s0 + $0x10] sm:$0xff]
  %v21 = vld [vmem:[%s0 + $0x18] sm:$0xff]
  %v22 = vld [vmem:[%s0 + $0x20] sm:$0xff]
  %v23 = vld [vmem:[%s0 + $0x28] sm:$0xff]
  %v24 = vld [vmem:[%s0 + $0x30] sm:$0xff]
  %v25 = vpack.c.bf16 %v19, %v18
  %v26 = vpack.c.bf16 %v21, %v20
  %v27 = vpack.c.bf16 %v23, %v22
  %v28 = vpack.c.bf16 %v24, %v24
  %v29 = vld [vmem:[%s1] sm:$0xff]
  %v30 = vld [vmem:[%s1 + $0x8] sm:$0xff]
  %v31 = vld [vmem:[%s1 + $0x10] sm:$0xff]
  %v32 = vld [vmem:[%s1 + $0x18] sm:$0xff]
  %v33 = vpack.c.bf16 %v30, %v29
  %v34 = vpack.c.bf16 %v32, %v31
  %v35 = vld [vmem:[%s2] sm:$0x1]
  %v37 = vlaneseq
  %v38 = vshrl.u32 %v37, 7
  %v39 = vsub.s32 0, %v38
  %v40 = vrot.slane %v35, %v39
  %vm42 = vcmask 261120
  %v44 = vsel %vm42, %v25, 0
  %v47 = vsel %vm42, %v26, 0
  %v50 = vsel %vm42, %v27, 0
  %v53 = vsel %vm42, %v28, 0
  %55 = vmatprep.subr.bf16.mxu0 0
  %56 = vmatpush1.bf16.msra.mxu0 0
  %57 = vmatprep.subr.bf16.mxu0 0
  %58 = vmatpush1.bf16.msra.mxu0 0
  %59 = vmatprep.subr.bf16.mxu0 0
  %60 = vmatpush1.bf16.msra.mxu0 0
  %61 = vmatprep.subr.bf16.mxu0 0
  %62 = vmatpush1.bf16.msra.mxu0 0
  %63 = vmatprep.subr.bf16.mxu0 0
  %64 = vmatpush1.bf16.msra.mxu0 0
  %65 = vmatprep.subr.bf16.mxu0 0
  %66 = vmatpush1.bf16.msra.mxu0 0
  %67 = vmatprep.subr.bf16.mxu0 0
  %68 = vmatpush1.bf16.msra.mxu0 %v34
  %69 = vmatprep.subr.bf16.mxu0 0
  %70 = vmatpush1.bf16.msra.mxu0 %v33
  %71 = vmatprep.subr.bf16.mxu0 0
  %72 = vmatpush2.bf16.msra.mxu0 0
  %73 = vmatprep.subr.bf16.mxu0 0
  %74 = vmatpush2.bf16.msra.mxu0 0
  %75 = vmatprep.subr.bf16.mxu0 0
  %76 = vmatpush2.bf16.msra.mxu0 0
  %77 = vmatprep.subr.bf16.mxu0 0
  %78 = vmatpush2.bf16.msra.mxu0 0
  %79 = vmatprep.subr.bf16.mxu0 0
  %80 = vmatpush2.bf16.msra.mxu0 0
  %81 = vmatprep.subr.bf16.mxu0 0
  %82 = vmatpush2.bf16.msra.mxu0 0
  %83 = vmatprep.subr.bf16.mxu0 0
  %84 = vmatpush2.bf16.msra.mxu0 0
  %85 = vmatprep.subr.bf16.mxu0 0
  %86 = vmatpush2.bf16.msra.mxu0 0
  %87 = vmatprep.mubr.bf16.mxu0 0
  %88 = vmatmul.mubr.bf16.gmra.mxu0 %v44
  %v89 = vpop.f32.mrf.mxu0
  %v90 = vadd.f32 %v40, %v89
  %v91 = vpop.f32.mrf.mxu0
  %v92 = vpop.f32.mrf.mxu0
  %v93 = vadd.f32 %v40, %v92
  %v94 = vpop.f32.mrf.mxu0
  %95 = vmatprep.mubr.bf16.mxu0 0
  %96 = vmatmul.mubr.bf16.gmra.mxu0 %v47
  %v97 = vpop.f32.mrf.mxu0
  %v98 = vadd.f32 %v40, %v97
  %v99 = vpop.f32.mrf.mxu0
  %v100 = vpop.f32.mrf.mxu0
  %v101 = vadd.f32 %v40, %v100
  %v102 = vpop.f32.mrf.mxu0
  %103 = vmatprep.mubr.bf16.mxu0 0
  %104 = vmatmul.mubr.bf16.gmra.mxu0 %v50
  %v105 = vpop.f32.mrf.mxu0
  %v106 = vadd.f32 %v40, %v105
  %v107 = vpop.f32.mrf.mxu0
  %v108 = vpop.f32.mrf.mxu0
  %v109 = vadd.f32 %v40, %v108
  %v110 = vpop.f32.mrf.mxu0
  %111 = vmatprep.mubr.bf16.mxu0 0
  %112 = vmatmul.mubr.bf16.gmra.mxu0 %v53
  %v113 = vpop.f32.mrf.mxu0
  %v114 = vadd.f32 %v40, %v113
  %v115 = vpop.f32.mrf.mxu0
  %v116 = vpop.f32.mrf.mxu0
  %v117 = vpop.f32.mrf.mxu0
  %118 = vdwg.mxu0
  %v119 = vmax.f32 %v90, 0.0
  %v120 = vmax.f32 %v93, 0.0
  %v121 = vmax.f32 %v98, 0.0
  %v122 = vmax.f32 %v101, 0.0
  %v123 = vmax.f32 %v106, 0.0
  %v124 = vmax.f32 %v109, 0.0
  %v125 = vmax.f32 %v114, 0.0
  %v126 = vmul.f32 %v119, %v119
  %v127 = vmul.f32 %v120, %v120
  %v128 = vmul.f32 %v121, %v121
  %v129 = vmul.f32 %v122, %v122
  %v130 = vmul.f32 %v123, %v123
  %v131 = vmul.f32 %v124, %v124
  %v132 = vmul.f32 %v125, %v125
  %v133 = vld [vmem:[%s3] sm:$0xff]
  %v134 = vld [vmem:[%s3 + $0x8] sm:$0xff]
  %v135 = vld [vmem:[%s3 + $0x10] sm:$0xff]
  %v136 = vld [vmem:[%s3 + $0x18] sm:$0xff]
  %v138 = vsel %vm42, %v126, 0
  %v141 = vsel %vm42, %v127, 0
  %v144 = vsel %vm42, %v128, 0
  %v147 = vsel %vm42, %v129, 0
  %v150 = vsel %vm42, %v130, 0
  %v153 = vsel %vm42, %v131, 0
  %v156 = vsel %vm42, %v132, 0
  %158 = vmatprep.subr.mxu0 0.0
  %159 = vmatpush1.msra.mxu0 0.0
  %160 = vmatprep.subr.mxu0 0.0
  %161 = vmatpush1.msra.mxu0 0.0
  %162 = vmatprep.subr.mxu0 0.0
  %163 = vmatpush1.msra.mxu0 0.0
  %164 = vmatprep.subr.mxu0 0.0
  %165 = vmatpush1.msra.mxu0 0.0
  %166 = vmatprep.subr.mxu0 0.0
  %167 = vmatpush1.msra.mxu0 0.0
  %168 = vmatprep.subr.mxu0 0.0
  %169 = vmatpush1.msra.mxu0 0.0
  %170 = vmatprep.subr.mxu0 0.0
  %171 = vmatpush1.msra.mxu0 0.0
  %172 = vmatprep.subr.mxu0 0.0
  %173 = vmatpush1.msra.mxu0 0.0
  %174 = vmatprep.subr.mxu0 0.0
  %175 = vmatpush1.msra.mxu0 0.0
  %176 = vmatprep.subr.mxu0 0.0
  %177 = vmatpush1.msra.mxu0 0.0
  %178 = vmatprep.subr.mxu0 0.0
  %179 = vmatpush1.msra.mxu0 0.0
  %180 = vmatprep.subr.mxu0 0.0
  %181 = vmatpush1.msra.mxu0 0.0
  %182 = vmatprep.subr.mxu0 0.0
  %183 = vmatpush1.msra.mxu0 %v136
  %184 = vmatprep.subr.mxu0 0.0
  %185 = vmatpush1.msra.mxu0 %v135
  %186 = vmatprep.subr.mxu0 0.0
  %187 = vmatpush1.msra.mxu0 %v134
  %188 = vmatprep.subr.mxu0 0.0
  %189 = vmatpush1.msra.mxu0 %v133
  %190 = vmatprep.subr.mxu0 0.0
  %191 = vmatpush2.msra.mxu0 0.0
  %192 = vmatprep.subr.mxu0 0.0
  %193 = vmatpush2.msra.mxu0 0.0
  %194 = vmatprep.subr.mxu0 0.0
  %195 = vmatpush2.msra.mxu0 0.0
  %196 = vmatprep.subr.mxu0 0.0
  %197 = vmatpush2.msra.mxu0 0.0
  %198 = vmatprep.subr.mxu0 0.0
  %199 = vmatpush2.msra.mxu0 0.0
  %200 = vmatprep.subr.mxu0 0.0
  %201 = vmatpush2.msra.mxu0 0.0
  %202 = vmatprep.subr.mxu0 0.0
  %203 = vmatpush2.msra.mxu0 0.0
  %204 = vmatprep.subr.mxu0 0.0
  %205 = vmatpush2.msra.mxu0 0.0
  %206 = vmatprep.subr.mxu0 0.0
  %207 = vmatpush2.msra.mxu0 0.0
  %208 = vmatprep.subr.mxu0 0.0
  %209 = vmatpush2.msra.mxu0 0.0
  %210 = vmatprep.subr.mxu0 0.0
  %211 = vmatpush2.msra.mxu0 0.0
  %212 = vmatprep.subr.mxu0 0.0
  %213 = vmatpush2.msra.mxu0 0.0
  %214 = vmatprep.subr.mxu0 0.0
  %215 = vmatpush2.msra.mxu0 0.0
  %216 = vmatprep.subr.mxu0 0.0
  %217 = vmatpush2.msra.mxu0 0.0
  %218 = vmatprep.subr.mxu0 0.0
  %219 = vmatpush2.msra.mxu0 0.0
  %220 = vmatprep.subr.mxu0 0.0
  %221 = vmatpush2.msra.mxu0 0.0
  %222 = vmatprep.mubr.f32.mxu0 0.0
  %223 = vmatmul.mubr.f32.gmra.mxu0 %v138
  %v224 = vpop.f32.mrf.mxu0
  %v225 = vadd.f32 0.0, %v224
  %v226 = vpop.f32.mrf.mxu0
  %227 = vmatprep.mubr.f32.mxu0 0.0
  %228 = vmatmul.mubr.f32.gmra.mxu0 %v141
  %v229 = vpop.f32.mrf.mxu0
  %v230 = vadd.f32 0.0, %v229
  %v231 = vpop.f32.mrf.mxu0
  %232 = vmatprep.mubr.f32.mxu0 0.0
  %233 = vmatmul.mubr.f32.gmra.mxu0 %v144
  %v234 = vpop.f32.mrf.mxu0
  %v235 = vadd.f32 0.0, %v234
  %v236 = vpop.f32.mrf.mxu0
  %237 = vmatprep.mubr.f32.mxu0 0.0
  %238 = vmatmul.mubr.f32.gmra.mxu0 %v147
  %v239 = vpop.f32.mrf.mxu0
  %v240 = vadd.f32 0.0, %v239
  %v241 = vpop.f32.mrf.mxu0
  %242 = vmatprep.mubr.f32.mxu0 0.0
  %243 = vmatmul.mubr.f32.gmra.mxu0 %v150
  %v244 = vpop.f32.mrf.mxu0
  %v245 = vadd.f32 0.0, %v244
  %v246 = vpop.f32.mrf.mxu0
  %247 = vmatprep.mubr.f32.mxu0 0.0
  %248 = vmatmul.mubr.f32.gmra.mxu0 %v153
  %v249 = vpop.f32.mrf.mxu0
  %v250 = vadd.f32 0.0, %v249
  %v251 = vpop.f32.mrf.mxu0
  %252 = vmatprep.mubr.f32.mxu0 0.0
  %253 = vmatmul.mubr.f32.gmra.mxu0 %v156
  %v254 = vpop.f32.mrf.mxu0
  %v255 = vadd.f32 0.0, %v254
  %v256 = vpop.f32.mrf.mxu0
  %257 = vdwg.mxu0
  %v258 = vmul.f32 %v225, 0.0002
  %v259 = vmul.f32 %v230, 0.0002
  %v260 = vmul.f32 %v235, 0.0002
  %v261 = vmul.f32 %v240, 0.0002
  %v262 = vmul.f32 %v245, 0.0002
  %v263 = vmul.f32 %v250, 0.0002
  %v264 = vmul.f32 %v255, 0.0002
  %v265 = vadd.f32 %v258, 1.0
  %v266 = vadd.f32 %v259, 1.0
  %v267 = vadd.f32 %v260, 1.0
  %v268 = vadd.f32 %v261, 1.0
  %v269 = vadd.f32 %v262, 1.0
  %v270 = vadd.f32 %v263, 1.0
  %v271 = vadd.f32 %v264, 1.0
  %v272 = vrsqrt.pop %v265
  %v273 = vrsqrt.pop %v266
  %v274 = vrsqrt.pop %v267
  %v275 = vrsqrt.pop %v268
  %v276 = vrsqrt.pop %v269
  %v277 = vrsqrt.pop %v270
  %v278 = vrsqrt.pop %v271
  %v279 = vmul.f32 %v119, %v272
  %v280 = vmul.f32 %v120, %v273
  %v281 = vmul.f32 %v121, %v274
  %v282 = vmul.f32 %v122, %v275
  %v283 = vmul.f32 %v123, %v276
  %v284 = vmul.f32 %v124, %v277
  %v285 = vmul.f32 %v125, %v278
  %286 = vst.msk [vmem:[%s4] sm:$0xff] %vm42, %v279
  %287 = vst.msk [vmem:[%s4 + $0x8] sm:$0xff] %vm42, %v280
  %288 = vst.msk [vmem:[%s4 + $0x10] sm:$0xff] %vm42, %v281
  %289 = vst.msk [vmem:[%s4 + $0x18] sm:$0xff] %vm42, %v282
  %290 = vst.msk [vmem:[%s4 + $0x20] sm:$0xff] %vm42, %v283
  %291 = vst.msk [vmem:[%s4 + $0x28] sm:$0xff] %vm42, %v284
  %292 = vst.msk [vmem:[%s4 + $0x30] sm:$0xff] %vm42, %v285
  // Predicated region
  $region18: #{ff_hybrid_vae_forward.13} parent=0 // pred_check
    _
  $region19: #{ff_hybrid_vae_forward.13} parent=0 // pred_check_branch
    %294 = sbr.rel (0) target = $region21
  $region20: #{ff_hybrid_vae_forward.13} parent=0 // pred_region
    _
  $region21: #{ff_hybrid_vae_forward.13} parent=0 // pred_fallthru
    _
  // Predicated region
  $region22: #{ff_hybrid_vae_forward.13} parent=0 // pred_check
    _
  $region23: #{ff_hybrid_vae_forward.13} parent=0 // pred_check_branch
    %296 = sbr.rel (0) target = $region25
  $region24: #{ff_hybrid_vae_forward.13} parent=0 // pred_region
    _
  $region25: #{ff_hybrid_vae_forward.13} parent=0 // pred_fallthru
    _

// kernel: ff_hybrid_vae_forward.12
$region0: #{ff_hybrid_vae_forward.12}
  #allocation0 [shape = 'u32[]', space=smem, size = 0x4, offset = 0x4, fixed_abs, tag = 'smem constant byte address 0x4 - core index']
  #allocation1 [shape = 'u32[144,128]{1,0:T(1,128)}', space=vmem, size = 0x12000, scoped, tag = 'internal scratch']
  %s0 = inlined_call_operand.vmem [shape: f32[2,128], index: 0, kind: input, shape index: {}]
  %s1 = inlined_call_operand.vmem [shape: f32[128,256], index: 1, kind: input, shape index: {}]
  %s2 = inlined_call_operand.vmem [shape: f32[1,256], index: 2, kind: input, shape index: {}]
  %s3 = inlined_call_operand.vmem [shape: f32[256,256], index: 3, kind: input, shape index: {}]
  %s4 = inlined_call_operand.vmem [shape: f32[1,256], index: 4, kind: input, shape index: {}]
  %s5 = inlined_call_operand.vmem [shape: f32[256,4], index: 5, kind: input, shape index: {}]
  %s6 = inlined_call_operand.vmem [shape: f32[1,4], index: 6, kind: input, shape index: {}]
  %s7 = inlined_call_operand.vmem [shape: f32[256,4], index: 7, kind: input, shape index: {}]
  %s8 = inlined_call_operand.vmem [shape: f32[1,4], index: 8, kind: input, shape index: {}]
  %s9 = inlined_call_operand.vmem [shape: f32[256,4], index: 9, kind: input, shape index: {}]
  %s10 = inlined_call_operand.vmem [shape: f32[1,4], index: 10, kind: input, shape index: {}]
  %s11 = inlined_call_operand.vmem [shape: f32[2,4], index: 11, kind: input, shape index: {}]
  %s12 = inlined_call_operand.vmem [shape: f32[2,4], index: 12, kind: input, shape index: {}]
  %s13 = inlined_call_operand.vmem [shape: f32[4,256], index: 13, kind: input, shape index: {}]
  %s14 = inlined_call_operand.vmem [shape: f32[4,256], index: 14, kind: input, shape index: {}]
  %s15 = inlined_call_operand.vmem [shape: f32[1,256], index: 15, kind: input, shape index: {}]
  %s16 = inlined_call_operand.vmem [shape: f32[256,256], index: 16, kind: input, shape index: {}]
  %s17 = inlined_call_operand.vmem [shape: f32[1,256], index: 17, kind: input, shape index: {}]
  %s18 = inlined_call_operand.vmem [shape: f32[256,128], index: 18, kind: input, shape index: {}]
  %s19 = inlined_call_operand.vmem [shape: f32[1,128], index: 19, kind: input, shape index: {}]
  %s20 = inlined_call_operand.hbm [shape: f32[2,4], index: 20, kind: output, shape index: {0}]
  %s21 = inlined_call_operand.hbm [shape: f32[2,4], index: 21, kind: output, shape index: {1}]
  %s22 = inlined_call_operand.hbm [shape: f32[2,4], index: 22, kind: output, shape index: {2}]
  %s23 = inlined_call_operand.vmem [shape: f32[2,128], index: 23, kind: output, shape index: {3}]
  %24 = xla_tuple %s20, %s21, %s22, %s23
  %s25 = sld [smem:[#allocation0]]
  $region114: #{ff_hybrid_vae_forward.12} parent=0
    _
  %s27 = ssub.s32 1, %s25
  %s28 = scalar_select 0, %s27, %s25
  $region1: #{ff_hybrid_vae_forward.12} parent=0
    #allocation2 [shape = 'u8[1024]{0}', space=vmem, size = 0x400, scoped, tag = 'output window, operand 0, single buffered']
    #allocation3 [shape = 's32[1]{0}', space=sflag, size = 0x4, scoped, tag = 'scoped memory for ff_hybrid_vae_forward.12']
    #allocation4 [shape = 'u8[1024]{0}', space=vmem, size = 0x400, scoped, tag = 'output window, operand 1, single buffered']
    #allocation5 [shape = 's32[1]{0}', space=sflag, size = 0x4, scoped, tag = 'scoped memory for ff_hybrid_vae_forward.12']
    #allocation6 [shape = 'u8[1024]{0}', space=vmem, size = 0x400, scoped, tag = 'output window, operand 2, single buffered']
    %29 = vsyncpa [#allocation3], 0
    %30 = vsyncpa [#allocation5], 0
    // Predicated region
    $region2: #{ff_hybrid_vae_forward.12} parent=1 // pred_check
      _
    $region3: #{ff_hybrid_vae_forward.12} parent=1 // pred_check_branch
      %32 = sbr.rel (0) target = $region5
    $region4: #{ff_hybrid_vae_forward.12} parent=1 // pred_region
      _
    $region5: #{ff_hybrid_vae_forward.12} parent=1 // pred_fallthru
      _
    // Predicated region
    $region6: #{ff_hybrid_vae_forward.12} parent=1 // pred_check
      _
    $region7: #{ff_hybrid_vae_forward.12} parent=1 // pred_check_branch
      %34 = sbr.rel (0) target = $region9
    $region8: #{ff_hybrid_vae_forward.12} parent=1 // pred_region
      _
    $region9: #{ff_hybrid_vae_forward.12} parent=1 // pred_fallthru
      _
    // Predicated region
    $region10: #{ff_hybrid_vae_forward.12} parent=1 // pred_check
      _
    $region11: #{ff_hybrid_vae_forward.12} parent=1 // pred_check_branch
      %36 = sbr.rel (0) target = $region13
    $region12: #{ff_hybrid_vae_forward.12} parent=1 // pred_region
      _
    $region13: #{ff_hybrid_vae_forward.12} parent=1 // pred_fallthru
      _
    // Predicated region
    $region14: #{ff_hybrid_vae_forward.12} parent=1 // pred_check
      _
    $region15: #{ff_hybrid_vae_forward.12} parent=1 // pred_check_branch
      %38 = sbr.rel (0) target = $region17
    $region16: #{ff_hybrid_vae_forward.12} parent=1 // pred_region
      _
    $region17: #{ff_hybrid_vae_forward.12} parent=1 // pred_fallthru
      _
    // Predicated region
    $region18: #{ff_hybrid_vae_forward.12} parent=1 // pred_check
      _
    $region19: #{ff_hybrid_vae_forward.12} parent=1 // pred_check_branch
      %40 = sbr.rel (0) target = $region21
    $region20: #{ff_hybrid_vae_forward.12} parent=1 // pred_region
      _
    $region21: #{ff_hybrid_vae_forward.12} parent=1 // pred_fallthru
      _
    // Predicated region
    $region22: #{ff_hybrid_vae_forward.12} parent=1 // pred_check
      _
    $region23: #{ff_hybrid_vae_forward.12} parent=1 // pred_check_branch
      %42 = sbr.rel (0) target = $region25
    $region24: #{ff_hybrid_vae_forward.12} parent=1 // pred_region
      _
    $region25: #{ff_hybrid_vae_forward.12} parent=1 // pred_fallthru
      _
    // Predicated region
    $region26: #{ff_hybrid_vae_forward.12} parent=1 // pred_check
      _
    $region27: #{ff_hybrid_vae_forward.12} parent=1 // pred_check_branch
      %44 = sbr.rel (0) target = $region29
    $region28: #{ff_hybrid_vae_forward.12} parent=1 // pred_region
      _
    $region29: #{ff_hybrid_vae_forward.12} parent=1 // pred_fallthru
      _
    // Predicated region
    $region30: #{ff_hybrid_vae_forward.12} parent=1 // pred_check
      _
    $region31: #{ff_hybrid_vae_forward.12} parent=1 // pred_check_branch
      %46 = sbr.rel (0) target = $region33
    $region32: #{ff_hybrid_vae_forward.12} parent=1 // pred_region
      _
    $region33: #{ff_hybrid_vae_forward.12} parent=1 // pred_fallthru
      _
    // Predicated region
    $region34: #{ff_hybrid_vae_forward.12} parent=1 // pred_check
      _
    $region35: #{ff_hybrid_vae_forward.12} parent=1 // pred_check_branch
      %48 = sbr.rel (0) target = $region37
    $region36: #{ff_hybrid_vae_forward.12} parent=1 // pred_region
      _
    $region37: #{ff_hybrid_vae_forward.12} parent=1 // pred_fallthru
      _
    // Predicated region
    $region38: #{ff_hybrid_vae_forward.12} parent=1 // pred_check
      _
    $region39: #{ff_hybrid_vae_forward.12} parent=1 // pred_check_branch
      %50 = sbr.rel (0) target = $region41
    $region40: #{ff_hybrid_vae_forward.12} parent=1 // pred_region
      _
    $region41: #{ff_hybrid_vae_forward.12} parent=1 // pred_fallthru
      _
    // Predicated region
    $region42: #{ff_hybrid_vae_forward.12} parent=1 // pred_check
      _
    $region43: #{ff_hybrid_vae_forward.12} parent=1 // pred_check_branch
      %52 = sbr.rel (0) target = $region45
    $region44: #{ff_hybrid_vae_forward.12} parent=1 // pred_region
      _
    $region45: #{ff_hybrid_vae_forward.12} parent=1 // pred_fallthru
      _
    // Predicated region
    $region46: #{ff_hybrid_vae_forward.12} parent=1 // pred_check
      _
    $region47: #{ff_hybrid_vae_forward.12} parent=1 // pred_check_branch
      %54 = sbr.rel (0) target = $region49
    $region48: #{ff_hybrid_vae_forward.12} parent=1 // pred_region
      _
    $region49: #{ff_hybrid_vae_forward.12} parent=1 // pred_fallthru
      _
    // Predicated region
    $region50: #{ff_hybrid_vae_forward.12} parent=1 // pred_check
      _
    $region51: #{ff_hybrid_vae_forward.12} parent=1 // pred_check_branch
      %56 = sbr.rel (0) target = $region53
    $region52: #{ff_hybrid_vae_forward.12} parent=1 // pred_region
      _
    $region53: #{ff_hybrid_vae_forward.12} parent=1 // pred_fallthru
      _
    // Predicated region
    $region54: #{ff_hybrid_vae_forward.12} parent=1 // pred_check
      _
    $region55: #{ff_hybrid_vae_forward.12} parent=1 // pred_check_branch
      %58 = sbr.rel (0) target = $region57
    $region56: #{ff_hybrid_vae_forward.12} parent=1 // pred_region
      _
    $region57: #{ff_hybrid_vae_forward.12} parent=1 // pred_fallthru
      _
    // Predicated region
    $region58: #{ff_hybrid_vae_forward.12} parent=1 // pred_check
      _
    $region59: #{ff_hybrid_vae_forward.12} parent=1 // pred_check_branch
      %60 = sbr.rel (0) target = $region61
    $region60: #{ff_hybrid_vae_forward.12} parent=1 // pred_region
      _
    $region61: #{ff_hybrid_vae_forward.12} parent=1 // pred_fallthru
      _
    // Predicated region
    $region62: #{ff_hybrid_vae_forward.12} parent=1 // pred_check
      _
    $region63: #{ff_hybrid_vae_forward.12} parent=1 // pred_check_branch
      %62 = sbr.rel (0) target = $region65
    $region64: #{ff_hybrid_vae_forward.12} parent=1 // pred_region
      _
    $region65: #{ff_hybrid_vae_forward.12} parent=1 // pred_fallthru
      _
    // Predicated region
    $region66: #{ff_hybrid_vae_forward.12} parent=1 // pred_check
      _
    $region67: #{ff_hybrid_vae_forward.12} parent=1 // pred_check_branch
      %64 = sbr.rel (0) target = $region69
    $region68: #{ff_hybrid_vae_forward.12} parent=1 // pred_region
      _
    $region69: #{ff_hybrid_vae_forward.12} parent=1 // pred_fallthru
      _
    // Predicated region
    $region70: #{ff_hybrid_vae_forward.12} parent=1 // pred_check
      _
    $region71: #{ff_hybrid_vae_forward.12} parent=1 // pred_check_branch
      %66 = sbr.rel (0) target = $region73
    $region72: #{ff_hybrid_vae_forward.12} parent=1 // pred_region
      _
    $region73: #{ff_hybrid_vae_forward.12} parent=1 // pred_fallthru
      _
    // Predicated region
    $region74: #{ff_hybrid_vae_forward.12} parent=1 // pred_check
      _
    $region75: #{ff_hybrid_vae_forward.12} parent=1 // pred_check_branch
      %68 = sbr.rel (0) target = $region77
    $region76: #{ff_hybrid_vae_forward.12} parent=1 // pred_region
      _
    $region77: #{ff_hybrid_vae_forward.12} parent=1 // pred_fallthru
      _
    // Predicated region
    $region78: #{ff_hybrid_vae_forward.12} parent=1 // pred_check
      _
    $region79: #{ff_hybrid_vae_forward.12} parent=1 // pred_check_branch
      %70 = sbr.rel (0) target = $region81
    $region80: #{ff_hybrid_vae_forward.12} parent=1 // pred_region
      _
    $region81: #{ff_hybrid_vae_forward.12} parent=1 // pred_fallthru
      _
    %v71 = vld [vmem:[%s0] sm:$0x3]
    %v72 = vld [vmem:[%s1] sm:$0xff]
    %v73 = vld [vmem:[%s1 + $0x8] sm:$0xff]
    %v74 = vld [vmem:[%s1 + $0x10] sm:$0xff]
    %v75 = vld [vmem:[%s1 + $0x18] sm:$0xff]
    %v76 = vld [vmem:[%s1 + $0x20] sm:$0xff]
    %v77 = vld [vmem:[%s1 + $0x28] sm:$0xff]
    %v78 = vld [vmem:[%s1 + $0x30] sm:$0xff]
    %v79 = vld [vmem:[%s1 + $0x38] sm:$0xff]
    %v80 = vld [vmem:[%s1 + $0x40] sm:$0xff]
    %v81 = vld [vmem:[%s1 + $0x48] sm:$0xff]
    %v82 = vld [vmem:[%s1 + $0x50] sm:$0xff]
    %v83 = vld [vmem:[%s1 + $0x58] sm:$0xff]
    %v84 = vld [vmem:[%s1 + $0x60] sm:$0xff]
    %v85 = vld [vmem:[%s1 + $0x68] sm:$0xff]
    %v86 = vld [vmem:[%s1 + $0x70] sm:$0xff]
    %v87 = vld [vmem:[%s1 + $0x78] sm:$0xff]
    %v88 = vld [vmem:[%s1 + $0x80] sm:$0xff]
    %v89 = vld [vmem:[%s1 + $0x88] sm:$0xff]
    %v90 = vld [vmem:[%s1 + $0x90] sm:$0xff]
    %v91 = vld [vmem:[%s1 + $0x98] sm:$0xff]
    %v92 = vld [vmem:[%s1 + $0xa0] sm:$0xff]
    %v93 = vld [vmem:[%s1 + $0xa8] sm:$0xff]
    %v94 = vld [vmem:[%s1 + $0xb0] sm:$0xff]
    %v95 = vld [vmem:[%s1 + $0xb8] sm:$0xff]
    %v96 = vld [vmem:[%s1 + $0xc0] sm:$0xff]
    %v97 = vld [vmem:[%s1 + $0xc8] sm:$0xff]
    %v98 = vld [vmem:[%s1 + $0xd0] sm:$0xff]
    %v99 = vld [vmem:[%s1 + $0xd8] sm:$0xff]
    %v100 = vld [vmem:[%s1 + $0xe0] sm:$0xff]
    %v101 = vld [vmem:[%s1 + $0xe8] sm:$0xff]
    %v102 = vld [vmem:[%s1 + $0xf0] sm:$0xff]
    %v103 = vld [vmem:[%s1 + $0xf8] sm:$0xff]
    %v104 = vld [vmem:[%s2] sm:$0x3]
    %v106 = vlaneseq
    %v107 = vshrl.u32 %v106, 7
    %v108 = vsub.s32 0, %v107
    %v109 = vrot.slane %v104, %v108
    %v110 = vlaneseq
    %v111 = vshrl.u32 %v110, 7
    %v112 = vsub.s32 1, %v111
    %v113 = vrot.slane %v104, %v112
    %116 = vmatprep.subr.mxu0 %v103
    %117 = vmatpush1.msra.mxu0 %v102
    %118 = vmatprep.subr.mxu0 %v101
    %119 = vmatpush1.msra.mxu0 %v100
    %120 = vmatprep.subr.mxu0 %v99
    %121 = vmatpush1.msra.mxu0 %v98
    %122 = vmatprep.subr.mxu0 %v97
    %123 = vmatpush1.msra.mxu0 %v96
    %124 = vmatprep.subr.mxu0 %v95
    %125 = vmatpush1.msra.mxu0 %v94
    %126 = vmatprep.subr.mxu0 %v93
    %127 = vmatpush1.msra.mxu0 %v92
    %128 = vmatprep.subr.mxu0 %v91
    %129 = vmatpush1.msra.mxu0 %v90
    %130 = vmatprep.subr.mxu0 %v89
    %131 = vmatpush1.msra.mxu0 %v88
    %132 = vmatprep.subr.mxu0 %v87
    %133 = vmatpush1.msra.mxu0 %v86
    %134 = vmatprep.subr.mxu0 %v85
    %135 = vmatpush1.msra.mxu0 %v84
    %136 = vmatprep.subr.mxu0 %v83
    %137 = vmatpush1.msra.mxu0 %v82
    %138 = vmatprep.subr.mxu0 %v81
    %139 = vmatpush1.msra.mxu0 %v80
    %140 = vmatprep.subr.mxu0 %v79
    %141 = vmatpush1.msra.mxu0 %v78
    %142 = vmatprep.subr.mxu0 %v77
    %143 = vmatpush1.msra.mxu0 %v76
    %144 = vmatprep.subr.mxu0 %v75
    %145 = vmatpush1.msra.mxu0 %v74
    %146 = vmatprep.subr.mxu0 %v73
    %147 = vmatpush1.msra.mxu0 %v72
    %148 = vmatprep.subr.mxu0 0.0
    %149 = vmatpush2.msra.mxu0 0.0
    %150 = vmatprep.subr.mxu0 0.0
    %151 = vmatpush2.msra.mxu0 0.0
    %152 = vmatprep.subr.mxu0 0.0
    %153 = vmatpush2.msra.mxu0 0.0
    %154 = vmatprep.subr.mxu0 0.0
    %155 = vmatpush2.msra.mxu0 0.0
    %156 = vmatprep.subr.mxu0 0.0
    %157 = vmatpush2.msra.mxu0 0.0
    %158 = vmatprep.subr.mxu0 0.0
    %159 = vmatpush2.msra.mxu0 0.0
    %160 = vmatprep.subr.mxu0 0.0
    %161 = vmatpush2.msra.mxu0 0.0
    %162 = vmatprep.subr.mxu0 0.0
    %163 = vmatpush2.msra.mxu0 0.0
    %164 = vmatprep.subr.mxu0 0.0
    %165 = vmatpush2.msra.mxu0 0.0
    %166 = vmatprep.subr.mxu0 0.0
    %167 = vmatpush2.msra.mxu0 0.0
    %168 = vmatprep.subr.mxu0 0.0
    %169 = vmatpush2.msra.mxu0 0.0
    %170 = vmatprep.subr.mxu0 0.0
    %171 = vmatpush2.msra.mxu0 0.0
    %172 = vmatprep.subr.mxu0 0.0
    %173 = vmatpush2.msra.mxu0 0.0
    %174 = vmatprep.subr.mxu0 0.0
    %175 = vmatpush2.msra.mxu0 0.0
    %176 = vmatprep.subr.mxu0 0.0
    %177 = vmatpush2.msra.mxu0 0.0
    %178 = vmatprep.subr.mxu0 0.0
    %179 = vmatpush2.msra.mxu0 0.0
    %180 = vmatprep.mubr.f32.mxu0 0.0
    %181 = vmatmul.mubr.f32.gmra.mxu0 %v71
    %v182 = vpop.f32.mrf.mxu0
    %v183 = vadd.f32 %v109, %v182
    %v184 = vpop.f32.mrf.mxu0
    %v185 = vadd.f32 %v113, %v184
    %186 = vdwg.mxu0
    %v187 = vmax.f32 %v183, 0.0
    %v188 = vmax.f32 %v185, 0.0
    %v189 = vld [vmem:[%s3] sm:$0xff]
    %v190 = vld [vmem:[%s3 + $0x8] sm:$0xff]
    %v191 = vld [vmem:[%s3 + $0x10] sm:$0xff]
    %v192 = vld [vmem:[%s3 + $0x18] sm:$0xff]
    %v193 = vld [vmem:[%s3 + $0x20] sm:$0xff]
    %v194 = vld [vmem:[%s3 + $0x28] sm:$0xff]
    %v195 = vld [vmem:[%s3 + $0x30] sm:$0xff]
    %v196 = vld [vmem:[%s3 + $0x38] sm:$0xff]
    %v197 = vld [vmem:[%s3 + $0x40] sm:$0xff]
    %v198 = vld [vmem:[%s3 + $0x48] sm:$0xff]
    %v199 = vld [vmem:[%s3 + $0x50] sm:$0xff]
    %v200 = vld [vmem:[%s3 + $0x58] sm:$0xff]
    %v201 = vld [vmem:[%s3 + $0x60] sm:$0xff]
    %v202 = vld [vmem:[%s3 + $0x68] sm:$0xff]
    %v203 = vld [vmem:[%s3 + $0x70] sm:$0xff]
    %v204 = vld [vmem:[%s3 + $0x78] sm:$0xff]
    %v205 = vld [vmem:[%s3 + $0x80] sm:$0xff]
    %v206 = vld [vmem:[%s3 + $0x88] sm:$0xff]
    %v207 = vld [vmem:[%s3 + $0x90] sm:$0xff]
    %v208 = vld [vmem:[%s3 + $0x98] sm:$0xff]
    %v209 = vld [vmem:[%s3 + $0xa0] sm:$0xff]
    %v210 = vld [vmem:[%s3 + $0xa8] sm:$0xff]
    %v211 = vld [vmem:[%s3 + $0xb0] sm:$0xff]
    %v212 = vld [vmem:[%s3 + $0xb8] sm:$0xff]
    %v213 = vld [vmem:[%s3 + $0xc0] sm:$0xff]
    %v214 = vld [vmem:[%s3 + $0xc8] sm:$0xff]
    %v215 = vld [vmem:[%s3 + $0xd0] sm:$0xff]
    %v216 = vld [vmem:[%s3 + $0xd8] sm:$0xff]
    %v217 = vld [vmem:[%s3 + $0xe0] sm:$0xff]
    %v218 = vld [vmem:[%s3 + $0xe8] sm:$0xff]
    %v219 = vld [vmem:[%s3 + $0xf0] sm:$0xff]
    %v220 = vld [vmem:[%s3 + $0xf8] sm:$0xff]
    %v221 = vld [vmem:[%s3 + $0x100] sm:$0xff]
    %v222 = vld [vmem:[%s3 + $0x108] sm:$0xff]
    %v223 = vld [vmem:[%s3 + $0x110] sm:$0xff]
    %v224 = vld [vmem:[%s3 + $0x118] sm:$0xff]
    %v225 = vld [vmem:[%s3 + $0x120] sm:$0xff]
    %v226 = vld [vmem:[%s3 + $0x128] sm:$0xff]
    %v227 = vld [vmem:[%s3 + $0x130] sm:$0xff]
    %v228 = vld [vmem:[%s3 + $0x138] sm:$0xff]
    %v229 = vld [vmem:[%s3 + $0x140] sm:$0xff]
    %v230 = vld [vmem:[%s3 + $0x148] sm:$0xff]
    %v231 = vld [vmem:[%s3 + $0x150] sm:$0xff]
    %v232 = vld [vmem:[%s3 + $0x158] sm:$0xff]
    %v233 = vld [vmem:[%s3 + $0x160] sm:$0xff]
    %v234 = vld [vmem:[%s3 + $0x168] sm:$0xff]
    %v235 = vld [vmem:[%s3 + $0x170] sm:$0xff]
    %v236 = vld [vmem:[%s3 + $0x178] sm:$0xff]
    %v237 = vld [vmem:[%s3 + $0x180] sm:$0xff]
    %v238 = vld [vmem:[%s3 + $0x188] sm:$0xff]
    %v239 = vld [vmem:[%s3 + $0x190] sm:$0xff]
    %v240 = vld [vmem:[%s3 + $0x198] sm:$0xff]
    %v241 = vld [vmem:[%s3 + $0x1a0] sm:$0xff]
    %v242 = vld [vmem:[%s3 + $0x1a8] sm:$0xff]
    %v243 = vld [vmem:[%s3 + $0x1b0] sm:$0xff]
    %v244 = vld [vmem:[%s3 + $0x1b8] sm:$0xff]
    %v245 = vld [vmem:[%s3 + $0x1c0] sm:$0xff]
    %v246 = vld [vmem:[%s3 + $0x1c8] sm:$0xff]
    %v247 = vld [vmem:[%s3 + $0x1d0] sm:$0xff]
    %v248 = vld [vmem:[%s3 + $0x1d8] sm:$0xff]
    %v249 = vld [vmem:[%s3 + $0x1e0] sm:$0xff]
    %v250 = vld [vmem:[%s3 + $0x1e8] sm:$0xff]
    %v251 = vld [vmem:[%s3 + $0x1f0] sm:$0xff]
    %v252 = vld [vmem:[%s3 + $0x1f8] sm:$0xff]
    %v253 = vld [vmem:[%s4] sm:$0x3]
    %v255 = vlaneseq
    %v256 = vshrl.u32 %v255, 7
    %v257 = vsub.s32 0, %v256
    %v258 = vrot.slane %v253, %v257
    %v259 = vlaneseq
    %v260 = vshrl.u32 %v259, 7
    %v261 = vsub.s32 1, %v260
    %v262 = vrot.slane %v253, %v261
    %265 = vmatprep.subr.mxu0 %v220
    %266 = vmatpush1.msra.mxu0 %v219
    %267 = vmatprep.subr.mxu0 %v218
    %268 = vmatpush1.msra.mxu0 %v217
    %269 = vmatprep.subr.mxu0 %v216
    %270 = vmatpush1.msra.mxu0 %v215
    %271 = vmatprep.subr.mxu0 %v214
    %272 = vmatpush1.msra.mxu0 %v213
    %273 = vmatprep.subr.mxu0 %v212
    %274 = vmatpush1.msra.mxu0 %v211
    %275 = vmatprep.subr.mxu0 %v210
    %276 = vmatpush1.msra.mxu0 %v209
    %277 = vmatprep.subr.mxu0 %v208
    %278 = vmatpush1.msra.mxu0 %v207
    %279 = vmatprep.subr.mxu0 %v206
    %280 = vmatpush1.msra.mxu0 %v205
    %281 = vmatprep.subr.mxu0 %v204
    %282 = vmatpush1.msra.mxu0 %v203
    %283 = vmatprep.subr.mxu0 %v202
    %284 = vmatpush1.msra.mxu0 %v201
    %285 = vmatprep.subr.mxu0 %v200
    %286 = vmatpush1.msra.mxu0 %v199
    %287 = vmatprep.subr.mxu0 %v198
    %288 = vmatpush1.msra.mxu0 %v197
    %289 = vmatprep.subr.mxu0 %v196
    %290 = vmatpush1.msra.mxu0 %v195
    %291 = vmatprep.subr.mxu0 %v194
    %292 = vmatpush1.msra.mxu0 %v193
    %293 = vmatprep.subr.mxu0 %v192
    %294 = vmatpush1.msra.mxu0 %v191
    %295 = vmatprep.subr.mxu0 %v190
    %296 = vmatpush1.msra.mxu0 %v189
    %297 = vmatprep.subr.mxu0 %v252
    %298 = vmatpush2.msra.mxu0 %v251
    %299 = vmatprep.subr.mxu0 %v250
    %300 = vmatpush2.msra.mxu0 %v249
    %301 = vmatprep.subr.mxu0 %v248
    %302 = vmatpush2.msra.mxu0 %v247
    %303 = vmatprep.subr.mxu0 %v246
    %304 = vmatpush2.msra.mxu0 %v245
    %305 = vmatprep.subr.mxu0 %v244
    %306 = vmatpush2.msra.mxu0 %v243
    %307 = vmatprep.subr.mxu0 %v242
    %308 = vmatpush2.msra.mxu0 %v241
    %309 = vmatprep.subr.mxu0 %v240
    %310 = vmatpush2.msra.mxu0 %v239
    %311 = vmatprep.subr.mxu0 %v238
    %312 = vmatpush2.msra.mxu0 %v237
    %313 = vmatprep.subr.mxu0 %v236
    %314 = vmatpush2.msra.mxu0 %v235
    %315 = vmatprep.subr.mxu0 %v234
    %316 = vmatpush2.msra.mxu0 %v233
    %317 = vmatprep.subr.mxu0 %v232
    %318 = vmatpush2.msra.mxu0 %v231
    %319 = vmatprep.subr.mxu0 %v230
    %320 = vmatpush2.msra.mxu0 %v229
    %321 = vmatprep.subr.mxu0 %v228
    %322 = vmatpush2.msra.mxu0 %v227
    %323 = vmatprep.subr.mxu0 %v226
    %324 = vmatpush2.msra.mxu0 %v225
    %325 = vmatprep.subr.mxu0 %v224
    %326 = vmatpush2.msra.mxu0 %v223
    %327 = vmatprep.subr.mxu0 %v222
    %328 = vmatpush2.msra.mxu0 %v221
    %329 = vmatprep.mubr.f32.mxu0 %v188
    %330 = vmatmul.mubr.f32.gmra.mxu0 %v187
    %v331 = vpop.f32.mrf.mxu0
    %v332 = vadd.f32 %v258, %v331
    %v333 = vpop.f32.mrf.mxu0
    %v334 = vadd.f32 %v262, %v333
    %335 = vdwg.mxu0
    %v336 = vmax.f32 %v332, 0.0
    %v337 = vmax.f32 %v334, 0.0
    %v338 = vld [vmem:[%s5] sm:$0xff]
    %v339 = vld [vmem:[%s5 + $0x8] sm:$0xff]
    %v340 = vld [vmem:[%s5 + $0x10] sm:$0xff]
    %v341 = vld [vmem:[%s5 + $0x18] sm:$0xff]
    %v342 = vld [vmem:[%s5 + $0x20] sm:$0xff]
    %v343 = vld [vmem:[%s5 + $0x28] sm:$0xff]
    %v344 = vld [vmem:[%s5 + $0x30] sm:$0xff]
    %v345 = vld [vmem:[%s5 + $0x38] sm:$0xff]
    %v346 = vld [vmem:[%s5 + $0x40] sm:$0xff]
    %v347 = vld [vmem:[%s5 + $0x48] sm:$0xff]
    %v348 = vld [vmem:[%s5 + $0x50] sm:$0xff]
    %v349 = vld [vmem:[%s5 + $0x58] sm:$0xff]
    %v350 = vld [vmem:[%s5 + $0x60] sm:$0xff]
    %v351 = vld [vmem:[%s5 + $0x68] sm:$0xff]
    %v352 = vld [vmem:[%s5 + $0x70] sm:$0xff]
    %v353 = vld [vmem:[%s5 + $0x78] sm:$0xff]
    %v354 = vld [vmem:[%s5 + $0x80] sm:$0xff]
    %v355 = vld [vmem:[%s5 + $0x88] sm:$0xff]
    %v356 = vld [vmem:[%s5 + $0x90] sm:$0xff]
    %v357 = vld [vmem:[%s5 + $0x98] sm:$0xff]
    %v358 = vld [vmem:[%s5 + $0xa0] sm:$0xff]
    %v359 = vld [vmem:[%s5 + $0xa8] sm:$0xff]
    %v360 = vld [vmem:[%s5 + $0xb0] sm:$0xff]
    %v361 = vld [vmem:[%s5 + $0xb8] sm:$0xff]
    %v362 = vld [vmem:[%s5 + $0xc0] sm:$0xff]
    %v363 = vld [vmem:[%s5 + $0xc8] sm:$0xff]
    %v364 = vld [vmem:[%s5 + $0xd0] sm:$0xff]
    %v365 = vld [vmem:[%s5 + $0xd8] sm:$0xff]
    %v366 = vld [vmem:[%s5 + $0xe0] sm:$0xff]
    %v367 = vld [vmem:[%s5 + $0xe8] sm:$0xff]
    %v368 = vld [vmem:[%s5 + $0xf0] sm:$0xff]
    %v369 = vld [vmem:[%s5 + $0xf8] sm:$0xff]
    %v370 = vld [vmem:[%s6] sm:$0x1]
    %v372 = vlaneseq
    %v373 = vshrl.u32 %v372, 7
    %v374 = vsub.s32 0, %v373
    %v375 = vrot.slane %v370, %v374
    %377 = vmatprep.subr.mxu0 0.0
    %378 = vmatpush1.msra.mxu0 %v353
    %379 = vmatprep.subr.mxu0 0.0
    %380 = vmatpush1.msra.mxu0 %v352
    %381 = vmatprep.subr.mxu0 0.0
    %382 = vmatpush1.msra.mxu0 %v351
    %383 = vmatprep.subr.mxu0 0.0
    %384 = vmatpush1.msra.mxu0 %v350
    %385 = vmatprep.subr.mxu0 0.0
    %386 = vmatpush1.msra.mxu0 %v349
    %387 = vmatprep.subr.mxu0 0.0
    %388 = vmatpush1.msra.mxu0 %v348
    %389 = vmatprep.subr.mxu0 0.0
    %390 = vmatpush1.msra.mxu0 %v347
    %391 = vmatprep.subr.mxu0 0.0
    %392 = vmatpush1.msra.mxu0 %v346
    %393 = vmatprep.subr.mxu0 0.0
    %394 = vmatpush1.msra.mxu0 %v345
    %395 = vmatprep.subr.mxu0 0.0
    %396 = vmatpush1.msra.mxu0 %v344
    %397 = vmatprep.subr.mxu0 0.0
    %398 = vmatpush1.msra.mxu0 %v343
    %399 = vmatprep.subr.mxu0 0.0
    %400 = vmatpush1.msra.mxu0 %v342
    %401 = vmatprep.subr.mxu0 0.0
    %402 = vmatpush1.msra.mxu0 %v341
    %403 = vmatprep.subr.mxu0 0.0
    %404 = vmatpush1.msra.mxu0 %v340
    %405 = vmatprep.subr.mxu0 0.0
    %406 = vmatpush1.msra.mxu0 %v339
    %407 = vmatprep.subr.mxu0 0.0
    %408 = vmatpush1.msra.mxu0 %v338
    %409 = vmatprep.subr.mxu0 0.0
    %410 = vmatpush2.msra.mxu0 %v369
    %411 = vmatprep.subr.mxu0 0.0
    %412 = vmatpush2.msra.mxu0 %v368
    %413 = vmatprep.subr.mxu0 0.0
    %414 = vmatpush2.msra.mxu0 %v367
    %415 = vmatprep.subr.mxu0 0.0
    %416 = vmatpush2.msra.mxu0 %v366
    %417 = vmatprep.subr.mxu0 0.0
    %418 = vmatpush2.msra.mxu0 %v365
    %419 = vmatprep.subr.mxu0 0.0
    %420 = vmatpush2.msra.mxu0 %v364
    %421 = vmatprep.subr.mxu0 0.0
    %422 = vmatpush2.msra.mxu0 %v363
    %423 = vmatprep.subr.mxu0 0.0
    %424 = vmatpush2.msra.mxu0 %v362
    %425 = vmatprep.subr.mxu0 0.0
    %426 = vmatpush2.msra.mxu0 %v361
    %427 = vmatprep.subr.mxu0 0.0
    %428 = vmatpush2.msra.mxu0 %v360
    %429 = vmatprep.subr.mxu0 0.0
    %430 = vmatpush2.msra.mxu0 %v359
    %431 = vmatprep.subr.mxu0 0.0
    %432 = vmatpush2.msra.mxu0 %v358
    %433 = vmatprep.subr.mxu0 0.0
    %434 = vmatpush2.msra.mxu0 %v357
    %435 = vmatprep.subr.mxu0 0.0
    %436 = vmatpush2.msra.mxu0 %v356
    %437 = vmatprep.subr.mxu0 0.0
    %438 = vmatpush2.msra.mxu0 %v355
    %439 = vmatprep.subr.mxu0 0.0
    %440 = vmatpush2.msra.mxu0 %v354
    %441 = vmatprep.mubr.f32.mxu0 %v337
    %442 = vmatmul.mubr.f32.gmra.mxu0 %v336
    %v443 = vpop.f32.mrf.mxu0
    %v444 = vadd.f32 %v375, %v443
    %v445 = vpop.f32.mrf.mxu0
    %446 = vdwg.mxu0
    %v447 = vld [vmem:[%s7] sm:$0xff]
    %v448 = vld [vmem:[%s7 + $0x8] sm:$0xff]
    %v449 = vld [vmem:[%s7 + $0x10] sm:$0xff]
    %v450 = vld [vmem:[%s7 + $0x18] sm:$0xff]
    %v451 = vld [vmem:[%s7 + $0x20] sm:$0xff]
    %v452 = vld [vmem:[%s7 + $0x28] sm:$0xff]
    %v453 = vld [vmem:[%s7 + $0x30] sm:$0xff]
    %v454 = vld [vmem:[%s7 + $0x38] sm:$0xff]
    %v455 = vld [vmem:[%s7 + $0x40] sm:$0xff]
    %v456 = vld [vmem:[%s7 + $0x48] sm:$0xff]
    %v457 = vld [vmem:[%s7 + $0x50] sm:$0xff]
    %v458 = vld [vmem:[%s7 + $0x58] sm:$0xff]
    %v459 = vld [vmem:[%s7 + $0x60] sm:$0xff]
    %v460 = vld [vmem:[%s7 + $0x68] sm:$0xff]
    %v461 = vld [vmem:[%s7 + $0x70] sm:$0xff]
    %v462 = vld [vmem:[%s7 + $0x78] sm:$0xff]
    %v463 = vld [vmem:[%s7 + $0x80] sm:$0xff]
    %v464 = vld [vmem:[%s7 + $0x88] sm:$0xff]
    %v465 = vld [vmem:[%s7 + $0x90] sm:$0xff]
    %v466 = vld [vmem:[%s7 + $0x98] sm:$0xff]
    %v467 = vld [vmem:[%s7 + $0xa0] sm:$0xff]
    %v468 = vld [vmem:[%s7 + $0xa8] sm:$0xff]
    %v469 = vld [vmem:[%s7 + $0xb0] sm:$0xff]
    %v470 = vld [vmem:[%s7 + $0xb8] sm:$0xff]
    %v471 = vld [vmem:[%s7 + $0xc0] sm:$0xff]
    %v472 = vld [vmem:[%s7 + $0xc8] sm:$0xff]
    %v473 = vld [vmem:[%s7 + $0xd0] sm:$0xff]
    %v474 = vld [vmem:[%s7 + $0xd8] sm:$0xff]
    %v475 = vld [vmem:[%s7 + $0xe0] sm:$0xff]
    %v476 = vld [vmem:[%s7 + $0xe8] sm:$0xff]
    %v477 = vld [vmem:[%s7 + $0xf0] sm:$0xff]
    %v478 = vld [vmem:[%s7 + $0xf8] sm:$0xff]
    %v479 = vld [vmem:[%s8] sm:$0x1]
    %v481 = vlaneseq
    %v482 = vshrl.u32 %v481, 7
    %v483 = vsub.s32 0, %v482
    %v484 = vrot.slane %v479, %v483
    %486 = vmatprep.subr.mxu0 0.0
    %487 = vmatpush1.msra.mxu0 %v462
    %488 = vmatprep.subr.mxu0 0.0
    %489 = vmatpush1.msra.mxu0 %v461
    %490 = vmatprep.subr.mxu0 0.0
    %491 = vmatpush1.msra.mxu0 %v460
    %492 = vmatprep.subr.mxu0 0.0
    %493 = vmatpush1.msra.mxu0 %v459
    %494 = vmatprep.subr.mxu0 0.0
    %495 = vmatpush1.msra.mxu0 %v458
    %496 = vmatprep.subr.mxu0 0.0
    %497 = vmatpush1.msra.mxu0 %v457
    %498 = vmatprep.subr.mxu0 0.0
    %499 = vmatpush1.msra.mxu0 %v456
    %500 = vmatprep.subr.mxu0 0.0
    %501 = vmatpush1.msra.mxu0 %v455
    %502 = vmatprep.subr.mxu0 0.0
    %503 = vmatpush1.msra.mxu0 %v454
    %504 = vmatprep.subr.mxu0 0.0
    %505 = vmatpush1.msra.mxu0 %v453
    %506 = vmatprep.subr.mxu0 0.0
    %507 = vmatpush1.msra.mxu0 %v452
    %508 = vmatprep.subr.mxu0 0.0
    %509 = vmatpush1.msra.mxu0 %v451
    %510 = vmatprep.subr.mxu0 0.0
    %511 = vmatpush1.msra.mxu0 %v450
    %512 = vmatprep.subr.mxu0 0.0
    %513 = vmatpush1.msra.mxu0 %v449
    %514 = vmatprep.subr.mxu0 0.0
    %515 = vmatpush1.msra.mxu0 %v448
    %516 = vmatprep.subr.mxu0 0.0
    %517 = vmatpush1.msra.mxu0 %v447
    %518 = vmatprep.subr.mxu0 0.0
    %519 = vmatpush2.msra.mxu0 %v478
    %520 = vmatprep.subr.mxu0 0.0
    %521 = vmatpush2.msra.mxu0 %v477
    %522 = vmatprep.subr.mxu0 0.0
    %523 = vmatpush2.msra.mxu0 %v476
    %524 = vmatprep.subr.mxu0 0.0
    %525 = vmatpush2.msra.mxu0 %v475
    %526 = vmatprep.subr.mxu0 0.0
    %527 = vmatpush2.msra.mxu0 %v474
    %528 = vmatprep.subr.mxu0 0.0
    %529 = vmatpush2.msra.mxu0 %v473
    %530 = vmatprep.subr.mxu0 0.0
    %531 = vmatpush2.msra.mxu0 %v472
    %532 = vmatprep.subr.mxu0 0.0
    %533 = vmatpush2.msra.mxu0 %v471
    %534 = vmatprep.subr.mxu0 0.0
    %535 = vmatpush2.msra.mxu0 %v470
    %536 = vmatprep.subr.mxu0 0.0
    %537 = vmatpush2.msra.mxu0 %v469
    %538 = vmatprep.subr.mxu0 0.0
    %539 = vmatpush2.msra.mxu0 %v468
    %540 = vmatprep.subr.mxu0 0.0
    %541 = vmatpush2.msra.mxu0 %v467
    %542 = vmatprep.subr.mxu0 0.0
    %543 = vmatpush2.msra.mxu0 %v466
    %544 = vmatprep.subr.mxu0 0.0
    %545 = vmatpush2.msra.mxu0 %v465
    %546 = vmatprep.subr.mxu0 0.0
    %547 = vmatpush2.msra.mxu0 %v464
    %548 = vmatprep.subr.mxu0 0.0
    %549 = vmatpush2.msra.mxu0 %v463
    %550 = vmatprep.mubr.f32.mxu0 %v337
    %551 = vmatmul.mubr.f32.gmra.mxu0 %v336
    %v552 = vpop.f32.mrf.mxu0
    %v553 = vadd.f32 %v484, %v552
    %v554 = vpop.f32.mrf.mxu0
    %555 = vdwg.mxu0
    %v556 = vld [vmem:[%s9] sm:$0xff]
    %v557 = vld [vmem:[%s9 + $0x8] sm:$0xff]
    %v558 = vld [vmem:[%s9 + $0x10] sm:$0xff]
    %v559 = vld [vmem:[%s9 + $0x18] sm:$0xff]
    %v560 = vld [vmem:[%s9 + $0x20] sm:$0xff]
    %v561 = vld [vmem:[%s9 + $0x28] sm:$0xff]
    %v562 = vld [vmem:[%s9 + $0x30] sm:$0xff]
    %v563 = vld [vmem:[%s9 + $0x38] sm:$0xff]
    %v564 = vld [vmem:[%s9 + $0x40] sm:$0xff]
    %v565 = vld [vmem:[%s9 + $0x48] sm:$0xff]
    %v566 = vld [vmem:[%s9 + $0x50] sm:$0xff]
    %v567 = vld [vmem:[%s9 + $0x58] sm:$0xff]
    %v568 = vld [vmem:[%s9 + $0x60] sm:$0xff]
    %v569 = vld [vmem:[%s9 + $0x68] sm:$0xff]
    %v570 = vld [vmem:[%s9 + $0x70] sm:$0xff]
    %v571 = vld [vmem:[%s9 + $0x78] sm:$0xff]
    %v572 = vld [vmem:[%s9 + $0x80] sm:$0xff]
    %v573 = vld [vmem:[%s9 + $0x88] sm:$0xff]
    %v574 = vld [vmem:[%s9 + $0x90] sm:$0xff]
    %v575 = vld [vmem:[%s9 + $0x98] sm:$0xff]
    %v576 = vld [vmem:[%s9 + $0xa0] sm:$0xff]
    %v577 = vld [vmem:[%s9 + $0xa8] sm:$0xff]
    %v578 = vld [vmem:[%s9 + $0xb0] sm:$0xff]
    %v579 = vld [vmem:[%s9 + $0xb8] sm:$0xff]
    %v580 = vld [vmem:[%s9 + $0xc0] sm:$0xff]
    %v581 = vld [vmem:[%s9 + $0xc8] sm:$0xff]
    %v582 = vld [vmem:[%s9 + $0xd0] sm:$0xff]
    %v583 = vld [vmem:[%s9 + $0xd8] sm:$0xff]
    %v584 = vld [vmem:[%s9 + $0xe0] sm:$0xff]
    %v585 = vld [vmem:[%s9 + $0xe8] sm:$0xff]
    %v586 = vld [vmem:[%s9 + $0xf0] sm:$0xff]
    %v587 = vld [vmem:[%s9 + $0xf8] sm:$0xff]
    %v588 = vld [vmem:[%s10] sm:$0x1]
    %v590 = vlaneseq
    %v591 = vshrl.u32 %v590, 7
    %v592 = vsub.s32 0, %v591
    %v593 = vrot.slane %v588, %v592
    %595 = vmatprep.subr.mxu0 0.0
    %596 = vmatpush1.msra.mxu0 %v571
    %597 = vmatprep.subr.mxu0 0.0
    %598 = vmatpush1.msra.mxu0 %v570
    %599 = vmatprep.subr.mxu0 0.0
    %600 = vmatpush1.msra.mxu0 %v569
    %601 = vmatprep.subr.mxu0 0.0
    %602 = vmatpush1.msra.mxu0 %v568
    %603 = vmatprep.subr.mxu0 0.0
    %604 = vmatpush1.msra.mxu0 %v567
    %605 = vmatprep.subr.mxu0 0.0
    %606 = vmatpush1.msra.mxu0 %v566
    %607 = vmatprep.subr.mxu0 0.0
    %608 = vmatpush1.msra.mxu0 %v565
    %609 = vmatprep.subr.mxu0 0.0
    %610 = vmatpush1.msra.mxu0 %v564
    %611 = vmatprep.subr.mxu0 0.0
    %612 = vmatpush1.msra.mxu0 %v563
    %613 = vmatprep.subr.mxu0 0.0
    %614 = vmatpush1.msra.mxu0 %v562
    %615 = vmatprep.subr.mxu0 0.0
    %616 = vmatpush1.msra.mxu0 %v561
    %617 = vmatprep.subr.mxu0 0.0
    %618 = vmatpush1.msra.mxu0 %v560
    %619 = vmatprep.subr.mxu0 0.0
    %620 = vmatpush1.msra.mxu0 %v559
    %621 = vmatprep.subr.mxu0 0.0
    %622 = vmatpush1.msra.mxu0 %v558
    %623 = vmatprep.subr.mxu0 0.0
    %624 = vmatpush1.msra.mxu0 %v557
    %625 = vmatprep.subr.mxu0 0.0
    %626 = vmatpush1.msra.mxu0 %v556
    %627 = vmatprep.subr.mxu0 0.0
    %628 = vmatpush2.msra.mxu0 %v587
    %629 = vmatprep.subr.mxu0 0.0
    %630 = vmatpush2.msra.mxu0 %v586
    %631 = vmatprep.subr.mxu0 0.0
    %632 = vmatpush2.msra.mxu0 %v585
    %633 = vmatprep.subr.mxu0 0.0
    %634 = vmatpush2.msra.mxu0 %v584
    %635 = vmatprep.subr.mxu0 0.0
    %636 = vmatpush2.msra.mxu0 %v583
    %637 = vmatprep.subr.mxu0 0.0
    %638 = vmatpush2.msra.mxu0 %v582
    %639 = vmatprep.subr.mxu0 0.0
    %640 = vmatpush2.msra.mxu0 %v581
    %641 = vmatprep.subr.mxu0 0.0
    %642 = vmatpush2.msra.mxu0 %v580
    %643 = vmatprep.subr.mxu0 0.0
    %644 = vmatpush2.msra.mxu0 %v579
    %645 = vmatprep.subr.mxu0 0.0
    %646 = vmatpush2.msra.mxu0 %v578
    %647 = vmatprep.subr.mxu0 0.0
    %648 = vmatpush2.msra.mxu0 %v577
    %649 = vmatprep.subr.mxu0 0.0
    %650 = vmatpush2.msra.mxu0 %v576
    %651 = vmatprep.subr.mxu0 0.0
    %652 = vmatpush2.msra.mxu0 %v575
    %653 = vmatprep.subr.mxu0 0.0
    %654 = vmatpush2.msra.mxu0 %v574
    %655 = vmatprep.subr.mxu0 0.0
    %656 = vmatpush2.msra.mxu0 %v573
    %657 = vmatprep.subr.mxu0 0.0
    %658 = vmatpush2.msra.mxu0 %v572
    %659 = vmatprep.mubr.f32.mxu0 %v337
    %660 = vmatmul.mubr.f32.gmra.mxu0 %v336
    %v661 = vpop.f32.mrf.mxu0
    %v662 = vadd.f32 %v593, %v661
    %v663 = vpop.f32.mrf.mxu0
    %664 = vdwg.mxu0
    %v665 = vsub.f32 0.0, %v444
    %v666 = vmul.f32 %v665, 1.442695
    %v667 = vpow.pop %v666
    %v668 = vadd.f32 %v667, 1.0
    %v669 = vrcp.pop %v668
    %v670 = vmul.f32 1.0, %v669
    %vm671 = vcmask 25600
    %672 = vst.msk [vmem:[#allocation2] sm:$0x3] %vm671, %v670
    %673 = vst.msk [vmem:[#allocation4] sm:$0x3] %vm671, %v553
    %674 = vst.msk [vmem:[#allocation6] sm:$0x3] %vm671, %v662
    %v675 = vld [vmem:[%s11] sm:$0x3]
    %v676 = vadd.f32 %v675, 1e-20
    %v677 = vlog2.pop %v676
    %v678 = vmul.f32 %v677, 0.6931472
    %v679 = vsub.f32 1.0, %v675
    %v680 = vadd.f32 %v679, 1e-20
    %v681 = vlog2.pop %v680
    %v682 = vmul.f32 %v681, 0.6931472
    %v683 = vsub.f32 %v678, %v682
    %v684 = vadd.f32 %v683, %v444
    %v685 = vsub.f32 0.0, %v684
    %v686 = vmul.f32 %v685, 1.442695
    %v687 = vpow.pop %v686
    %v688 = vadd.f32 %v687, 1.0
    %v689 = vrcp.pop %v688
    %v690 = vmul.f32 1.0, %v689
    %v691 = vmul.f32 %v662, 0.5
    %v692 = vmul.f32 %v691, 1.442695
    %v693 = vpow.pop %v692
    %v694 = vld [vmem:[%s12] sm:$0x3]
    %v695 = vmul.f32 %v693, %v694
    %v696 = vadd.f32 %v553, %v695
    %v697 = vld [vmem:[%s13] sm:$0xff]
    %v698 = vld [vmem:[%s14] sm:$0xff]
    %v700 = vcombine.high %v698, %v698
    %vm701 = vcmask 31744
    %v703 = vsel %vm701, %v696, 0
    %vm705 = vcmask 1043456
    %v706 = vsel %vm705, %v698, 0
    %v708 = vsel %vm705, %v700, 0
    %710 = vmatprep.subr.mxu0 0.0
    %711 = vmatpush1.msra.mxu0 0.0
    %712 = vmatprep.subr.mxu0 0.0
    %713 = vmatpush1.msra.mxu0 0.0
    %714 = vmatprep.subr.mxu0 0.0
    %715 = vmatpush1.msra.mxu0 0.0
    %716 = vmatprep.subr.mxu0 0.0
    %717 = vmatpush1.msra.mxu0 0.0
    %718 = vmatprep.subr.mxu0 0.0
    %719 = vmatpush1.msra.mxu0 0.0
    %720 = vmatprep.subr.mxu0 0.0
    %721 = vmatpush1.msra.mxu0 0.0
    %722 = vmatprep.subr.mxu0 0.0
    %723 = vmatpush1.msra.mxu0 0.0
    %724 = vmatprep.subr.mxu0 0.0
    %725 = vmatpush1.msra.mxu0 0.0
    %726 = vmatprep.subr.mxu0 0.0
    %727 = vmatpush1.msra.mxu0 0.0
    %728 = vmatprep.subr.mxu0 0.0
    %729 = vmatpush1.msra.mxu0 0.0
    %730 = vmatprep.subr.mxu0 0.0
    %731 = vmatpush1.msra.mxu0 0.0
    %732 = vmatprep.subr.mxu0 0.0
    %733 = vmatpush1.msra.mxu0 0.0
    %734 = vmatprep.subr.mxu0 0.0
    %735 = vmatpush1.msra.mxu0 0.0
    %736 = vmatprep.subr.mxu0 0.0
    %737 = vmatpush1.msra.mxu0 0.0
    %738 = vmatprep.subr.mxu0 0.0
    %739 = vmatpush1.msra.mxu0 0.0
    %740 = vmatprep.subr.mxu0 %v708
    %741 = vmatpush1.msra.mxu0 %v706
    %742 = vmatprep.subr.mxu0 0.0
    %743 = vmatpush2.msra.mxu0 0.0
    %744 = vmatprep.subr.mxu0 0.0
    %745 = vmatpush2.msra.mxu0 0.0
    %746 = vmatprep.subr.mxu0 0.0
    %747 = vmatpush2.msra.mxu0 0.0
    %748 = vmatprep.subr.mxu0 0.0
    %749 = vmatpush2.msra.mxu0 0.0
    %750 = vmatprep.subr.mxu0 0.0
    %751 = vmatpush2.msra.mxu0 0.0
    %752 = vmatprep.subr.mxu0 0.0
    %753 = vmatpush2.msra.mxu0 0.0
    %754 = vmatprep.subr.mxu0 0.0
    %755 = vmatpush2.msra.mxu0 0.0
    %756 = vmatprep.subr.mxu0 0.0
    %757 = vmatpush2.msra.mxu0 0.0
    %758 = vmatprep.subr.mxu0 0.0
    %759 = vmatpush2.msra.mxu0 0.0
    %760 = vmatprep.subr.mxu0 0.0
    %761 = vmatpush2.msra.mxu0 0.0
    %762 = vmatprep.subr.mxu0 0.0
    %763 = vmatpush2.msra.mxu0 0.0
    %764 = vmatprep.subr.mxu0 0.0
    %765 = vmatpush2.msra.mxu0 0.0
    %766 = vmatprep.subr.mxu0 0.0
    %767 = vmatpush2.msra.mxu0 0.0
    %768 = vmatprep.subr.mxu0 0.0
    %769 = vmatpush2.msra.mxu0 0.0
    %770 = vmatprep.subr.mxu0 0.0
    %771 = vmatpush2.msra.mxu0 0.0
    %772 = vmatprep.subr.mxu0 0.0
    %773 = vmatpush2.msra.mxu0 0.0
    %774 = vmatprep.mubr.f32.mxu0 0.0
    %775 = vmatmul.mubr.f32.gmra.mxu0 %v703
    %v776 = vpop.f32.mrf.mxu0
    %v777 = vadd.f32 0.0, %v776
    %v778 = vpop.f32.mrf.mxu0
    %v779 = vadd.f32 0.0, %v778
    %780 = vdwg.mxu0
    %v782 = vcombine.high %v697, %v697
    %v784 = vsel %vm701, %v690, 0
    %v786 = vsel %vm705, %v697, 0
    %v788 = vsel %vm705, %v782, 0
    %790 = vmatprep.subr.mxu0 0.0
    %791 = vmatpush1.msra.mxu0 0.0
    %792 = vmatprep.subr.mxu0 0.0
    %793 = vmatpush1.msra.mxu0 0.0
    %794 = vmatprep.subr.mxu0 0.0
    %795 = vmatpush1.msra.mxu0 0.0
    %796 = vmatprep.subr.mxu0 0.0
    %797 = vmatpush1.msra.mxu0 0.0
    %798 = vmatprep.subr.mxu0 0.0
    %799 = vmatpush1.msra.mxu0 0.0
    %800 = vmatprep.subr.mxu0 0.0
    %801 = vmatpush1.msra.mxu0 0.0
    %802 = vmatprep.subr.mxu0 0.0
    %803 = vmatpush1.msra.mxu0 0.0
    %804 = vmatprep.subr.mxu0 0.0
    %805 = vmatpush1.msra.mxu0 0.0
    %806 = vmatprep.subr.mxu0 0.0
    %807 = vmatpush1.msra.mxu0 0.0
    %808 = vmatprep.subr.mxu0 0.0
    %809 = vmatpush1.msra.mxu0 0.0
    %810 = vmatprep.subr.mxu0 0.0
    %811 = vmatpush1.msra.mxu0 0.0
    %812 = vmatprep.subr.mxu0 0.0
    %813 = vmatpush1.msra.mxu0 0.0
    %814 = vmatprep.subr.mxu0 0.0
    %815 = vmatpush1.msra.mxu0 0.0
    %816 = vmatprep.subr.mxu0 0.0
    %817 = vmatpush1.msra.mxu0 0.0
    %818 = vmatprep.subr.mxu0 0.0
    %819 = vmatpush1.msra.mxu0 0.0
    %820 = vmatprep.subr.mxu0 %v788
    %821 = vmatpush1.msra.mxu0 %v786
    %822 = vmatprep.subr.mxu0 0.0
    %823 = vmatpush2.msra.mxu0 0.0
    %824 = vmatprep.subr.mxu0 0.0
    %825 = vmatpush2.msra.mxu0 0.0
    %826 = vmatprep.subr.mxu0 0.0
    %827 = vmatpush2.msra.mxu0 0.0
    %828 = vmatprep.subr.mxu0 0.0
    %829 = vmatpush2.msra.mxu0 0.0
    %830 = vmatprep.subr.mxu0 0.0
    %831 = vmatpush2.msra.mxu0 0.0
    %832 = vmatprep.subr.mxu0 0.0
    %833 = vmatpush2.msra.mxu0 0.0
    %834 = vmatprep.subr.mxu0 0.0
    %835 = vmatpush2.msra.mxu0 0.0
    %836 = vmatprep.subr.mxu0 0.0
    %837 = vmatpush2.msra.mxu0 0.0
    %838 = vmatprep.subr.mxu0 0.0
    %839 = vmatpush2.msra.mxu0 0.0
    %840 = vmatprep.subr.mxu0 0.0
    %841 = vmatpush2.msra.mxu0 0.0
    %842 = vmatprep.subr.mxu0 0.0
    %843 = vmatpush2.msra.mxu0 0.0
    %844 = vmatprep.subr.mxu0 0.0
    %845 = vmatpush2.msra.mxu0 0.0
    %846 = vmatprep.subr.mxu0 0.0
    %847 = vmatpush2.msra.mxu0 0.0
    %848 = vmatprep.subr.mxu0 0.0
    %849 = vmatpush2.msra.mxu0 0.0
    %850 = vmatprep.subr.mxu0 0.0
    %851 = vmatpush2.msra.mxu0 0.0
    %852 = vmatprep.subr.mxu0 0.0
    %853 = vmatpush2.msra.mxu0 0.0
    %854 = vmatprep.mubr.f32.mxu0 0.0
    %855 = vmatmul.mubr.f32.gmra.mxu0 %v784
    %v856 = vpop.f32.mrf.mxu0
    %v857 = vadd.f32 %v777, %v856
    %v858 = vpop.f32.mrf.mxu0
    %v859 = vadd.f32 %v779, %v858
    %860 = vdwg.mxu0
    %v861 = vld [vmem:[%s15] sm:$0x3]
    %v863 = vlaneseq
    %v864 = vshrl.u32 %v863, 7
    %v865 = vsub.s32 0, %v864
    %v866 = vrot.slane %v861, %v865
    %v867 = vlaneseq
    %v868 = vshrl.u32 %v867, 7
    %v869 = vsub.s32 1, %v868
    %v870 = vrot.slane %v861, %v869
    %v873 = vadd.f32 %v857, %v866
    %v874 = vadd.f32 %v859, %v870
    %v875 = vmax.f32 %v873, 0.0
    %v876 = vmax.f32 %v874, 0.0
    %v877 = vld [vmem:[%s16] sm:$0xff]
    %v878 = vld [vmem:[%s16 + $0x8] sm:$0xff]
    %v879 = vld [vmem:[%s16 + $0x10] sm:$0xff]
    %v880 = vld [vmem:[%s16 + $0x18] sm:$0xff]
    %v881 = vld [vmem:[%s16 + $0x20] sm:$0xff]
    %v882 = vld [vmem:[%s16 + $0x28] sm:$0xff]
    %v883 = vld [vmem:[%s16 + $0x30] sm:$0xff]
    %v884 = vld [vmem:[%s16 + $0x38] sm:$0xff]
    %v885 = vld [vmem:[%s16 + $0x40] sm:$0xff]
    %v886 = vld [vmem:[%s16 + $0x48] sm:$0xff]
    %v887 = vld [vmem:[%s16 + $0x50] sm:$0xff]
    %v888 = vld [vmem:[%s16 + $0x58] sm:$0xff]
    %v889 = vld [vmem:[%s16 + $0x60] sm:$0xff]
    %v890 = vld [vmem:[%s16 + $0x68] sm:$0xff]
    %v891 = vld [vmem:[%s16 + $0x70] sm:$0xff]
    %v892 = vld [vmem:[%s16 + $0x78] sm:$0xff]
    %v893 = vld [vmem:[%s16 + $0x80] sm:$0xff]
    %v894 = vld [vmem:[%s16 + $0x88] sm:$0xff]
    %v895 = vld [vmem:[%s16 + $0x90] sm:$0xff]
    %v896 = vld [vmem:[%s16 + $0x98] sm:$0xff]
    %v897 = vld [vmem:[%s16 + $0xa0] sm:$0xff]
    %v898 = vld [vmem:[%s16 + $0xa8] sm:$0xff]
    %v899 = vld [vmem:[%s16 + $0xb0] sm:$0xff]
    %v900 = vld [vmem:[%s16 + $0xb8] sm:$0xff]
    %v901 = vld [vmem:[%s16 + $0xc0] sm:$0xff]
    %v902 = vld [vmem:[%s16 + $0xc8] sm:$0xff]
    %v903 = vld [vmem:[%s16 + $0xd0] sm:$0xff]
    %v904 = vld [vmem:[%s16 + $0xd8] sm:$0xff]
    %v905 = vld [vmem:[%s16 + $0xe0] sm:$0xff]
    %v906 = vld [vmem:[%s16 + $0xe8] sm:$0xff]
    %v907 = vld [vmem:[%s16 + $0xf0] sm:$0xff]
    %v908 = vld [vmem:[%s16 + $0xf8] sm:$0xff]
    %v909 = vld [vmem:[%s16 + $0x100] sm:$0xff]
    %v910 = vld [vmem:[%s16 + $0x108] sm:$0xff]
    %v911 = vld [vmem:[%s16 + $0x110] sm:$0xff]
    %v912 = vld [vmem:[%s16 + $0x118] sm:$0xff]
    %v913 = vld [vmem:[%s16 + $0x120] sm:$0xff]
    %v914 = vld [vmem:[%s16 + $0x128] sm:$0xff]
    %v915 = vld [vmem:[%s16 + $0x130] sm:$0xff]
    %v916 = vld [vmem:[%s16 + $0x138] sm:$0xff]
    %v917 = vld [vmem:[%s16 + $0x140] sm:$0xff]
    %v918 = vld [vmem:[%s16 + $0x148] sm:$0xff]
    %v919 = vld [vmem:[%s16 + $0x150] sm:$0xff]
    %v920 = vld [vmem:[%s16 + $0x158] sm:$0xff]
    %v921 = vld [vmem:[%s16 + $0x160] sm:$0xff]
    %v922 = vld [vmem:[%s16 + $0x168] sm:$0xff]
    %v923 = vld [vmem:[%s16 + $0x170] sm:$0xff]
    %v924 = vld [vmem:[%s16 + $0x178] sm:$0xff]
    %v925 = vld [vmem:[%s16 + $0x180] sm:$0xff]
    %v926 = vld [vmem:[%s16 + $0x188] sm:$0xff]
    %v927 = vld [vmem:[%s16 + $0x190] sm:$0xff]
    %v928 = vld [vmem:[%s16 + $0x198] sm:$0xff]
    %v929 = vld [vmem:[%s16 + $0x1a0] sm:$0xff]
    %v930 = vld [vmem:[%s16 + $0x1a8] sm:$0xff]
    %v931 = vld [vmem:[%s16 + $0x1b0] sm:$0xff]
    %v932 = vld [vmem:[%s16 + $0x1b8] sm:$0xff]
    %v933 = vld [vmem:[%s16 + $0x1c0] sm:$0xff]
    %v934 = vld [vmem:[%s16 + $0x1c8] sm:$0xff]
    %v935 = vld [vmem:[%s16 + $0x1d0] sm:$0xff]
    %v936 = vld [vmem:[%s16 + $0x1d8] sm:$0xff]
    %v937 = vld [vmem:[%s16 + $0x1e0] sm:$0xff]
    %v938 = vld [vmem:[%s16 + $0x1e8] sm:$0xff]
    %v939 = vld [vmem:[%s16 + $0x1f0] sm:$0xff]
    %v940 = vld [vmem:[%s16 + $0x1f8] sm:$0xff]
    %v941 = vld [vmem:[%s17] sm:$0x3]
    %v943 = vlaneseq
    %v944 = vshrl.u32 %v943, 7
    %v945 = vsub.s32 0, %v944
    %v946 = vrot.slane %v941, %v945
    %v947 = vlaneseq
    %v948 = vshrl.u32 %v947, 7
    %v949 = vsub.s32 1, %v948
    %v950 = vrot.slane %v941, %v949
    %953 = vmatprep.subr.mxu0 %v908
    %954 = vmatpush1.msra.mxu0 %v907
    %955 = vmatprep.subr.mxu0 %v906
    %956 = vmatpush1.msra.mxu0 %v905
    %957 = vmatprep.subr.mxu0 %v904
    %958 = vmatpush1.msra.mxu0 %v903
    %959 = vmatprep.subr.mxu0 %v902
    %960 = vmatpush1.msra.mxu0 %v901
    %961 = vmatprep.subr.mxu0 %v900
    %962 = vmatpush1.msra.mxu0 %v899
    %963 = vmatprep.subr.mxu0 %v898
    %964 = vmatpush1.msra.mxu0 %v897
    %965 = vmatprep.subr.mxu0 %v896
    %966 = vmatpush1.msra.mxu0 %v895
    %967 = vmatprep.subr.mxu0 %v894
    %968 = vmatpush1.msra.mxu0 %v893
    %969 = vmatprep.subr.mxu0 %v892
    %970 = vmatpush1.msra.mxu0 %v891
    %971 = vmatprep.subr.mxu0 %v890
    %972 = vmatpush1.msra.mxu0 %v889
    %973 = vmatprep.subr.mxu0 %v888
    %974 = vmatpush1.msra.mxu0 %v887
    %975 = vmatprep.subr.mxu0 %v886
    %976 = vmatpush1.msra.mxu0 %v885
    %977 = vmatprep.subr.mxu0 %v884
    %978 = vmatpush1.msra.mxu0 %v883
    %979 = vmatprep.subr.mxu0 %v882
    %980 = vmatpush1.msra.mxu0 %v881
    %981 = vmatprep.subr.mxu0 %v880
    %982 = vmatpush1.msra.mxu0 %v879
    %983 = vmatprep.subr.mxu0 %v878
    %984 = vmatpush1.msra.mxu0 %v877
    %985 = vmatprep.subr.mxu0 %v940
    %986 = vmatpush2.msra.mxu0 %v939
    %987 = vmatprep.subr.mxu0 %v938
    %988 = vmatpush2.msra.mxu0 %v937
    %989 = vmatprep.subr.mxu0 %v936
    %990 = vmatpush2.msra.mxu0 %v935
    %991 = vmatprep.subr.mxu0 %v934
    %992 = vmatpush2.msra.mxu0 %v933
    %993 = vmatprep.subr.mxu0 %v932
    %994 = vmatpush2.msra.mxu0 %v931
    %995 = vmatprep.subr.mxu0 %v930
    %996 = vmatpush2.msra.mxu0 %v929
    %997 = vmatprep.subr.mxu0 %v928
    %998 = vmatpush2.msra.mxu0 %v927
    %999 = vmatprep.subr.mxu0 %v926
    %1000 = vmatpush2.msra.mxu0 %v925
    %1001 = vmatprep.subr.mxu0 %v924
    %1002 = vmatpush2.msra.mxu0 %v923
    %1003 = vmatprep.subr.mxu0 %v922
    %1004 = vmatpush2.msra.mxu0 %v921
    %1005 = vmatprep.subr.mxu0 %v920
    %1006 = vmatpush2.msra.mxu0 %v919
    %1007 = vmatprep.subr.mxu0 %v918
    %1008 = vmatpush2.msra.mxu0 %v917
    %1009 = vmatprep.subr.mxu0 %v916
    %1010 = vmatpush2.msra.mxu0 %v915
    %1011 = vmatprep.subr.mxu0 %v914
    %1012 = vmatpush2.msra.mxu0 %v913
    %1013 = vmatprep.subr.mxu0 %v912
    %1014 = vmatpush2.msra.mxu0 %v911
    %1015 = vmatprep.subr.mxu0 %v910
    %1016 = vmatpush2.msra.mxu0 %v909
    %1017 = vmatprep.mubr.f32.mxu0 %v876
    %1018 = vmatmul.mubr.f32.gmra.mxu0 %v875
    %v1019 = vpop.f32.mrf.mxu0
    %v1020 = vadd.f32 %v946, %v1019
    %v1021 = vpop.f32.mrf.mxu0
    %v1022 = vadd.f32 %v950, %v1021
    %1023 = vdwg.mxu0
    %v1024 = vmax.f32 %v1020, 0.0
    %v1025 = vmax.f32 %v1022, 0.0
    %v1026 = vld [vmem:[%s18] sm:$0xff]
    %v1027 = vld [vmem:[%s18 + $0x8] sm:$0xff]
    %v1028 = vld [vmem:[%s18 + $0x10] sm:$0xff]
    %v1029 = vld [vmem:[%s18 + $0x18] sm:$0xff]
    %v1030 = vld [vmem:[%s18 + $0x20] sm:$0xff]
    %v1031 = vld [vmem:[%s18 + $0x28] sm:$0xff]
    %v1032 = vld [vmem:[%s18 + $0x30] sm:$0xff]
    %v1033 = vld [vmem:[%s18 + $0x38] sm:$0xff]
    %v1034 = vld [vmem:[%s18 + $0x40] sm:$0xff]
    %v1035 = vld [vmem:[%s18 + $0x48] sm:$0xff]
    %v1036 = vld [vmem:[%s18 + $0x50] sm:$0xff]
    %v1037 = vld [vmem:[%s18 + $0x58] sm:$0xff]
    %v1038 = vld [vmem:[%s18 + $0x60] sm:$0xff]
    %v1039 = vld [vmem:[%s18 + $0x68] sm:$0xff]
    %v1040 = vld [vmem:[%s18 + $0x70] sm:$0xff]
    %v1041 = vld [vmem:[%s18 + $0x78] sm:$0xff]
    %v1042 = vld [vmem:[%s18 + $0x80] sm:$0xff]
    %v1043 = vld [vmem:[%s18 + $0x88] sm:$0xff]
    %v1044 = vld [vmem:[%s18 + $0x90] sm:$0xff]
    %v1045 = vld [vmem:[%s18 + $0x98] sm:$0xff]
    %v1046 = vld [vmem:[%s18 + $0xa0] sm:$0xff]
    %v1047 = vld [vmem:[%s18 + $0xa8] sm:$0xff]
    %v1048 = vld [vmem:[%s18 + $0xb0] sm:$0xff]
    %v1049 = vld [vmem:[%s18 + $0xb8] sm:$0xff]
    %v1050 = vld [vmem:[%s18 + $0xc0] sm:$0xff]
    %v1051 = vld [vmem:[%s18 + $0xc8] sm:$0xff]
    %v1052 = vld [vmem:[%s18 + $0xd0] sm:$0xff]
    %v1053 = vld [vmem:[%s18 + $0xd8] sm:$0xff]
    %v1054 = vld [vmem:[%s18 + $0xe0] sm:$0xff]
    %v1055 = vld [vmem:[%s18 + $0xe8] sm:$0xff]
    %v1056 = vld [vmem:[%s18 + $0xf0] sm:$0xff]
    %v1057 = vld [vmem:[%s18 + $0xf8] sm:$0xff]
    %v1058 = vld [vmem:[%s19] sm:$0x1]
    %v1060 = vlaneseq
    %v1061 = vshrl.u32 %v1060, 7
    %v1062 = vsub.s32 0, %v1061
    %v1063 = vrot.slane %v1058, %v1062
    %1065 = vmatprep.subr.mxu0 0.0
    %1066 = vmatpush1.msra.mxu0 %v1041
    %1067 = vmatprep.subr.mxu0 0.0
    %1068 = vmatpush1.msra.mxu0 %v1040
    %1069 = vmatprep.subr.mxu0 0.0
    %1070 = vmatpush1.msra.mxu0 %v1039
    %1071 = vmatprep.subr.mxu0 0.0
    %1072 = vmatpush1.msra.mxu0 %v1038
    %1073 = vmatprep.subr.mxu0 0.0
    %1074 = vmatpush1.msra.mxu0 %v1037
    %1075 = vmatprep.subr.mxu0 0.0
    %1076 = vmatpush1.msra.mxu0 %v1036
    %1077 = vmatprep.subr.mxu0 0.0
    %1078 = vmatpush1.msra.mxu0 %v1035
    %1079 = vmatprep.subr.mxu0 0.0
    %1080 = vmatpush1.msra.mxu0 %v1034
    %1081 = vmatprep.subr.mxu0 0.0
    %1082 = vmatpush1.msra.mxu0 %v1033
    %1083 = vmatprep.subr.mxu0 0.0
    %1084 = vmatpush1.msra.mxu0 %v1032
    %1085 = vmatprep.subr.mxu0 0.0
    %1086 = vmatpush1.msra.mxu0 %v1031
    %1087 = vmatprep.subr.mxu0 0.0
    %1088 = vmatpush1.msra.mxu0 %v1030
    %1089 = vmatprep.subr.mxu0 0.0
    %1090 = vmatpush1.msra.mxu0 %v1029
    %1091 = vmatprep.subr.mxu0 0.0
    %1092 = vmatpush1.msra.mxu0 %v1028
    %1093 = vmatprep.subr.mxu0 0.0
    %1094 = vmatpush1.msra.mxu0 %v1027
    %1095 = vmatprep.subr.mxu0 0.0
    %1096 = vmatpush1.msra.mxu0 %v1026
    %1097 = vmatprep.subr.mxu0 0.0
    %1098 = vmatpush2.msra.mxu0 %v1057
    %1099 = vmatprep.subr.mxu0 0.0
    %1100 = vmatpush2.msra.mxu0 %v1056
    %1101 = vmatprep.subr.mxu0 0.0
    %1102 = vmatpush2.msra.mxu0 %v1055
    %1103 = vmatprep.subr.mxu0 0.0
    %1104 = vmatpush2.msra.mxu0 %v1054
    %1105 = vmatprep.subr.mxu0 0.0
    %1106 = vmatpush2.msra.mxu0 %v1053
    %1107 = vmatprep.subr.mxu0 0.0
    %1108 = vmatpush2.msra.mxu0 %v1052
    %1109 = vmatprep.subr.mxu0 0.0
    %1110 = vmatpush2.msra.mxu0 %v1051
    %1111 = vmatprep.subr.mxu0 0.0
    %1112 = vmatpush2.msra.mxu0 %v1050
    %1113 = vmatprep.subr.mxu0 0.0
    %1114 = vmatpush2.msra.mxu0 %v1049
    %1115 = vmatprep.subr.mxu0 0.0
    %1116 = vmatpush2.msra.mxu0 %v1048
    %1117 = vmatprep.subr.mxu0 0.0
    %1118 = vmatpush2.msra.mxu0 %v1047
    %1119 = vmatprep.subr.mxu0 0.0
    %1120 = vmatpush2.msra.mxu0 %v1046
    %1121 = vmatprep.subr.mxu0 0.0
    %1122 = vmatpush2.msra.mxu0 %v1045
    %1123 = vmatprep.subr.mxu0 0.0
    %1124 = vmatpush2.msra.mxu0 %v1044
    %1125 = vmatprep.subr.mxu0 0.0
    %1126 = vmatpush2.msra.mxu0 %v1043
    %1127 = vmatprep.subr.mxu0 0.0
    %1128 = vmatpush2.msra.mxu0 %v1042
    %1129 = vmatprep.mubr.f32.mxu0 %v1025
    %1130 = vmatmul.mubr.f32.gmra.mxu0 %v1024
    %v1131 = vpop.f32.mrf.mxu0
    %v1132 = vadd.f32 %v1063, %v1131
    %v1133 = vpop.f32.mrf.mxu0
    %1134 = vdwg.mxu0
    %v1135 = vmax.f32 %v1132, 0.0
    %1136 = vst [vmem:[%s23] sm:$0x3] %v1135
    // Predicated region
    $region82: #{ff_hybrid_vae_forward.12} parent=1 // pred_check
      _
    $region83: #{ff_hybrid_vae_forward.12} parent=1 // pred_check_branch
      %1138 = sbr.rel (0) target = $region85
    $region84: #{ff_hybrid_vae_forward.12} parent=1 // pred_region
      %s1140 = ssub.s32 32, 32
      %1141 = vsyncadd [#allocation3], %s1140
      %s1143 = sshll.u32 [#allocation2], 4
      %s1144 = int_to_ptr.vmem [resolvable:$true] %s1143
      %1146 = dma.vmem_to_hbm [thread:$0]  %s1144, 32, %s20, [#allocation3]
    $region85: #{ff_hybrid_vae_forward.12} parent=1 // pred_fallthru
      _
    // Predicated region
    $region86: #{ff_hybrid_vae_forward.12} parent=1 // pred_check
      _
    $region87: #{ff_hybrid_vae_forward.12} parent=1 // pred_check_branch
      %1148 = sbr.rel (0) target = $region89
    $region88: #{ff_hybrid_vae_forward.12} parent=1 // pred_region
      %s1150 = ssub.s32 32, 32
      %1151 = vsyncadd [#allocation5], %s1150
      %s1153 = sshll.u32 [#allocation4], 4
      %s1154 = int_to_ptr.vmem [resolvable:$true] %s1153
      %1156 = dma.vmem_to_hbm [thread:$0]  %s1154, 32, %s21, [#allocation5]
    $region89: #{ff_hybrid_vae_forward.12} parent=1 // pred_fallthru
      _
    // Predicated region
    $region90: #{ff_hybrid_vae_forward.12} parent=1 // pred_check
      _
    $region91: #{ff_hybrid_vae_forward.12} parent=1 // pred_check_branch
      %1158 = sbr.rel (0) target = $region93
    $region92: #{ff_hybrid_vae_forward.12} parent=1 // pred_region
      %s1160 = ssub.s32 32, 32
      %1161 = vsyncadd [#allocation5], %s1160
      %s1163 = sshll.u32 [#allocation6], 4
      %s1164 = int_to_ptr.vmem [resolvable:$true] %s1163
      %1166 = dma.vmem_to_hbm [thread:$0]  %s1164, 32, %s22, [#allocation5]
    $region93: #{ff_hybrid_vae_forward.12} parent=1 // pred_fallthru
      _
    // Predicated region
    $region94: #{ff_hybrid_vae_forward.12} parent=1 // pred_check
      _
    $region95: #{ff_hybrid_vae_forward.12} parent=1 // pred_check_branch
      %1168 = sbr.rel (0) target = $region97
    $region96: #{ff_hybrid_vae_forward.12} parent=1 // pred_region
      _
    $region97: #{ff_hybrid_vae_forward.12} parent=1 // pred_fallthru
      _
    // Predicated region
    $region98: #{ff_hybrid_vae_forward.12} parent=1 // pred_check
      _
    $region99: #{ff_hybrid_vae_forward.12} parent=1 // pred_check_branch
      %1170 = sbr.rel (0) target = $region101
    $region100: #{ff_hybrid_vae_forward.12} parent=1 // pred_region
      %1171 = dma.done [#allocation3], 32
    $region101: #{ff_hybrid_vae_forward.12} parent=1 // pred_fallthru
      _
    // Predicated region
    $region102: #{ff_hybrid_vae_forward.12} parent=1 // pred_check
      _
    $region103: #{ff_hybrid_vae_forward.12} parent=1 // pred_check_branch
      %1173 = sbr.rel (0) target = $region105
    $region104: #{ff_hybrid_vae_forward.12} parent=1 // pred_region
      %1174 = dma.done [#allocation5], 32
    $region105: #{ff_hybrid_vae_forward.12} parent=1 // pred_fallthru
      _
    // Predicated region
    $region106: #{ff_hybrid_vae_forward.12} parent=1 // pred_check
      _
    $region107: #{ff_hybrid_vae_forward.12} parent=1 // pred_check_branch
      %1176 = sbr.rel (0) target = $region109
    $region108: #{ff_hybrid_vae_forward.12} parent=1 // pred_region
      %1177 = dma.done [#allocation5], 32
    $region109: #{ff_hybrid_vae_forward.12} parent=1 // pred_fallthru
      _
    // Predicated region
    $region110: #{ff_hybrid_vae_forward.12} parent=1 // pred_check
      _
    $region111: #{ff_hybrid_vae_forward.12} parent=1 // pred_check_branch
      %1179 = sbr.rel (0) target = $region113
    $region112: #{ff_hybrid_vae_forward.12} parent=1 // pred_region
      _
    $region113: #{ff_hybrid_vae_forward.12} parent=1 // pred_fallthru
      _
    %1180 = vsyncpa [#allocation3], 1
    %1181 = vsyncpa [#allocation5], 1

// kernel: ff_hybrid_vae_forward.14
$region0: #{ff_hybrid_vae_forward.14}
  #allocation0 [shape = 'u32[]', space=smem, size = 0x4, offset = 0x4, fixed_abs, tag = 'smem constant byte address 0x4 - core index']
  #allocation1 [shape = 'u32[144,128]{1,0:T(1,128)}', space=vmem, size = 0x12000, scoped, tag = 'internal scratch']
  %s0 = inlined_call_operand.vmem [shape: f32[168,32], index: 0, kind: input, shape index: {}]
  %s1 = inlined_call_operand.vmem [shape: f32[32,32], index: 1, kind: input, shape index: {}]
  %s2 = inlined_call_operand.vmem [shape: f32[1,32], index: 2, kind: input, shape index: {}]
  %s3 = inlined_call_operand.vmem [shape: f32[32,32], index: 3, kind: input, shape index: {}]
  %s4 = inlined_call_operand.vmem [shape: f32[168,32], index: 4, kind: output, shape index: {}]
  %s5 = sld [smem:[#allocation0]]
  $region26: #{ff_hybrid_vae_forward.14} parent=0
    _
  %s7 = ssub.s32 1, %s5
  %s8 = scalar_select 0, %s7, %s5
  // Predicated region
  $region2: #{ff_hybrid_vae_forward.14} parent=0 // pred_check
    _
  $region3: #{ff_hybrid_vae_forward.14} parent=0 // pred_check_branch
    %10 = sbr.rel (0) target = $region5
  $region4: #{ff_hybrid_vae_forward.14} parent=0 // pred_region
    _
  $region5: #{ff_hybrid_vae_forward.14} parent=0 // pred_fallthru
    _
  // Predicated region
  $region6: #{ff_hybrid_vae_forward.14} parent=0 // pred_check
    _
  $region7: #{ff_hybrid_vae_forward.14} parent=0 // pred_check_branch
    %12 = sbr.rel (0) target = $region9
  $region8: #{ff_hybrid_vae_forward.14} parent=0 // pred_region
    _
  $region9: #{ff_hybrid_vae_forward.14} parent=0 // pred_fallthru
    _
  // Predicated region
  $region10: #{ff_hybrid_vae_forward.14} parent=0 // pred_check
    _
  $region11: #{ff_hybrid_vae_forward.14} parent=0 // pred_check_branch
    %14 = sbr.rel (0) target = $region13
  $region12: #{ff_hybrid_vae_forward.14} parent=0 // pred_region
    _
  $region13: #{ff_hybrid_vae_forward.14} parent=0 // pred_fallthru
    _
  // Predicated region
  $region14: #{ff_hybrid_vae_forward.14} parent=0 // pred_check
    _
  $region15: #{ff_hybrid_vae_forward.14} parent=0 // pred_check_branch
    %16 = sbr.rel (0) target = $region17
  $region16: #{ff_hybrid_vae_forward.14} parent=0 // pred_region
    _
  $region17: #{ff_hybrid_vae_forward.14} parent=0 // pred_fallthru
    _
  %v18 = vld [vmem:[%s0] sm:$0xff]
  %v19 = vld [vmem:[%s0 + $0x8] sm:$0xff]
  %v20 = vld [vmem:[%s0 + $0x10] sm:$0xff]
  %v21 = vld [vmem:[%s0 + $0x18] sm:$0xff]
  %v22 = vld [vmem:[%s0 + $0x20] sm:$0xff]
  %v23 = vld [vmem:[%s0 + $0x28] sm:$0xff]
  %v24 = vld [vmem:[%s0 + $0x30] sm:$0xff]
  %v25 = vld [vmem:[%s0 + $0x38] sm:$0xff]
  %v26 = vld [vmem:[%s0 + $0x40] sm:$0xff]
  %v27 = vld [vmem:[%s0 + $0x48] sm:$0xff]
  %v28 = vld [vmem:[%s0 + $0x50] sm:$0xff]
  %v29 = vld [vmem:[%s0 + $0x58] sm:$0xff]
  %v30 = vld [vmem:[%s0 + $0x60] sm:$0xff]
  %v31 = vld [vmem:[%s0 + $0x68] sm:$0xff]
  %v32 = vld [vmem:[%s0 + $0x70] sm:$0xff]
  %v33 = vld [vmem:[%s0 + $0x78] sm:$0xff]
  %v34 = vld [vmem:[%s0 + $0x80] sm:$0xff]
  %v35 = vld [vmem:[%s0 + $0x88] sm:$0xff]
  %v36 = vld [vmem:[%s0 + $0x90] sm:$0xff]
  %v37 = vld [vmem:[%s0 + $0x98] sm:$0xff]
  %v38 = vld [vmem:[%s0 + $0xa0] sm:$0xff]
  %v39 = vpack.c.bf16 %v19, %v18
  %v40 = vpack.c.bf16 %v21, %v20
  %v41 = vpack.c.bf16 %v23, %v22
  %v42 = vpack.c.bf16 %v25, %v24
  %v43 = vpack.c.bf16 %v27, %v26
  %v44 = vpack.c.bf16 %v29, %v28
  %v45 = vpack.c.bf16 %v31, %v30
  %v46 = vpack.c.bf16 %v33, %v32
  %v47 = vpack.c.bf16 %v35, %v34
  %v48 = vpack.c.bf16 %v37, %v36
  %v49 = vpack.c.bf16 %v38, %v38
  %v50 = vld [vmem:[%s1] sm:$0xff]
  %v51 = vld [vmem:[%s1 + $0x8] sm:$0xff]
  %v52 = vld [vmem:[%s1 + $0x10] sm:$0xff]
  %v53 = vld [vmem:[%s1 + $0x18] sm:$0xff]
  %v54 = vpack.c.bf16 %v51, %v50
  %v55 = vpack.c.bf16 %v53, %v52
  %v56 = vld [vmem:[%s2] sm:$0x1]
  %v58 = vlaneseq
  %v59 = vshrl.u32 %v58, 7
  %v60 = vsub.s32 0, %v59
  %v61 = vrot.slane %v56, %v60
  %vm63 = vcmask 261120
  %v65 = vsel %vm63, %v39, 0
  %v68 = vsel %vm63, %v40, 0
  %v71 = vsel %vm63, %v41, 0
  %v74 = vsel %vm63, %v42, 0
  %v77 = vsel %vm63, %v43, 0
  %v80 = vsel %vm63, %v44, 0
  %v83 = vsel %vm63, %v45, 0
  %v86 = vsel %vm63, %v46, 0
  %v89 = vsel %vm63, %v47, 0
  %v92 = vsel %vm63, %v48, 0
  %v95 = vsel %vm63, %v49, 0
  %97 = vmatprep.subr.bf16.mxu0 0
  %98 = vmatpush1.bf16.msra.mxu0 0
  %99 = vmatprep.subr.bf16.mxu0 0
  %100 = vmatpush1.bf16.msra.mxu0 0
  %101 = vmatprep.subr.bf16.mxu0 0
  %102 = vmatpush1.bf16.msra.mxu0 0
  %103 = vmatprep.subr.bf16.mxu0 0
  %104 = vmatpush1.bf16.msra.mxu0 0
  %105 = vmatprep.subr.bf16.mxu0 0
  %106 = vmatpush1.bf16.msra.mxu0 0
  %107 = vmatprep.subr.bf16.mxu0 0
  %108 = vmatpush1.bf16.msra.mxu0 0
  %109 = vmatprep.subr.bf16.mxu0 0
  %110 = vmatpush1.bf16.msra.mxu0 %v55
  %111 = vmatprep.subr.bf16.mxu0 0
  %112 = vmatpush1.bf16.msra.mxu0 %v54
  %113 = vmatprep.subr.bf16.mxu0 0
  %114 = vmatpush2.bf16.msra.mxu0 0
  %115 = vmatprep.subr.bf16.mxu0 0
  %116 = vmatpush2.bf16.msra.mxu0 0
  %117 = vmatprep.subr.bf16.mxu0 0
  %118 = vmatpush2.bf16.msra.mxu0 0
  %119 = vmatprep.subr.bf16.mxu0 0
  %120 = vmatpush2.bf16.msra.mxu0 0
  %121 = vmatprep.subr.bf16.mxu0 0
  %122 = vmatpush2.bf16.msra.mxu0 0
  %123 = vmatprep.subr.bf16.mxu0 0
  %124 = vmatpush2.bf16.msra.mxu0 0
  %125 = vmatprep.subr.bf16.mxu0 0
  %126 = vmatpush2.bf16.msra.mxu0 0
  %127 = vmatprep.subr.bf16.mxu0 0
  %128 = vmatpush2.bf16.msra.mxu0 0
  %129 = vmatprep.mubr.bf16.mxu0 0
  %130 = vmatmul.mubr.bf16.gmra.mxu0 %v65
  %v131 = vpop.f32.mrf.mxu0
  %v132 = vadd.f32 %v61, %v131
  %v133 = vpop.f32.mrf.mxu0
  %v134 = vpop.f32.mrf.mxu0
  %v135 = vadd.f32 %v61, %v134
  %v136 = vpop.f32.mrf.mxu0
  %137 = vmatprep.mubr.bf16.mxu0 0
  %138 = vmatmul.mubr.bf16.gmra.mxu0 %v68
  %v139 = vpop.f32.mrf.mxu0
  %v140 = vadd.f32 %v61, %v139
  %v141 = vpop.f32.mrf.mxu0
  %v142 = vpop.f32.mrf.mxu0
  %v143 = vadd.f32 %v61, %v142
  %v144 = vpop.f32.mrf.mxu0
  %145 = vmatprep.mubr.bf16.mxu0 0
  %146 = vmatmul.mubr.bf16.gmra.mxu0 %v71
  %v147 = vpop.f32.mrf.mxu0
  %v148 = vadd.f32 %v61, %v147
  %v149 = vpop.f32.mrf.mxu0
  %v150 = vpop.f32.mrf.mxu0
  %v151 = vadd.f32 %v61, %v150
  %v152 = vpop.f32.mrf.mxu0
  %153 = vmatprep.mubr.bf16.mxu0 0
  %154 = vmatmul.mubr.bf16.gmra.mxu0 %v74
  %v155 = vpop.f32.mrf.mxu0
  %v156 = vadd.f32 %v61, %v155
  %v157 = vpop.f32.mrf.mxu0
  %v158 = vpop.f32.mrf.mxu0
  %v159 = vadd.f32 %v61, %v158
  %v160 = vpop.f32.mrf.mxu0
  %161 = vmatprep.mubr.bf16.mxu0 0
  %162 = vmatmul.mubr.bf16.gmra.mxu0 %v77
  %v163 = vpop.f32.mrf.mxu0
  %v164 = vadd.f32 %v61, %v163
  %v165 = vpop.f32.mrf.mxu0
  %v166 = vpop.f32.mrf.mxu0
  %v167 = vadd.f32 %v61, %v166
  %v168 = vpop.f32.mrf.mxu0
  %169 = vmatprep.mubr.bf16.mxu0 0
  %170 = vmatmul.mubr.bf16.gmra.mxu0 %v80
  %v171 = vpop.f32.mrf.mxu0
  %v172 = vadd.f32 %v61, %v171
  %v173 = vpop.f32.mrf.mxu0
  %v174 = vpop.f32.mrf.mxu0
  %v175 = vadd.f32 %v61, %v174
  %v176 = vpop.f32.mrf.mxu0
  %177 = vmatprep.mubr.bf16.mxu0 0
  %178 = vmatmul.mubr.bf16.gmra.mxu0 %v83
  %v179 = vpop.f32.mrf.mxu0
  %v180 = vadd.f32 %v61, %v179
  %v181 = vpop.f32.mrf.mxu0
  %v182 = vpop.f32.mrf.mxu0
  %v183 = vadd.f32 %v61, %v182
  %v184 = vpop.f32.mrf.mxu0
  %185 = vmatprep.mubr.bf16.mxu0 0
  %186 = vmatmul.mubr.bf16.gmra.mxu0 %v86
  %v187 = vpop.f32.mrf.mxu0
  %v188 = vadd.f32 %v61, %v187
  %v189 = vpop.f32.mrf.mxu0
  %v190 = vpop.f32.mrf.mxu0
  %v191 = vadd.f32 %v61, %v190
  %v192 = vpop.f32.mrf.mxu0
  %193 = vmatprep.mubr.bf16.mxu0 0
  %194 = vmatmul.mubr.bf16.gmra.mxu0 %v89
  %v195 = vpop.f32.mrf.mxu0
  %v196 = vadd.f32 %v61, %v195
  %v197 = vpop.f32.mrf.mxu0
  %v198 = vpop.f32.mrf.mxu0
  %v199 = vadd.f32 %v61, %v198
  %v200 = vpop.f32.mrf.mxu0
  %201 = vmatprep.mubr.bf16.mxu0 0
  %202 = vmatmul.mubr.bf16.gmra.mxu0 %v92
  %v203 = vpop.f32.mrf.mxu0
  %v204 = vadd.f32 %v61, %v203
  %v205 = vpop.f32.mrf.mxu0
  %v206 = vpop.f32.mrf.mxu0
  %v207 = vadd.f32 %v61, %v206
  %v208 = vpop.f32.mrf.mxu0
  %209 = vmatprep.mubr.bf16.mxu0 0
  %210 = vmatmul.mubr.bf16.gmra.mxu0 %v95
  %v211 = vpop.f32.mrf.mxu0
  %v212 = vadd.f32 %v61, %v211
  %v213 = vpop.f32.mrf.mxu0
  %v214 = vpop.f32.mrf.mxu0
  %v215 = vpop.f32.mrf.mxu0
  %216 = vdwg.mxu0
  %v217 = vmax.f32 %v132, 0.0
  %v218 = vmax.f32 %v135, 0.0
  %v219 = vmax.f32 %v140, 0.0
  %v220 = vmax.f32 %v143, 0.0
  %v221 = vmax.f32 %v148, 0.0
  %v222 = vmax.f32 %v151, 0.0
  %v223 = vmax.f32 %v156, 0.0
  %v224 = vmax.f32 %v159, 0.0
  %v225 = vmax.f32 %v164, 0.0
  %v226 = vmax.f32 %v167, 0.0
  %v227 = vmax.f32 %v172, 0.0
  %v228 = vmax.f32 %v175, 0.0
  %v229 = vmax.f32 %v180, 0.0
  %v230 = vmax.f32 %v183, 0.0
  %v231 = vmax.f32 %v188, 0.0
  %v232 = vmax.f32 %v191, 0.0
  %v233 = vmax.f32 %v196, 0.0
  %v234 = vmax.f32 %v199, 0.0
  %v235 = vmax.f32 %v204, 0.0
  %v236 = vmax.f32 %v207, 0.0
  %v237 = vmax.f32 %v212, 0.0
  %v238 = vmul.f32 %v217, %v217
  %v239 = vmul.f32 %v218, %v218
  %v240 = vmul.f32 %v219, %v219
  %v241 = vmul.f32 %v220, %v220
  %v242 = vmul.f32 %v221, %v221
  %v243 = vmul.f32 %v222, %v222
  %v244 = vmul.f32 %v223, %v223
  %v245 = vmul.f32 %v224, %v224
  %v246 = vmul.f32 %v225, %v225
  %v247 = vmul.f32 %v226, %v226
  %v248 = vmul.f32 %v227, %v227
  %v249 = vmul.f32 %v228, %v228
  %v250 = vmul.f32 %v229, %v229
  %v251 = vmul.f32 %v230, %v230
  %v252 = vmul.f32 %v231, %v231
  %v253 = vmul.f32 %v232, %v232
  %v254 = vmul.f32 %v233, %v233
  %v255 = vmul.f32 %v234, %v234
  %v256 = vmul.f32 %v235, %v235
  %v257 = vmul.f32 %v236, %v236
  %v258 = vmul.f32 %v237, %v237
  %v259 = vld [vmem:[%s3] sm:$0xff]
  %v260 = vld [vmem:[%s3 + $0x8] sm:$0xff]
  %v261 = vld [vmem:[%s3 + $0x10] sm:$0xff]
  %v262 = vld [vmem:[%s3 + $0x18] sm:$0xff]
  %v264 = vsel %vm63, %v238, 0
  %v267 = vsel %vm63, %v239, 0
  %v270 = vsel %vm63, %v240, 0
  %v273 = vsel %vm63, %v241, 0
  %v276 = vsel %vm63, %v242, 0
  %v279 = vsel %vm63, %v243, 0
  %v282 = vsel %vm63, %v244, 0
  %v285 = vsel %vm63, %v245, 0
  %v288 = vsel %vm63, %v246, 0
  %v291 = vsel %vm63, %v247, 0
  %v294 = vsel %vm63, %v248, 0
  %v297 = vsel %vm63, %v249, 0
  %v300 = vsel %vm63, %v250, 0
  %v303 = vsel %vm63, %v251, 0
  %v306 = vsel %vm63, %v252, 0
  %v309 = vsel %vm63, %v253, 0
  %v312 = vsel %vm63, %v254, 0
  %v315 = vsel %vm63, %v255, 0
  %v318 = vsel %vm63, %v256, 0
  %v321 = vsel %vm63, %v257, 0
  %v324 = vsel %vm63, %v258, 0
  %326 = vmatprep.subr.mxu0 0.0
  %327 = vmatpush1.msra.mxu0 0.0
  %328 = vmatprep.subr.mxu0 0.0
  %329 = vmatpush1.msra.mxu0 0.0
  %330 = vmatprep.subr.mxu0 0.0
  %331 = vmatpush1.msra.mxu0 0.0
  %332 = vmatprep.subr.mxu0 0.0
  %333 = vmatpush1.msra.mxu0 0.0
  %334 = vmatprep.subr.mxu0 0.0
  %335 = vmatpush1.msra.mxu0 0.0
  %336 = vmatprep.subr.mxu0 0.0
  %337 = vmatpush1.msra.mxu0 0.0
  %338 = vmatprep.subr.mxu0 0.0
  %339 = vmatpush1.msra.mxu0 0.0
  %340 = vmatprep.subr.mxu0 0.0
  %341 = vmatpush1.msra.mxu0 0.0
  %342 = vmatprep.subr.mxu0 0.0
  %343 = vmatpush1.msra.mxu0 0.0
  %344 = vmatprep.subr.mxu0 0.0
  %345 = vmatpush1.msra.mxu0 0.0
  %346 = vmatprep.subr.mxu0 0.0
  %347 = vmatpush1.msra.mxu0 0.0
  %348 = vmatprep.subr.mxu0 0.0
  %349 = vmatpush1.msra.mxu0 0.0
  %350 = vmatprep.subr.mxu0 0.0
  %351 = vmatpush1.msra.mxu0 %v262
  %352 = vmatprep.subr.mxu0 0.0
  %353 = vmatpush1.msra.mxu0 %v261
  %354 = vmatprep.subr.mxu0 0.0
  %355 = vmatpush1.msra.mxu0 %v260
  %356 = vmatprep.subr.mxu0 0.0
  %357 = vmatpush1.msra.mxu0 %v259
  %358 = vmatprep.subr.mxu0 0.0
  %359 = vmatpush2.msra.mxu0 0.0
  %360 = vmatprep.subr.mxu0 0.0
  %361 = vmatpush2.msra.mxu0 0.0
  %362 = vmatprep.subr.mxu0 0.0
  %363 = vmatpush2.msra.mxu0 0.0
  %364 = vmatprep.subr.mxu0 0.0
  %365 = vmatpush2.msra.mxu0 0.0
  %366 = vmatprep.subr.mxu0 0.0
  %367 = vmatpush2.msra.mxu0 0.0
  %368 = vmatprep.subr.mxu0 0.0
  %369 = vmatpush2.msra.mxu0 0.0
  %370 = vmatprep.subr.mxu0 0.0
  %371 = vmatpush2.msra.mxu0 0.0
  %372 = vmatprep.subr.mxu0 0.0
  %373 = vmatpush2.msra.mxu0 0.0
  %374 = vmatprep.subr.mxu0 0.0
  %375 = vmatpush2.msra.mxu0 0.0
  %376 = vmatprep.subr.mxu0 0.0
  %377 = vmatpush2.msra.mxu0 0.0
  %378 = vmatprep.subr.mxu0 0.0
  %379 = vmatpush2.msra.mxu0 0.0
  %380 = vmatprep.subr.mxu0 0.0
  %381 = vmatpush2.msra.mxu0 0.0
  %382 = vmatprep.subr.mxu0 0.0
  %383 = vmatpush2.msra.mxu0 0.0
  %384 = vmatprep.subr.mxu0 0.0
  %385 = vmatpush2.msra.mxu0 0.0
  %386 = vmatprep.subr.mxu0 0.0
  %387 = vmatpush2.msra.mxu0 0.0
  %388 = vmatprep.subr.mxu0 0.0
  %389 = vmatpush2.msra.mxu0 0.0
  %390 = vmatprep.mubr.f32.mxu0 0.0
  %391 = vmatmul.mubr.f32.gmra.mxu0 %v264
  %v392 = vpop.f32.mrf.mxu0
  %v393 = vadd.f32 0.0, %v392
  %v394 = vpop.f32.mrf.mxu0
  %395 = vmatprep.mubr.f32.mxu0 0.0
  %396 = vmatmul.mubr.f32.gmra.mxu0 %v267
  %v397 = vpop.f32.mrf.mxu0
  %v398 = vadd.f32 0.0, %v397
  %v399 = vpop.f32.mrf.mxu0
  %400 = vmatprep.mubr.f32.mxu0 0.0
  %401 = vmatmul.mubr.f32.gmra.mxu0 %v270
  %v402 = vpop.f32.mrf.mxu0
  %v403 = vadd.f32 0.0, %v402
  %v404 = vpop.f32.mrf.mxu0
  %405 = vmatprep.mubr.f32.mxu0 0.0
  %406 = vmatmul.mubr.f32.gmra.mxu0 %v273
  %v407 = vpop.f32.mrf.mxu0
  %v408 = vadd.f32 0.0, %v407
  %v409 = vpop.f32.mrf.mxu0
  %410 = vmatprep.mubr.f32.mxu0 0.0
  %411 = vmatmul.mubr.f32.gmra.mxu0 %v276
  %v412 = vpop.f32.mrf.mxu0
  %v413 = vadd.f32 0.0, %v412
  %v414 = vpop.f32.mrf.mxu0
  %415 = vmatprep.mubr.f32.mxu0 0.0
  %416 = vmatmul.mubr.f32.gmra.mxu0 %v279
  %v417 = vpop.f32.mrf.mxu0
  %v418 = vadd.f32 0.0, %v417
  %v419 = vpop.f32.mrf.mxu0
  %420 = vmatprep.mubr.f32.mxu0 0.0
  %421 = vmatmul.mubr.f32.gmra.mxu0 %v282
  %v422 = vpop.f32.mrf.mxu0
  %v423 = vadd.f32 0.0, %v422
  %v424 = vpop.f32.mrf.mxu0
  %425 = vmatprep.mubr.f32.mxu0 0.0
  %426 = vmatmul.mubr.f32.gmra.mxu0 %v285
  %v427 = vpop.f32.mrf.mxu0
  %v428 = vadd.f32 0.0, %v427
  %v429 = vpop.f32.mrf.mxu0
  %430 = vmatprep.mubr.f32.mxu0 0.0
  %431 = vmatmul.mubr.f32.gmra.mxu0 %v288
  %v432 = vpop.f32.mrf.mxu0
  %v433 = vadd.f32 0.0, %v432
  %v434 = vpop.f32.mrf.mxu0
  %435 = vmatprep.mubr.f32.mxu0 0.0
  %436 = vmatmul.mubr.f32.gmra.mxu0 %v291
  %v437 = vpop.f32.mrf.mxu0
  %v438 = vadd.f32 0.0, %v437
  %v439 = vpop.f32.mrf.mxu0
  %440 = vmatprep.mubr.f32.mxu0 0.0
  %441 = vmatmul.mubr.f32.gmra.mxu0 %v294
  %v442 = vpop.f32.mrf.mxu0
  %v443 = vadd.f32 0.0, %v442
  %v444 = vpop.f32.mrf.mxu0
  %445 = vmatprep.mubr.f32.mxu0 0.0
  %446 = vmatmul.mubr.f32.gmra.mxu0 %v297
  %v447 = vpop.f32.mrf.mxu0
  %v448 = vadd.f32 0.0, %v447
  %v449 = vpop.f32.mrf.mxu0
  %450 = vmatprep.mubr.f32.mxu0 0.0
  %451 = vmatmul.mubr.f32.gmra.mxu0 %v300
  %v452 = vpop.f32.mrf.mxu0
  %v453 = vadd.f32 0.0, %v452
  %v454 = vpop.f32.mrf.mxu0
  %455 = vmatprep.mubr.f32.mxu0 0.0
  %456 = vmatmul.mubr.f32.gmra.mxu0 %v303
  %v457 = vpop.f32.mrf.mxu0
  %v458 = vadd.f32 0.0, %v457
  %v459 = vpop.f32.mrf.mxu0
  %460 = vmatprep.mubr.f32.mxu0 0.0
  %461 = vmatmul.mubr.f32.gmra.mxu0 %v306
  %v462 = vpop.f32.mrf.mxu0
  %v463 = vadd.f32 0.0, %v462
  %v464 = vpop.f32.mrf.mxu0
  %465 = vmatprep.mubr.f32.mxu0 0.0
  %466 = vmatmul.mubr.f32.gmra.mxu0 %v309
  %v467 = vpop.f32.mrf.mxu0
  %v468 = vadd.f32 0.0, %v467
  %v469 = vpop.f32.mrf.mxu0
  %470 = vmatprep.mubr.f32.mxu0 0.0
  %471 = vmatmul.mubr.f32.gmra.mxu0 %v312
  %v472 = vpop.f32.mrf.mxu0
  %v473 = vadd.f32 0.0, %v472
  %v474 = vpop.f32.mrf.mxu0
  %475 = vmatprep.mubr.f32.mxu0 0.0
  %476 = vmatmul.mubr.f32.gmra.mxu0 %v315
  %v477 = vpop.f32.mrf.mxu0
  %v478 = vadd.f32 0.0, %v477
  %v479 = vpop.f32.mrf.mxu0
  %480 = vmatprep.mubr.f32.mxu0 0.0
  %481 = vmatmul.mubr.f32.gmra.mxu0 %v318
  %v482 = vpop.f32.mrf.mxu0
  %v483 = vadd.f32 0.0, %v482
  %v484 = vpop.f32.mrf.mxu0
  %485 = vmatprep.mubr.f32.mxu0 0.0
  %486 = vmatmul.mubr.f32.gmra.mxu0 %v321
  %v487 = vpop.f32.mrf.mxu0
  %v488 = vadd.f32 0.0, %v487
  %v489 = vpop.f32.mrf.mxu0
  %490 = vmatprep.mubr.f32.mxu0 0.0
  %491 = vmatmul.mubr.f32.gmra.mxu0 %v324
  %v492 = vpop.f32.mrf.mxu0
  %v493 = vadd.f32 0.0, %v492
  %v494 = vpop.f32.mrf.mxu0
  %495 = vdwg.mxu0
  %v496 = vmul.f32 %v393, 0.0002
  %v497 = vmul.f32 %v398, 0.0002
  %v498 = vmul.f32 %v403, 0.0002
  %v499 = vmul.f32 %v408, 0.0002
  %v500 = vmul.f32 %v413, 0.0002
  %v501 = vmul.f32 %v418, 0.0002
  %v502 = vmul.f32 %v423, 0.0002
  %v503 = vmul.f32 %v428, 0.0002
  %v504 = vmul.f32 %v433, 0.0002
  %v505 = vmul.f32 %v438, 0.0002
  %v506 = vmul.f32 %v443, 0.0002
  %v507 = vmul.f32 %v448, 0.0002
  %v508 = vmul.f32 %v453, 0.0002
  %v509 = vmul.f32 %v458, 0.0002
  %v510 = vmul.f32 %v463, 0.0002
  %v511 = vmul.f32 %v468, 0.0002
  %v512 = vmul.f32 %v473, 0.0002
  %v513 = vmul.f32 %v478, 0.0002
  %v514 = vmul.f32 %v483, 0.0002
  %v515 = vmul.f32 %v488, 0.0002
  %v516 = vmul.f32 %v493, 0.0002
  %v517 = vadd.f32 %v496, 1.0
  %v518 = vadd.f32 %v497, 1.0
  %v519 = vadd.f32 %v498, 1.0
  %v520 = vadd.f32 %v499, 1.0
  %v521 = vadd.f32 %v500, 1.0
  %v522 = vadd.f32 %v501, 1.0
  %v523 = vadd.f32 %v502, 1.0
  %v524 = vadd.f32 %v503, 1.0
  %v525 = vadd.f32 %v504, 1.0
  %v526 = vadd.f32 %v505, 1.0
  %v527 = vadd.f32 %v506, 1.0
  %v528 = vadd.f32 %v507, 1.0
  %v529 = vadd.f32 %v508, 1.0
  %v530 = vadd.f32 %v509, 1.0
  %v531 = vadd.f32 %v510, 1.0
  %v532 = vadd.f32 %v511, 1.0
  %v533 = vadd.f32 %v512, 1.0
  %v534 = vadd.f32 %v513, 1.0
  %v535 = vadd.f32 %v514, 1.0
  %v536 = vadd.f32 %v515, 1.0
  %v537 = vadd.f32 %v516, 1.0
  %v538 = vrsqrt.pop %v517
  %v539 = vrsqrt.pop %v518
  %v540 = vrsqrt.pop %v519
  %v541 = vrsqrt.pop %v520
  %v542 = vrsqrt.pop %v521
  %v543 = vrsqrt.pop %v522
  %v544 = vrsqrt.pop %v523
  %v545 = vrsqrt.pop %v524
  %v546 = vrsqrt.pop %v525
  %v547 = vrsqrt.pop %v526
  %v548 = vrsqrt.pop %v527
  %v549 = vrsqrt.pop %v528
  %v550 = vrsqrt.pop %v529
  %v551 = vrsqrt.pop %v530
  %v552 = vrsqrt.pop %v531
  %v553 = vrsqrt.pop %v532
  %v554 = vrsqrt.pop %v533
  %v555 = vrsqrt.pop %v534
  %v556 = vrsqrt.pop %v535
  %v557 = vrsqrt.pop %v536
  %v558 = vrsqrt.pop %v537
  %v559 = vmul.f32 %v217, %v538
  %v560 = vmul.f32 %v218, %v539
  %v561 = vmul.f32 %v219, %v540
  %v562 = vmul.f32 %v220, %v541
  %v563 = vmul.f32 %v221, %v542
  %v564 = vmul.f32 %v222, %v543
  %v565 = vmul.f32 %v223, %v544
  %v566 = vmul.f32 %v224, %v545
  %v567 = vmul.f32 %v225, %v546
  %v568 = vmul.f32 %v226, %v547
  %v569 = vmul.f32 %v227, %v548
  %v570 = vmul.f32 %v228, %v549
  %v571 = vmul.f32 %v229, %v550
  %v572 = vmul.f32 %v230, %v551
  %v573 = vmul.f32 %v231, %v552
  %v574 = vmul.f32 %v232, %v553
  %v575 = vmul.f32 %v233, %v554
  %v576 = vmul.f32 %v234, %v555
  %v577 = vmul.f32 %v235, %v556
  %v578 = vmul.f32 %v236, %v557
  %v579 = vmul.f32 %v237, %v558
  %580 = vst.msk [vmem:[%s4] sm:$0xff] %vm63, %v559
  %581 = vst.msk [vmem:[%s4 + $0x8] sm:$0xff] %vm63, %v560
  %582 = vst.msk [vmem:[%s4 + $0x10] sm:$0xff] %vm63, %v561
  %583 = vst.msk [vmem:[%s4 + $0x18] sm:$0xff] %vm63, %v562
  %584 = vst.msk [vmem:[%s4 + $0x20] sm:$0xff] %vm63, %v563
  %585 = vst.msk [vmem:[%s4 + $0x28] sm:$0xff] %vm63, %v564
  %586 = vst.msk [vmem:[%s4 + $0x30] sm:$0xff] %vm63, %v565
  %587 = vst.msk [vmem:[%s4 + $0x38] sm:$0xff] %vm63, %v566
  %588 = vst.msk [vmem:[%s4 + $0x40] sm:$0xff] %vm63, %v567
  %589 = vst.msk [vmem:[%s4 + $0x48] sm:$0xff] %vm63, %v568
  %590 = vst.msk [vmem:[%s4 + $0x50] sm:$0xff] %vm63, %v569
  %591 = vst.msk [vmem:[%s4 + $0x58] sm:$0xff] %vm63, %v570
  %592 = vst.msk [vmem:[%s4 + $0x60] sm:$0xff] %vm63, %v571
  %593 = vst.msk [vmem:[%s4 + $0x68] sm:$0xff] %vm63, %v572
  %594 = vst.msk [vmem:[%s4 + $0x70] sm:$0xff] %vm63, %v573
  %595 = vst.msk [vmem:[%s4 + $0x78] sm:$0xff] %vm63, %v574
  %596 = vst.msk [vmem:[%s4 + $0x80] sm:$0xff] %vm63, %v575
  %597 = vst.msk [vmem:[%s4 + $0x88] sm:$0xff] %vm63, %v576
  %598 = vst.msk [vmem:[%s4 + $0x90] sm:$0xff] %vm63, %v577
  %599 = vst.msk [vmem:[%s4 + $0x98] sm:$0xff] %vm63, %v578
  %600 = vst.msk [vmem:[%s4 + $0xa0] sm:$0xff] %vm63, %v579
  // Predicated region
  $region18: #{ff_hybrid_vae_forward.14} parent=0 // pred_check
    _
  $region19: #{ff_hybrid_vae_forward.14} parent=0 // pred_check_branch
    %602 = sbr.rel (0) target = $region21
  $region20: #{ff_hybrid_vae_forward.14} parent=0 // pred_region
    _
  $region21: #{ff_hybrid_vae_forward.14} parent=0 // pred_fallthru
    _
  // Predicated region
  $region22: #{ff_hybrid_vae_forward.14} parent=0 // pred_check
    _
  $region23: #{ff_hybrid_vae_forward.14} parent=0 // pred_check_branch
    %604 = sbr.rel (0) target = $region25
  $region24: #{ff_hybrid_vae_forward.14} parent=0 // pred_region
    _
  $region25: #{ff_hybrid_vae_forward.14} parent=0 // pred_fallthru
    _

// kernel: ff_hybrid_vae_forward.15
$region0: #{ff_hybrid_vae_forward.15}
  #allocation0 [shape = 'u32[]', space=smem, size = 0x4, offset = 0x4, fixed_abs, tag = 'smem constant byte address 0x4 - core index']
  #allocation1 [shape = 'u32[144,128]{1,0:T(1,128)}', space=vmem, size = 0x12000, scoped, tag = 'internal scratch']
  %s0 = inlined_call_operand.vmem [shape: f32[584,32], index: 0, kind: input, shape index: {}]
  %s1 = inlined_call_operand.vmem [shape: f32[32,4], index: 1, kind: input, shape index: {}]
  %s2 = inlined_call_operand.vmem [shape: f32[1,4], index: 2, kind: input, shape index: {}]
  %s3 = inlined_call_operand.vmem [shape: f32[584,4], index: 3, kind: output, shape index: {}]
  %s4 = sld [smem:[#allocation0]]
  $region22: #{ff_hybrid_vae_forward.15} parent=0
    _
  %s6 = ssub.s32 1, %s4
  %s7 = scalar_select 0, %s6, %s4
  // Predicated region
  $region2: #{ff_hybrid_vae_forward.15} parent=0 // pred_check
    _
  $region3: #{ff_hybrid_vae_forward.15} parent=0 // pred_check_branch
    %9 = sbr.rel (0) target = $region5
  $region4: #{ff_hybrid_vae_forward.15} parent=0 // pred_region
    _
  $region5: #{ff_hybrid_vae_forward.15} parent=0 // pred_fallthru
    _
  // Predicated region
  $region6: #{ff_hybrid_vae_forward.15} parent=0 // pred_check
    _
  $region7: #{ff_hybrid_vae_forward.15} parent=0 // pred_check_branch
    %11 = sbr.rel (0) target = $region9
  $region8: #{ff_hybrid_vae_forward.15} parent=0 // pred_region
    _
  $region9: #{ff_hybrid_vae_forward.15} parent=0 // pred_fallthru
    _
  // Predicated region
  $region10: #{ff_hybrid_vae_forward.15} parent=0 // pred_check
    _
  $region11: #{ff_hybrid_vae_forward.15} parent=0 // pred_check_branch
    %13 = sbr.rel (0) target = $region13
  $region12: #{ff_hybrid_vae_forward.15} parent=0 // pred_region
    _
  $region13: #{ff_hybrid_vae_forward.15} parent=0 // pred_fallthru
    _
  %v15 = vld [vmem:[%s0] sm:$0xff]
  %v16 = vld [vmem:[%s0 + $0x8] sm:$0xff]
  %v17 = vld [vmem:[%s0 + $0x10] sm:$0xff]
  %v18 = vld [vmem:[%s0 + $0x18] sm:$0xff]
  %v19 = vld [vmem:[%s0 + $0x20] sm:$0xff]
  %v20 = vld [vmem:[%s0 + $0x28] sm:$0xff]
  %v21 = vld [vmem:[%s0 + $0x30] sm:$0xff]
  %v22 = vld [vmem:[%s0 + $0x38] sm:$0xff]
  %v23 = vld [vmem:[%s0 + $0x40] sm:$0xff]
  %v24 = vld [vmem:[%s0 + $0x48] sm:$0xff]
  %v25 = vld [vmem:[%s0 + $0x50] sm:$0xff]
  %v26 = vld [vmem:[%s0 + $0x58] sm:$0xff]
  %v27 = vld [vmem:[%s0 + $0x60] sm:$0xff]
  %v28 = vld [vmem:[%s0 + $0x68] sm:$0xff]
  %v29 = vld [vmem:[%s0 + $0x70] sm:$0xff]
  %v30 = vld [vmem:[%s0 + $0x78] sm:$0xff]
  %v31 = vld [vmem:[%s0 + $0x80] sm:$0xff]
  %v32 = vld [vmem:[%s0 + $0x88] sm:$0xff]
  %v33 = vld [vmem:[%s0 + $0x90] sm:$0xff]
  %v34 = vld [vmem:[%s0 + $0x98] sm:$0xff]
  %v35 = vld [vmem:[%s0 + $0xa0] sm:$0xff]
  %v36 = vld [vmem:[%s0 + $0xa8] sm:$0xff]
  %v37 = vld [vmem:[%s0 + $0xb0] sm:$0xff]
  %v38 = vld [vmem:[%s0 + $0xb8] sm:$0xff]
  %v39 = vld [vmem:[%s0 + $0xc0] sm:$0xff]
  %v40 = vld [vmem:[%s0 + $0xc8] sm:$0xff]
  %v41 = vld [vmem:[%s0 + $0xd0] sm:$0xff]
  %v42 = vld [vmem:[%s0 + $0xd8] sm:$0xff]
  %v43 = vld [vmem:[%s0 + $0xe0] sm:$0xff]
  %v44 = vld [vmem:[%s0 + $0xe8] sm:$0xff]
  %v45 = vld [vmem:[%s0 + $0xf0] sm:$0xff]
  %v46 = vld [vmem:[%s0 + $0xf8] sm:$0xff]
  %v47 = vld [vmem:[%s0 + $0x100] sm:$0xff]
  %v48 = vld [vmem:[%s0 + $0x108] sm:$0xff]
  %v49 = vld [vmem:[%s0 + $0x110] sm:$0xff]
  %v50 = vld [vmem:[%s0 + $0x118] sm:$0xff]
  %v51 = vld [vmem:[%s0 + $0x120] sm:$0xff]
  %v52 = vld [vmem:[%s0 + $0x128] sm:$0xff]
  %v53 = vld [vmem:[%s0 + $0x130] sm:$0xff]
  %v54 = vld [vmem:[%s0 + $0x138] sm:$0xff]
  %v55 = vld [vmem:[%s0 + $0x140] sm:$0xff]
  %v56 = vld [vmem:[%s0 + $0x148] sm:$0xff]
  %v57 = vld [vmem:[%s0 + $0x150] sm:$0xff]
  %v58 = vld [vmem:[%s0 + $0x158] sm:$0xff]
  %v59 = vld [vmem:[%s0 + $0x160] sm:$0xff]
  %v60 = vld [vmem:[%s0 + $0x168] sm:$0xff]
  %v61 = vld [vmem:[%s0 + $0x170] sm:$0xff]
  %v62 = vld [vmem:[%s0 + $0x178] sm:$0xff]
  %v63 = vld [vmem:[%s0 + $0x180] sm:$0xff]
  %v64 = vld [vmem:[%s0 + $0x188] sm:$0xff]
  %v65 = vld [vmem:[%s0 + $0x190] sm:$0xff]
  %v66 = vld [vmem:[%s0 + $0x198] sm:$0xff]
  %v67 = vld [vmem:[%s0 + $0x1a0] sm:$0xff]
  %v68 = vld [vmem:[%s0 + $0x1a8] sm:$0xff]
  %v69 = vld [vmem:[%s0 + $0x1b0] sm:$0xff]
  %v70 = vld [vmem:[%s0 + $0x1b8] sm:$0xff]
  %v71 = vld [vmem:[%s0 + $0x1c0] sm:$0xff]
  %v72 = vld [vmem:[%s0 + $0x1c8] sm:$0xff]
  %v73 = vld [vmem:[%s0 + $0x1d0] sm:$0xff]
  %v74 = vld [vmem:[%s0 + $0x1d8] sm:$0xff]
  %v75 = vld [vmem:[%s0 + $0x1e0] sm:$0xff]
  %v76 = vld [vmem:[%s0 + $0x1e8] sm:$0xff]
  %v77 = vld [vmem:[%s0 + $0x1f0] sm:$0xff]
  %v78 = vld [vmem:[%s0 + $0x1f8] sm:$0xff]
  %v79 = vld [vmem:[%s0 + $0x200] sm:$0xff]
  %v80 = vld [vmem:[%s0 + $0x208] sm:$0xff]
  %v81 = vld [vmem:[%s0 + $0x210] sm:$0xff]
  %v82 = vld [vmem:[%s0 + $0x218] sm:$0xff]
  %v83 = vld [vmem:[%s0 + $0x220] sm:$0xff]
  %v84 = vld [vmem:[%s0 + $0x228] sm:$0xff]
  %v85 = vld [vmem:[%s0 + $0x230] sm:$0xff]
  %v86 = vld [vmem:[%s0 + $0x238] sm:$0xff]
  %v87 = vld [vmem:[%s0 + $0x240] sm:$0xff]
  %v88 = vpack.c.bf16 %v16, %v15
  %v89 = vpack.c.bf16 %v18, %v17
  %v90 = vpack.c.bf16 %v20, %v19
  %v91 = vpack.c.bf16 %v22, %v21
  %v92 = vpack.c.bf16 %v24, %v23
  %v93 = vpack.c.bf16 %v26, %v25
  %v94 = vpack.c.bf16 %v28, %v27
  %v95 = vpack.c.bf16 %v30, %v29
  %v96 = vpack.c.bf16 %v32, %v31
  %v97 = vpack.c.bf16 %v34, %v33
  %v98 = vpack.c.bf16 %v36, %v35
  %v99 = vpack.c.bf16 %v38, %v37
  %v100 = vpack.c.bf16 %v40, %v39
  %v101 = vpack.c.bf16 %v42, %v41
  %v102 = vpack.c.bf16 %v44, %v43
  %v103 = vpack.c.bf16 %v46, %v45
  %v104 = vpack.c.bf16 %v48, %v47
  %v105 = vpack.c.bf16 %v50, %v49
  %v106 = vpack.c.bf16 %v52, %v51
  %v107 = vpack.c.bf16 %v54, %v53
  %v108 = vpack.c.bf16 %v56, %v55
  %v109 = vpack.c.bf16 %v58, %v57
  %v110 = vpack.c.bf16 %v60, %v59
  %v111 = vpack.c.bf16 %v62, %v61
  %v112 = vpack.c.bf16 %v64, %v63
  %v113 = vpack.c.bf16 %v66, %v65
  %v114 = vpack.c.bf16 %v68, %v67
  %v115 = vpack.c.bf16 %v70, %v69
  %v116 = vpack.c.bf16 %v72, %v71
  %v117 = vpack.c.bf16 %v74, %v73
  %v118 = vpack.c.bf16 %v76, %v75
  %v119 = vpack.c.bf16 %v78, %v77
  %v120 = vpack.c.bf16 %v80, %v79
  %v121 = vpack.c.bf16 %v82, %v81
  %v122 = vpack.c.bf16 %v84, %v83
  %v123 = vpack.c.bf16 %v86, %v85
  %v124 = vpack.c.bf16 %v87, %v87
  %v125 = vld [vmem:[%s1] sm:$0xff]
  %v126 = vld [vmem:[%s1 + $0x8] sm:$0xff]
  %v127 = vld [vmem:[%s1 + $0x10] sm:$0xff]
  %v128 = vld [vmem:[%s1 + $0x18] sm:$0xff]
  %v129 = vpack.c.bf16 %v126, %v125
  %v130 = vpack.c.bf16 %v128, %v127
  %v131 = vld [vmem:[%s2] sm:$0x1]
  %v133 = vlaneseq
  %v134 = vshrl.u32 %v133, 7
  %v135 = vsub.s32 0, %v134
  %v136 = vrot.slane %v131, %v135
  %vm138 = vcmask 261120
  %v140 = vsel %vm138, %v88, 0
  %v143 = vsel %vm138, %v89, 0
  %v146 = vsel %vm138, %v90, 0
  %v149 = vsel %vm138, %v91, 0
  %v152 = vsel %vm138, %v92, 0
  %v155 = vsel %vm138, %v93, 0
  %v158 = vsel %vm138, %v94, 0
  %v161 = vsel %vm138, %v95, 0
  %v164 = vsel %vm138, %v96, 0
  %v167 = vsel %vm138, %v97, 0
  %v170 = vsel %vm138, %v98, 0
  %v173 = vsel %vm138, %v99, 0
  %v176 = vsel %vm138, %v100, 0
  %v179 = vsel %vm138, %v101, 0
  %v182 = vsel %vm138, %v102, 0
  %v185 = vsel %vm138, %v103, 0
  %v188 = vsel %vm138, %v104, 0
  %v191 = vsel %vm138, %v105, 0
  %v194 = vsel %vm138, %v106, 0
  %v197 = vsel %vm138, %v107, 0
  %v200 = vsel %vm138, %v108, 0
  %v203 = vsel %vm138, %v109, 0
  %v206 = vsel %vm138, %v110, 0
  %v209 = vsel %vm138, %v111, 0
  %v212 = vsel %vm138, %v112, 0
  %v215 = vsel %vm138, %v113, 0
  %v218 = vsel %vm138, %v114, 0
  %v221 = vsel %vm138, %v115, 0
  %v224 = vsel %vm138, %v116, 0
  %v227 = vsel %vm138, %v117, 0
  %v230 = vsel %vm138, %v118, 0
  %v233 = vsel %vm138, %v119, 0
  %v236 = vsel %vm138, %v120, 0
  %v239 = vsel %vm138, %v121, 0
  %v242 = vsel %vm138, %v122, 0
  %v245 = vsel %vm138, %v123, 0
  %v248 = vsel %vm138, %v124, 0
  %250 = vmatprep.subr.bf16.mxu0 0
  %251 = vmatpush1.bf16.msra.mxu0 0
  %252 = vmatprep.subr.bf16.mxu0 0
  %253 = vmatpush1.bf16.msra.mxu0 0
  %254 = vmatprep.subr.bf16.mxu0 0
  %255 = vmatpush1.bf16.msra.mxu0 0
  %256 = vmatprep.subr.bf16.mxu0 0
  %257 = vmatpush1.bf16.msra.mxu0 0
  %258 = vmatprep.subr.bf16.mxu0 0
  %259 = vmatpush1.bf16.msra.mxu0 0
  %260 = vmatprep.subr.bf16.mxu0 0
  %261 = vmatpush1.bf16.msra.mxu0 0
  %262 = vmatprep.subr.bf16.mxu0 0
  %263 = vmatpush1.bf16.msra.mxu0 %v130
  %264 = vmatprep.subr.bf16.mxu0 0
  %265 = vmatpush1.bf16.msra.mxu0 %v129
  %266 = vmatprep.subr.bf16.mxu0 0
  %267 = vmatpush2.bf16.msra.mxu0 0
  %268 = vmatprep.subr.bf16.mxu0 0
  %269 = vmatpush2.bf16.msra.mxu0 0
  %270 = vmatprep.subr.bf16.mxu0 0
  %271 = vmatpush2.bf16.msra.mxu0 0
  %272 = vmatprep.subr.bf16.mxu0 0
  %273 = vmatpush2.bf16.msra.mxu0 0
  %274 = vmatprep.subr.bf16.mxu0 0
  %275 = vmatpush2.bf16.msra.mxu0 0
  %276 = vmatprep.subr.bf16.mxu0 0
  %277 = vmatpush2.bf16.msra.mxu0 0
  %278 = vmatprep.subr.bf16.mxu0 0
  %279 = vmatpush2.bf16.msra.mxu0 0
  %280 = vmatprep.subr.bf16.mxu0 0
  %281 = vmatpush2.bf16.msra.mxu0 0
  %282 = vmatprep.mubr.bf16.mxu0 0
  %283 = vmatmul.mubr.bf16.gmra.mxu0 %v140
  %v284 = vpop.f32.mrf.mxu0
  %v285 = vadd.f32 %v136, %v284
  %v286 = vpop.f32.mrf.mxu0
  %v287 = vpop.f32.mrf.mxu0
  %v288 = vadd.f32 %v136, %v287
  %v289 = vpop.f32.mrf.mxu0
  %290 = vmatprep.mubr.bf16.mxu0 0
  %291 = vmatmul.mubr.bf16.gmra.mxu0 %v143
  %v292 = vpop.f32.mrf.mxu0
  %v293 = vadd.f32 %v136, %v292
  %v294 = vpop.f32.mrf.mxu0
  %v295 = vpop.f32.mrf.mxu0
  %v296 = vadd.f32 %v136, %v295
  %v297 = vpop.f32.mrf.mxu0
  %298 = vmatprep.mubr.bf16.mxu0 0
  %299 = vmatmul.mubr.bf16.gmra.mxu0 %v146
  %v300 = vpop.f32.mrf.mxu0
  %v301 = vadd.f32 %v136, %v300
  %v302 = vpop.f32.mrf.mxu0
  %v303 = vpop.f32.mrf.mxu0
  %v304 = vadd.f32 %v136, %v303
  %v305 = vpop.f32.mrf.mxu0
  %306 = vmatprep.mubr.bf16.mxu0 0
  %307 = vmatmul.mubr.bf16.gmra.mxu0 %v149
  %v308 = vpop.f32.mrf.mxu0
  %v309 = vadd.f32 %v136, %v308
  %v310 = vpop.f32.mrf.mxu0
  %v311 = vpop.f32.mrf.mxu0
  %v312 = vadd.f32 %v136, %v311
  %v313 = vpop.f32.mrf.mxu0
  %314 = vmatprep.mubr.bf16.mxu0 0
  %315 = vmatmul.mubr.bf16.gmra.mxu0 %v152
  %v316 = vpop.f32.mrf.mxu0
  %v317 = vadd.f32 %v136, %v316
  %v318 = vpop.f32.mrf.mxu0
  %v319 = vpop.f32.mrf.mxu0
  %v320 = vadd.f32 %v136, %v319
  %v321 = vpop.f32.mrf.mxu0
  %322 = vmatprep.mubr.bf16.mxu0 0
  %323 = vmatmul.mubr.bf16.gmra.mxu0 %v155
  %v324 = vpop.f32.mrf.mxu0
  %v325 = vadd.f32 %v136, %v324
  %v326 = vpop.f32.mrf.mxu0
  %v327 = vpop.f32.mrf.mxu0
  %v328 = vadd.f32 %v136, %v327
  %v329 = vpop.f32.mrf.mxu0
  %330 = vmatprep.mubr.bf16.mxu0 0
  %331 = vmatmul.mubr.bf16.gmra.mxu0 %v158
  %v332 = vpop.f32.mrf.mxu0
  %v333 = vadd.f32 %v136, %v332
  %v334 = vpop.f32.mrf.mxu0
  %v335 = vpop.f32.mrf.mxu0
  %v336 = vadd.f32 %v136, %v335
  %v337 = vpop.f32.mrf.mxu0
  %338 = vmatprep.mubr.bf16.mxu0 0
  %339 = vmatmul.mubr.bf16.gmra.mxu0 %v161
  %v340 = vpop.f32.mrf.mxu0
  %v341 = vadd.f32 %v136, %v340
  %v342 = vpop.f32.mrf.mxu0
  %v343 = vpop.f32.mrf.mxu0
  %v344 = vadd.f32 %v136, %v343
  %v345 = vpop.f32.mrf.mxu0
  %346 = vmatprep.mubr.bf16.mxu0 0
  %347 = vmatmul.mubr.bf16.gmra.mxu0 %v164
  %v348 = vpop.f32.mrf.mxu0
  %v349 = vadd.f32 %v136, %v348
  %v350 = vpop.f32.mrf.mxu0
  %v351 = vpop.f32.mrf.mxu0
  %v352 = vadd.f32 %v136, %v351
  %v353 = vpop.f32.mrf.mxu0
  %354 = vmatprep.mubr.bf16.mxu0 0
  %355 = vmatmul.mubr.bf16.gmra.mxu0 %v167
  %v356 = vpop.f32.mrf.mxu0
  %v357 = vadd.f32 %v136, %v356
  %v358 = vpop.f32.mrf.mxu0
  %v359 = vpop.f32.mrf.mxu0
  %v360 = vadd.f32 %v136, %v359
  %v361 = vpop.f32.mrf.mxu0
  %362 = vmatprep.mubr.bf16.mxu0 0
  %363 = vmatmul.mubr.bf16.gmra.mxu0 %v170
  %v364 = vpop.f32.mrf.mxu0
  %v365 = vadd.f32 %v136, %v364
  %v366 = vpop.f32.mrf.mxu0
  %v367 = vpop.f32.mrf.mxu0
  %v368 = vadd.f32 %v136, %v367
  %v369 = vpop.f32.mrf.mxu0
  %370 = vmatprep.mubr.bf16.mxu0 0
  %371 = vmatmul.mubr.bf16.gmra.mxu0 %v173
  %v372 = vpop.f32.mrf.mxu0
  %v373 = vadd.f32 %v136, %v372
  %v374 = vpop.f32.mrf.mxu0
  %v375 = vpop.f32.mrf.mxu0
  %v376 = vadd.f32 %v136, %v375
  %v377 = vpop.f32.mrf.mxu0
  %378 = vmatprep.mubr.bf16.mxu0 0
  %379 = vmatmul.mubr.bf16.gmra.mxu0 %v176
  %v380 = vpop.f32.mrf.mxu0
  %v381 = vadd.f32 %v136, %v380
  %v382 = vpop.f32.mrf.mxu0
  %v383 = vpop.f32.mrf.mxu0
  %v384 = vadd.f32 %v136, %v383
  %v385 = vpop.f32.mrf.mxu0
  %386 = vmatprep.mubr.bf16.mxu0 0
  %387 = vmatmul.mubr.bf16.gmra.mxu0 %v179
  %v388 = vpop.f32.mrf.mxu0
  %v389 = vadd.f32 %v136, %v388
  %v390 = vpop.f32.mrf.mxu0
  %v391 = vpop.f32.mrf.mxu0
  %v392 = vadd.f32 %v136, %v391
  %v393 = vpop.f32.mrf.mxu0
  %394 = vmatprep.mubr.bf16.mxu0 0
  %395 = vmatmul.mubr.bf16.gmra.mxu0 %v182
  %v396 = vpop.f32.mrf.mxu0
  %v397 = vadd.f32 %v136, %v396
  %v398 = vpop.f32.mrf.mxu0
  %v399 = vpop.f32.mrf.mxu0
  %v400 = vadd.f32 %v136, %v399
  %v401 = vpop.f32.mrf.mxu0
  %402 = vmatprep.mubr.bf16.mxu0 0
  %403 = vmatmul.mubr.bf16.gmra.mxu0 %v185
  %v404 = vpop.f32.mrf.mxu0
  %v405 = vadd.f32 %v136, %v404
  %v406 = vpop.f32.mrf.mxu0
  %v407 = vpop.f32.mrf.mxu0
  %v408 = vadd.f32 %v136, %v407
  %v409 = vpop.f32.mrf.mxu0
  %410 = vmatprep.mubr.bf16.mxu0 0
  %411 = vmatmul.mubr.bf16.gmra.mxu0 %v188
  %v412 = vpop.f32.mrf.mxu0
  %v413 = vadd.f32 %v136, %v412
  %v414 = vpop.f32.mrf.mxu0
  %v415 = vpop.f32.mrf.mxu0
  %v416 = vadd.f32 %v136, %v415
  %v417 = vpop.f32.mrf.mxu0
  %418 = vmatprep.mubr.bf16.mxu0 0
  %419 = vmatmul.mubr.bf16.gmra.mxu0 %v191
  %v420 = vpop.f32.mrf.mxu0
  %v421 = vadd.f32 %v136, %v420
  %v422 = vpop.f32.mrf.mxu0
  %v423 = vpop.f32.mrf.mxu0
  %v424 = vadd.f32 %v136, %v423
  %v425 = vpop.f32.mrf.mxu0
  %426 = vmatprep.mubr.bf16.mxu0 0
  %427 = vmatmul.mubr.bf16.gmra.mxu0 %v194
  %v428 = vpop.f32.mrf.mxu0
  %v429 = vadd.f32 %v136, %v428
  %v430 = vpop.f32.mrf.mxu0
  %v431 = vpop.f32.mrf.mxu0
  %v432 = vadd.f32 %v136, %v431
  %v433 = vpop.f32.mrf.mxu0
  %434 = vmatprep.mubr.bf16.mxu0 0
  %435 = vmatmul.mubr.bf16.gmra.mxu0 %v197
  %v436 = vpop.f32.mrf.mxu0
  %v437 = vadd.f32 %v136, %v436
  %v438 = vpop.f32.mrf.mxu0
  %v439 = vpop.f32.mrf.mxu0
  %v440 = vadd.f32 %v136, %v439
  %v441 = vpop.f32.mrf.mxu0
  %442 = vmatprep.mubr.bf16.mxu0 0
  %443 = vmatmul.mubr.bf16.gmra.mxu0 %v200
  %v444 = vpop.f32.mrf.mxu0
  %v445 = vadd.f32 %v136, %v444
  %v446 = vpop.f32.mrf.mxu0
  %v447 = vpop.f32.mrf.mxu0
  %v448 = vadd.f32 %v136, %v447
  %v449 = vpop.f32.mrf.mxu0
  %450 = vmatprep.mubr.bf16.mxu0 0
  %451 = vmatmul.mubr.bf16.gmra.mxu0 %v203
  %v452 = vpop.f32.mrf.mxu0
  %v453 = vadd.f32 %v136, %v452
  %v454 = vpop.f32.mrf.mxu0
  %v455 = vpop.f32.mrf.mxu0
  %v456 = vadd.f32 %v136, %v455
  %v457 = vpop.f32.mrf.mxu0
  %458 = vmatprep.mubr.bf16.mxu0 0
  %459 = vmatmul.mubr.bf16.gmra.mxu0 %v206
  %v460 = vpop.f32.mrf.mxu0
  %v461 = vadd.f32 %v136, %v460
  %v462 = vpop.f32.mrf.mxu0
  %v463 = vpop.f32.mrf.mxu0
  %v464 = vadd.f32 %v136, %v463
  %v465 = vpop.f32.mrf.mxu0
  %466 = vmatprep.mubr.bf16.mxu0 0
  %467 = vmatmul.mubr.bf16.gmra.mxu0 %v209
  %v468 = vpop.f32.mrf.mxu0
  %v469 = vadd.f32 %v136, %v468
  %v470 = vpop.f32.mrf.mxu0
  %v471 = vpop.f32.mrf.mxu0
  %v472 = vadd.f32 %v136, %v471
  %v473 = vpop.f32.mrf.mxu0
  %474 = vmatprep.mubr.bf16.mxu0 0
  %475 = vmatmul.mubr.bf16.gmra.mxu0 %v212
  %v476 = vpop.f32.mrf.mxu0
  %v477 = vadd.f32 %v136, %v476
  %v478 = vpop.f32.mrf.mxu0
  %v479 = vpop.f32.mrf.mxu0
  %v480 = vadd.f32 %v136, %v479
  %v481 = vpop.f32.mrf.mxu0
  %482 = vmatprep.mubr.bf16.mxu0 0
  %483 = vmatmul.mubr.bf16.gmra.mxu0 %v215
  %v484 = vpop.f32.mrf.mxu0
  %v485 = vadd.f32 %v136, %v484
  %v486 = vpop.f32.mrf.mxu0
  %v487 = vpop.f32.mrf.mxu0
  %v488 = vadd.f32 %v136, %v487
  %v489 = vpop.f32.mrf.mxu0
  %490 = vmatprep.mubr.bf16.mxu0 0
  %491 = vmatmul.mubr.bf16.gmra.mxu0 %v218
  %v492 = vpop.f32.mrf.mxu0
  %v493 = vadd.f32 %v136, %v492
  %v494 = vpop.f32.mrf.mxu0
  %v495 = vpop.f32.mrf.mxu0
  %v496 = vadd.f32 %v136, %v495
  %v497 = vpop.f32.mrf.mxu0
  %498 = vmatprep.mubr.bf16.mxu0 0
  %499 = vmatmul.mubr.bf16.gmra.mxu0 %v221
  %v500 = vpop.f32.mrf.mxu0
  %v501 = vadd.f32 %v136, %v500
  %v502 = vpop.f32.mrf.mxu0
  %v503 = vpop.f32.mrf.mxu0
  %v504 = vadd.f32 %v136, %v503
  %v505 = vpop.f32.mrf.mxu0
  %506 = vmatprep.mubr.bf16.mxu0 0
  %507 = vmatmul.mubr.bf16.gmra.mxu0 %v224
  %v508 = vpop.f32.mrf.mxu0
  %v509 = vadd.f32 %v136, %v508
  %v510 = vpop.f32.mrf.mxu0
  %v511 = vpop.f32.mrf.mxu0
  %v512 = vadd.f32 %v136, %v511
  %v513 = vpop.f32.mrf.mxu0
  %514 = vmatprep.mubr.bf16.mxu0 0
  %515 = vmatmul.mubr.bf16.gmra.mxu0 %v227
  %v516 = vpop.f32.mrf.mxu0
  %v517 = vadd.f32 %v136, %v516
  %v518 = vpop.f32.mrf.mxu0
  %v519 = vpop.f32.mrf.mxu0
  %v520 = vadd.f32 %v136, %v519
  %v521 = vpop.f32.mrf.mxu0
  %522 = vmatprep.mubr.bf16.mxu0 0
  %523 = vmatmul.mubr.bf16.gmra.mxu0 %v230
  %v524 = vpop.f32.mrf.mxu0
  %v525 = vadd.f32 %v136, %v524
  %v526 = vpop.f32.mrf.mxu0
  %v527 = vpop.f32.mrf.mxu0
  %v528 = vadd.f32 %v136, %v527
  %v529 = vpop.f32.mrf.mxu0
  %530 = vmatprep.mubr.bf16.mxu0 0
  %531 = vmatmul.mubr.bf16.gmra.mxu0 %v233
  %v532 = vpop.f32.mrf.mxu0
  %v533 = vadd.f32 %v136, %v532
  %v534 = vpop.f32.mrf.mxu0
  %v535 = vpop.f32.mrf.mxu0
  %v536 = vadd.f32 %v136, %v535
  %v537 = vpop.f32.mrf.mxu0
  %538 = vmatprep.mubr.bf16.mxu0 0
  %539 = vmatmul.mubr.bf16.gmra.mxu0 %v236
  %v540 = vpop.f32.mrf.mxu0
  %v541 = vadd.f32 %v136, %v540
  %v542 = vpop.f32.mrf.mxu0
  %v543 = vpop.f32.mrf.mxu0
  %v544 = vadd.f32 %v136, %v543
  %v545 = vpop.f32.mrf.mxu0
  %546 = vmatprep.mubr.bf16.mxu0 0
  %547 = vmatmul.mubr.bf16.gmra.mxu0 %v239
  %v548 = vpop.f32.mrf.mxu0
  %v549 = vadd.f32 %v136, %v548
  %v550 = vpop.f32.mrf.mxu0
  %v551 = vpop.f32.mrf.mxu0
  %v552 = vadd.f32 %v136, %v551
  %v553 = vpop.f32.mrf.mxu0
  %554 = vmatprep.mubr.bf16.mxu0 0
  %555 = vmatmul.mubr.bf16.gmra.mxu0 %v242
  %v556 = vpop.f32.mrf.mxu0
  %v557 = vadd.f32 %v136, %v556
  %v558 = vpop.f32.mrf.mxu0
  %v559 = vpop.f32.mrf.mxu0
  %v560 = vadd.f32 %v136, %v559
  %v561 = vpop.f32.mrf.mxu0
  %562 = vmatprep.mubr.bf16.mxu0 0
  %563 = vmatmul.mubr.bf16.gmra.mxu0 %v245
  %v564 = vpop.f32.mrf.mxu0
  %v565 = vadd.f32 %v136, %v564
  %v566 = vpop.f32.mrf.mxu0
  %v567 = vpop.f32.mrf.mxu0
  %v568 = vadd.f32 %v136, %v567
  %v569 = vpop.f32.mrf.mxu0
  %570 = vmatprep.mubr.bf16.mxu0 0
  %571 = vmatmul.mubr.bf16.gmra.mxu0 %v248
  %v572 = vpop.f32.mrf.mxu0
  %v573 = vadd.f32 %v136, %v572
  %v574 = vpop.f32.mrf.mxu0
  %v575 = vpop.f32.mrf.mxu0
  %v576 = vpop.f32.mrf.mxu0
  %577 = vdwg.mxu0
  %v578 = vmul.f32 %v285, %v285
  %v579 = vmul.f32 %v288, %v288
  %v580 = vmul.f32 %v293, %v293
  %v581 = vmul.f32 %v296, %v296
  %v582 = vmul.f32 %v301, %v301
  %v583 = vmul.f32 %v304, %v304
  %v584 = vmul.f32 %v309, %v309
  %v585 = vmul.f32 %v312, %v312
  %v586 = vmul.f32 %v317, %v317
  %v587 = vmul.f32 %v320, %v320
  %v588 = vmul.f32 %v325, %v325
  %v589 = vmul.f32 %v328, %v328
  %v590 = vmul.f32 %v333, %v333
  %v591 = vmul.f32 %v336, %v336
  %v592 = vmul.f32 %v341, %v341
  %v593 = vmul.f32 %v344, %v344
  %v594 = vmul.f32 %v349, %v349
  %v595 = vmul.f32 %v352, %v352
  %v596 = vmul.f32 %v357, %v357
  %v597 = vmul.f32 %v360, %v360
  %v598 = vmul.f32 %v365, %v365
  %v599 = vmul.f32 %v368, %v368
  %v600 = vmul.f32 %v373, %v373
  %v601 = vmul.f32 %v376, %v376
  %v602 = vmul.f32 %v381, %v381
  %v603 = vmul.f32 %v384, %v384
  %v604 = vmul.f32 %v389, %v389
  %v605 = vmul.f32 %v392, %v392
  %v606 = vmul.f32 %v397, %v397
  %v607 = vmul.f32 %v400, %v400
  %v608 = vmul.f32 %v405, %v405
  %v609 = vmul.f32 %v408, %v408
  %v610 = vmul.f32 %v413, %v413
  %v611 = vmul.f32 %v416, %v416
  %v612 = vmul.f32 %v421, %v421
  %v613 = vmul.f32 %v424, %v424
  %v614 = vmul.f32 %v429, %v429
  %v615 = vmul.f32 %v432, %v432
  %v616 = vmul.f32 %v437, %v437
  %v617 = vmul.f32 %v440, %v440
  %v618 = vmul.f32 %v445, %v445
  %v619 = vmul.f32 %v448, %v448
  %v620 = vmul.f32 %v453, %v453
  %v621 = vmul.f32 %v456, %v456
  %v622 = vmul.f32 %v461, %v461
  %v623 = vmul.f32 %v464, %v464
  %v624 = vmul.f32 %v469, %v469
  %v625 = vmul.f32 %v472, %v472
  %v626 = vmul.f32 %v477, %v477
  %v627 = vmul.f32 %v480, %v480
  %v628 = vmul.f32 %v485, %v485
  %v629 = vmul.f32 %v488, %v488
  %v630 = vmul.f32 %v493, %v493
  %v631 = vmul.f32 %v496, %v496
  %v632 = vmul.f32 %v501, %v501
  %v633 = vmul.f32 %v504, %v504
  %v634 = vmul.f32 %v509, %v509
  %v635 = vmul.f32 %v512, %v512
  %v636 = vmul.f32 %v517, %v517
  %v637 = vmul.f32 %v520, %v520
  %v638 = vmul.f32 %v525, %v525
  %v639 = vmul.f32 %v528, %v528
  %v640 = vmul.f32 %v533, %v533
  %v641 = vmul.f32 %v536, %v536
  %v642 = vmul.f32 %v541, %v541
  %v643 = vmul.f32 %v544, %v544
  %v644 = vmul.f32 %v549, %v549
  %v645 = vmul.f32 %v552, %v552
  %v646 = vmul.f32 %v557, %v557
  %v647 = vmul.f32 %v560, %v560
  %v648 = vmul.f32 %v565, %v565
  %v649 = vmul.f32 %v568, %v568
  %v650 = vmul.f32 %v573, %v573
  %v651 = vmul.f32 %v578, 0.0002
  %v652 = vmul.f32 %v579, 0.0002
  %v653 = vmul.f32 %v580, 0.0002
  %v654 = vmul.f32 %v581, 0.0002
  %v655 = vmul.f32 %v582, 0.0002
  %v656 = vmul.f32 %v583, 0.0002
  %v657 = vmul.f32 %v584, 0.0002
  %v658 = vmul.f32 %v585, 0.0002
  %v659 = vmul.f32 %v586, 0.0002
  %v660 = vmul.f32 %v587, 0.0002
  %v661 = vmul.f32 %v588, 0.0002
  %v662 = vmul.f32 %v589, 0.0002
  %v663 = vmul.f32 %v590, 0.0002
  %v664 = vmul.f32 %v591, 0.0002
  %v665 = vmul.f32 %v592, 0.0002
  %v666 = vmul.f32 %v593, 0.0002
  %v667 = vmul.f32 %v594, 0.0002
  %v668 = vmul.f32 %v595, 0.0002
  %v669 = vmul.f32 %v596, 0.0002
  %v670 = vmul.f32 %v597, 0.0002
  %v671 = vmul.f32 %v598, 0.0002
  %v672 = vmul.f32 %v599, 0.0002
  %v673 = vmul.f32 %v600, 0.0002
  %v674 = vmul.f32 %v601, 0.0002
  %v675 = vmul.f32 %v602, 0.0002
  %v676 = vmul.f32 %v603, 0.0002
  %v677 = vmul.f32 %v604, 0.0002
  %v678 = vmul.f32 %v605, 0.0002
  %v679 = vmul.f32 %v606, 0.0002
  %v680 = vmul.f32 %v607, 0.0002
  %v681 = vmul.f32 %v608, 0.0002
  %v682 = vmul.f32 %v609, 0.0002
  %v683 = vmul.f32 %v610, 0.0002
  %v684 = vmul.f32 %v611, 0.0002
  %v685 = vmul.f32 %v612, 0.0002
  %v686 = vmul.f32 %v613, 0.0002
  %v687 = vmul.f32 %v614, 0.0002
  %v688 = vmul.f32 %v615, 0.0002
  %v689 = vmul.f32 %v616, 0.0002
  %v690 = vmul.f32 %v617, 0.0002
  %v691 = vmul.f32 %v618, 0.0002
  %v692 = vmul.f32 %v619, 0.0002
  %v693 = vmul.f32 %v620, 0.0002
  %v694 = vmul.f32 %v621, 0.0002
  %v695 = vmul.f32 %v622, 0.0002
  %v696 = vmul.f32 %v623, 0.0002
  %v697 = vmul.f32 %v624, 0.0002
  %v698 = vmul.f32 %v625, 0.0002
  %v699 = vmul.f32 %v626, 0.0002
  %v700 = vmul.f32 %v627, 0.0002
  %v701 = vmul.f32 %v628, 0.0002
  %v702 = vmul.f32 %v629, 0.0002
  %v703 = vmul.f32 %v630, 0.0002
  %v704 = vmul.f32 %v631, 0.0002
  %v705 = vmul.f32 %v632, 0.0002
  %v706 = vmul.f32 %v633, 0.0002
  %v707 = vmul.f32 %v634, 0.0002
  %v708 = vmul.f32 %v635, 0.0002
  %v709 = vmul.f32 %v636, 0.0002
  %v710 = vmul.f32 %v637, 0.0002
  %v711 = vmul.f32 %v638, 0.0002
  %v712 = vmul.f32 %v639, 0.0002
  %v713 = vmul.f32 %v640, 0.0002
  %v714 = vmul.f32 %v641, 0.0002
  %v715 = vmul.f32 %v642, 0.0002
  %v716 = vmul.f32 %v643, 0.0002
  %v717 = vmul.f32 %v644, 0.0002
  %v718 = vmul.f32 %v645, 0.0002
  %v719 = vmul.f32 %v646, 0.0002
  %v720 = vmul.f32 %v647, 0.0002
  %v721 = vmul.f32 %v648, 0.0002
  %v722 = vmul.f32 %v649, 0.0002
  %v723 = vmul.f32 %v650, 0.0002
  %v724 = vadd.f32 %v651, 1.0
  %v725 = vadd.f32 %v652, 1.0
  %v726 = vadd.f32 %v653, 1.0
  %v727 = vadd.f32 %v654, 1.0
  %v728 = vadd.f32 %v655, 1.0
  %v729 = vadd.f32 %v656, 1.0
  %v730 = vadd.f32 %v657, 1.0
  %v731 = vadd.f32 %v658, 1.0
  %v732 = vadd.f32 %v659, 1.0
  %v733 = vadd.f32 %v660, 1.0
  %v734 = vadd.f32 %v661, 1.0
  %v735 = vadd.f32 %v662, 1.0
  %v736 = vadd.f32 %v663, 1.0
  %v737 = vadd.f32 %v664, 1.0
  %v738 = vadd.f32 %v665, 1.0
  %v739 = vadd.f32 %v666, 1.0
  %v740 = vadd.f32 %v667, 1.0
  %v741 = vadd.f32 %v668, 1.0
  %v742 = vadd.f32 %v669, 1.0
  %v743 = vadd.f32 %v670, 1.0
  %v744 = vadd.f32 %v671, 1.0
  %v745 = vadd.f32 %v672, 1.0
  %v746 = vadd.f32 %v673, 1.0
  %v747 = vadd.f32 %v674, 1.0
  %v748 = vadd.f32 %v675, 1.0
  %v749 = vadd.f32 %v676, 1.0
  %v750 = vadd.f32 %v677, 1.0
  %v751 = vadd.f32 %v678, 1.0
  %v752 = vadd.f32 %v679, 1.0
  %v753 = vadd.f32 %v680, 1.0
  %v754 = vadd.f32 %v681, 1.0
  %v755 = vadd.f32 %v682, 1.0
  %v756 = vadd.f32 %v683, 1.0
  %v757 = vadd.f32 %v684, 1.0
  %v758 = vadd.f32 %v685, 1.0
  %v759 = vadd.f32 %v686, 1.0
  %v760 = vadd.f32 %v687, 1.0
  %v761 = vadd.f32 %v688, 1.0
  %v762 = vadd.f32 %v689, 1.0
  %v763 = vadd.f32 %v690, 1.0
  %v764 = vadd.f32 %v691, 1.0
  %v765 = vadd.f32 %v692, 1.0
  %v766 = vadd.f32 %v693, 1.0
  %v767 = vadd.f32 %v694, 1.0
  %v768 = vadd.f32 %v695, 1.0
  %v769 = vadd.f32 %v696, 1.0
  %v770 = vadd.f32 %v697, 1.0
  %v771 = vadd.f32 %v698, 1.0
  %v772 = vadd.f32 %v699, 1.0
  %v773 = vadd.f32 %v700, 1.0
  %v774 = vadd.f32 %v701, 1.0
  %v775 = vadd.f32 %v702, 1.0
  %v776 = vadd.f32 %v703, 1.0
  %v777 = vadd.f32 %v704, 1.0
  %v778 = vadd.f32 %v705, 1.0
  %v779 = vadd.f32 %v706, 1.0
  %v780 = vadd.f32 %v707, 1.0
  %v781 = vadd.f32 %v708, 1.0
  %v782 = vadd.f32 %v709, 1.0
  %v783 = vadd.f32 %v710, 1.0
  %v784 = vadd.f32 %v711, 1.0
  %v785 = vadd.f32 %v712, 1.0
  %v786 = vadd.f32 %v713, 1.0
  %v787 = vadd.f32 %v714, 1.0
  %v788 = vadd.f32 %v715, 1.0
  %v789 = vadd.f32 %v716, 1.0
  %v790 = vadd.f32 %v717, 1.0
  %v791 = vadd.f32 %v718, 1.0
  %v792 = vadd.f32 %v719, 1.0
  %v793 = vadd.f32 %v720, 1.0
  %v794 = vadd.f32 %v721, 1.0
  %v795 = vadd.f32 %v722, 1.0
  %v796 = vadd.f32 %v723, 1.0
  %v797 = vrsqrt.pop %v724
  %v798 = vrsqrt.pop %v725
  %v799 = vrsqrt.pop %v726
  %v800 = vrsqrt.pop %v727
  %v801 = vrsqrt.pop %v728
  %v802 = vrsqrt.pop %v729
  %v803 = vrsqrt.pop %v730
  %v804 = vrsqrt.pop %v731
  %v805 = vrsqrt.pop %v732
  %v806 = vrsqrt.pop %v733
  %v807 = vrsqrt.pop %v734
  %v808 = vrsqrt.pop %v735
  %v809 = vrsqrt.pop %v736
  %v810 = vrsqrt.pop %v737
  %v811 = vrsqrt.pop %v738
  %v812 = vrsqrt.pop %v739
  %v813 = vrsqrt.pop %v740
  %v814 = vrsqrt.pop %v741
  %v815 = vrsqrt.pop %v742
  %v816 = vrsqrt.pop %v743
  %v817 = vrsqrt.pop %v744
  %v818 = vrsqrt.pop %v745
  %v819 = vrsqrt.pop %v746
  %v820 = vrsqrt.pop %v747
  %v821 = vrsqrt.pop %v748
  %v822 = vrsqrt.pop %v749
  %v823 = vrsqrt.pop %v750
  %v824 = vrsqrt.pop %v751
  %v825 = vrsqrt.pop %v752
  %v826 = vrsqrt.pop %v753
  %v827 = vrsqrt.pop %v754
  %v828 = vrsqrt.pop %v755
  %v829 = vrsqrt.pop %v756
  %v830 = vrsqrt.pop %v757
  %v831 = vrsqrt.pop %v758
  %v832 = vrsqrt.pop %v759
  %v833 = vrsqrt.pop %v760
  %v834 = vrsqrt.pop %v761
  %v835 = vrsqrt.pop %v762
  %v836 = vrsqrt.pop %v763
  %v837 = vrsqrt.pop %v764
  %v838 = vrsqrt.pop %v765
  %v839 = vrsqrt.pop %v766
  %v840 = vrsqrt.pop %v767
  %v841 = vrsqrt.pop %v768
  %v842 = vrsqrt.pop %v769
  %v843 = vrsqrt.pop %v770
  %v844 = vrsqrt.pop %v771
  %v845 = vrsqrt.pop %v772
  %v846 = vrsqrt.pop %v773
  %v847 = vrsqrt.pop %v774
  %v848 = vrsqrt.pop %v775
  %v849 = vrsqrt.pop %v776
  %v850 = vrsqrt.pop %v777
  %v851 = vrsqrt.pop %v778
  %v852 = vrsqrt.pop %v779
  %v853 = vrsqrt.pop %v780
  %v854 = vrsqrt.pop %v781
  %v855 = vrsqrt.pop %v782
  %v856 = vrsqrt.pop %v783
  %v857 = vrsqrt.pop %v784
  %v858 = vrsqrt.pop %v785
  %v859 = vrsqrt.pop %v786
  %v860 = vrsqrt.pop %v787
  %v861 = vrsqrt.pop %v788
  %v862 = vrsqrt.pop %v789
  %v863 = vrsqrt.pop %v790
  %v864 = vrsqrt.pop %v791
  %v865 = vrsqrt.pop %v792
  %v866 = vrsqrt.pop %v793
  %v867 = vrsqrt.pop %v794
  %v868 = vrsqrt.pop %v795
  %v869 = vrsqrt.pop %v796
  %v870 = vmul.f32 %v285, %v797
  %v871 = vmul.f32 %v288, %v798
  %v872 = vmul.f32 %v293, %v799
  %v873 = vmul.f32 %v296, %v800
  %v874 = vmul.f32 %v301, %v801
  %v875 = vmul.f32 %v304, %v802
  %v876 = vmul.f32 %v309, %v803
  %v877 = vmul.f32 %v312, %v804
  %v878 = vmul.f32 %v317, %v805
  %v879 = vmul.f32 %v320, %v806
  %v880 = vmul.f32 %v325, %v807
  %v881 = vmul.f32 %v328, %v808
  %v882 = vmul.f32 %v333, %v809
  %v883 = vmul.f32 %v336, %v810
  %v884 = vmul.f32 %v341, %v811
  %v885 = vmul.f32 %v344, %v812
  %v886 = vmul.f32 %v349, %v813
  %v887 = vmul.f32 %v352, %v814
  %v888 = vmul.f32 %v357, %v815
  %v889 = vmul.f32 %v360, %v816
  %v890 = vmul.f32 %v365, %v817
  %v891 = vmul.f32 %v368, %v818
  %v892 = vmul.f32 %v373, %v819
  %v893 = vmul.f32 %v376, %v820
  %v894 = vmul.f32 %v381, %v821
  %v895 = vmul.f32 %v384, %v822
  %v896 = vmul.f32 %v389, %v823
  %v897 = vmul.f32 %v392, %v824
  %v898 = vmul.f32 %v397, %v825
  %v899 = vmul.f32 %v400, %v826
  %v900 = vmul.f32 %v405, %v827
  %v901 = vmul.f32 %v408, %v828
  %v902 = vmul.f32 %v413, %v829
  %v903 = vmul.f32 %v416, %v830
  %v904 = vmul.f32 %v421, %v831
  %v905 = vmul.f32 %v424, %v832
  %v906 = vmul.f32 %v429, %v833
  %v907 = vmul.f32 %v432, %v834
  %v908 = vmul.f32 %v437, %v835
  %v909 = vmul.f32 %v440, %v836
  %v910 = vmul.f32 %v445, %v837
  %v911 = vmul.f32 %v448, %v838
  %v912 = vmul.f32 %v453, %v839
  %v913 = vmul.f32 %v456, %v840
  %v914 = vmul.f32 %v461, %v841
  %v915 = vmul.f32 %v464, %v842
  %v916 = vmul.f32 %v469, %v843
  %v917 = vmul.f32 %v472, %v844
  %v918 = vmul.f32 %v477, %v845
  %v919 = vmul.f32 %v480, %v846
  %v920 = vmul.f32 %v485, %v847
  %v921 = vmul.f32 %v488, %v848
  %v922 = vmul.f32 %v493, %v849
  %v923 = vmul.f32 %v496, %v850
  %v924 = vmul.f32 %v501, %v851
  %v925 = vmul.f32 %v504, %v852
  %v926 = vmul.f32 %v509, %v853
  %v927 = vmul.f32 %v512, %v854
  %v928 = vmul.f32 %v517, %v855
  %v929 = vmul.f32 %v520, %v856
  %v930 = vmul.f32 %v525, %v857
  %v931 = vmul.f32 %v528, %v858
  %v932 = vmul.f32 %v533, %v859
  %v933 = vmul.f32 %v536, %v860
  %v934 = vmul.f32 %v541, %v861
  %v935 = vmul.f32 %v544, %v862
  %v936 = vmul.f32 %v549, %v863
  %v937 = vmul.f32 %v552, %v864
  %v938 = vmul.f32 %v557, %v865
  %v939 = vmul.f32 %v560, %v866
  %v940 = vmul.f32 %v565, %v867
  %v941 = vmul.f32 %v568, %v868
  %v942 = vmul.f32 %v573, %v869
  %vm943 = vcmask 31744
  %944 = vst.msk [vmem:[%s3] sm:$0xff] %vm943, %v870
  %945 = vst.msk [vmem:[%s3 + $0x8] sm:$0xff] %vm943, %v871
  %946 = vst.msk [vmem:[%s3 + $0x10] sm:$0xff] %vm943, %v872
  %947 = vst.msk [vmem:[%s3 + $0x18] sm:$0xff] %vm943, %v873
  %948 = vst.msk [vmem:[%s3 + $0x20] sm:$0xff] %vm943, %v874
  %949 = vst.msk [vmem:[%s3 + $0x28] sm:$0xff] %vm943, %v875
  %950 = vst.msk [vmem:[%s3 + $0x30] sm:$0xff] %vm943, %v876
  %951 = vst.msk [vmem:[%s3 + $0x38] sm:$0xff] %vm943, %v877
  %952 = vst.msk [vmem:[%s3 + $0x40] sm:$0xff] %vm943, %v878
  %953 = vst.msk [vmem:[%s3 + $0x48] sm:$0xff] %vm943, %v879
  %954 = vst.msk [vmem:[%s3 + $0x50] sm:$0xff] %vm943, %v880
  %955 = vst.msk [vmem:[%s3 + $0x58] sm:$0xff] %vm943, %v881
  %956 = vst.msk [vmem:[%s3 + $0x60] sm:$0xff] %vm943, %v882
  %957 = vst.msk [vmem:[%s3 + $0x68] sm:$0xff] %vm943, %v883
  %958 = vst.msk [vmem:[%s3 + $0x70] sm:$0xff] %vm943, %v884
  %959 = vst.msk [vmem:[%s3 + $0x78] sm:$0xff] %vm943, %v885
  %960 = vst.msk [vmem:[%s3 + $0x80] sm:$0xff] %vm943, %v886
  %961 = vst.msk [vmem:[%s3 + $0x88] sm:$0xff] %vm943, %v887
  %962 = vst.msk [vmem:[%s3 + $0x90] sm:$0xff] %vm943, %v888
  %963 = vst.msk [vmem:[%s3 + $0x98] sm:$0xff] %vm943, %v889
  %964 = vst.msk [vmem:[%s3 + $0xa0] sm:$0xff] %vm943, %v890
  %965 = vst.msk [vmem:[%s3 + $0xa8] sm:$0xff] %vm943, %v891
  %966 = vst.msk [vmem:[%s3 + $0xb0] sm:$0xff] %vm943, %v892
  %967 = vst.msk [vmem:[%s3 + $0xb8] sm:$0xff] %vm943, %v893
  %968 = vst.msk [vmem:[%s3 + $0xc0] sm:$0xff] %vm943, %v894
  %969 = vst.msk [vmem:[%s3 + $0xc8] sm:$0xff] %vm943, %v895
  %970 = vst.msk [vmem:[%s3 + $0xd0] sm:$0xff] %vm943, %v896
  %971 = vst.msk [vmem:[%s3 + $0xd8] sm:$0xff] %vm943, %v897
  %972 = vst.msk [vmem:[%s3 + $0xe0] sm:$0xff] %vm943, %v898
  %973 = vst.msk [vmem:[%s3 + $0xe8] sm:$0xff] %vm943, %v899
  %974 = vst.msk [vmem:[%s3 + $0xf0] sm:$0xff] %vm943, %v900
  %975 = vst.msk [vmem:[%s3 + $0xf8] sm:$0xff] %vm943, %v901
  %976 = vst.msk [vmem:[%s3 + $0x100] sm:$0xff] %vm943, %v902
  %977 = vst.msk [vmem:[%s3 + $0x108] sm:$0xff] %vm943, %v903
  %978 = vst.msk [vmem:[%s3 + $0x110] sm:$0xff] %vm943, %v904
  %979 = vst.msk [vmem:[%s3 + $0x118] sm:$0xff] %vm943, %v905
  %980 = vst.msk [vmem:[%s3 + $0x120] sm:$0xff] %vm943, %v906
  %981 = vst.msk [vmem:[%s3 + $0x128] sm:$0xff] %vm943, %v907
  %982 = vst.msk [vmem:[%s3 + $0x130] sm:$0xff] %vm943, %v908
  %983 = vst.msk [vmem:[%s3 + $0x138] sm:$0xff] %vm943, %v909
  %984 = vst.msk [vmem:[%s3 + $0x140] sm:$0xff] %vm943, %v910
  %985 = vst.msk [vmem:[%s3 + $0x148] sm:$0xff] %vm943, %v911
  %986 = vst.msk [vmem:[%s3 + $0x150] sm:$0xff] %vm943, %v912
  %987 = vst.msk [vmem:[%s3 + $0x158] sm:$0xff] %vm943, %v913
  %988 = vst.msk [vmem:[%s3 + $0x160] sm:$0xff] %vm943, %v914
  %989 = vst.msk [vmem:[%s3 + $0x168] sm:$0xff] %vm943, %v915
  %990 = vst.msk [vmem:[%s3 + $0x170] sm:$0xff] %vm943, %v916
  %991 = vst.msk [vmem:[%s3 + $0x178] sm:$0xff] %vm943, %v917
  %992 = vst.msk [vmem:[%s3 + $0x180] sm:$0xff] %vm943, %v918
  %993 = vst.msk [vmem:[%s3 + $0x188] sm:$0xff] %vm943, %v919
  %994 = vst.msk [vmem:[%s3 + $0x190] sm:$0xff] %vm943, %v920
  %995 = vst.msk [vmem:[%s3 + $0x198] sm:$0xff] %vm943, %v921
  %996 = vst.msk [vmem:[%s3 + $0x1a0] sm:$0xff] %vm943, %v922
  %997 = vst.msk [vmem:[%s3 + $0x1a8] sm:$0xff] %vm943, %v923
  %998 = vst.msk [vmem:[%s3 + $0x1b0] sm:$0xff] %vm943, %v924
  %999 = vst.msk [vmem:[%s3 + $0x1b8] sm:$0xff] %vm943, %v925
  %1000 = vst.msk [vmem:[%s3 + $0x1c0] sm:$0xff] %vm943, %v926
  %1001 = vst.msk [vmem:[%s3 + $0x1c8] sm:$0xff] %vm943, %v927
  %1002 = vst.msk [vmem:[%s3 + $0x1d0] sm:$0xff] %vm943, %v928
  %1003 = vst.msk [vmem:[%s3 + $0x1d8] sm:$0xff] %vm943, %v929
  %1004 = vst.msk [vmem:[%s3 + $0x1e0] sm:$0xff] %vm943, %v930
  %1005 = vst.msk [vmem:[%s3 + $0x1e8] sm:$0xff] %vm943, %v931
  %1006 = vst.msk [vmem:[%s3 + $0x1f0] sm:$0xff] %vm943, %v932
  %1007 = vst.msk [vmem:[%s3 + $0x1f8] sm:$0xff] %vm943, %v933
  %1008 = vst.msk [vmem:[%s3 + $0x200] sm:$0xff] %vm943, %v934
  %1009 = vst.msk [vmem:[%s3 + $0x208] sm:$0xff] %vm943, %v935
  %1010 = vst.msk [vmem:[%s3 + $0x210] sm:$0xff] %vm943, %v936
  %1011 = vst.msk [vmem:[%s3 + $0x218] sm:$0xff] %vm943, %v937
  %1012 = vst.msk [vmem:[%s3 + $0x220] sm:$0xff] %vm943, %v938
  %1013 = vst.msk [vmem:[%s3 + $0x228] sm:$0xff] %vm943, %v939
  %1014 = vst.msk [vmem:[%s3 + $0x230] sm:$0xff] %vm943, %v940
  %1015 = vst.msk [vmem:[%s3 + $0x238] sm:$0xff] %vm943, %v941
  %1016 = vst.msk [vmem:[%s3 + $0x240] sm:$0xff] %vm943, %v942
  // Predicated region
  $region14: #{ff_hybrid_vae_forward.15} parent=0 // pred_check
    _
  $region15: #{ff_hybrid_vae_forward.15} parent=0 // pred_check_branch
    %1018 = sbr.rel (0) target = $region17
  $region16: #{ff_hybrid_vae_forward.15} parent=0 // pred_region
    _
  $region17: #{ff_hybrid_vae_forward.15} parent=0 // pred_fallthru
    _
  // Predicated region
  $region18: #{ff_hybrid_vae_forward.15} parent=0 // pred_check
    _
  $region19: #{ff_hybrid_vae_forward.15} parent=0 // pred_check_branch
    %1020 = sbr.rel (0) target = $region21
  $region20: #{ff_hybrid_vae_forward.15} parent=0 // pred_region
    _
  $region21: #{ff_hybrid_vae_forward.15} parent=0 // pred_fallthru
    _

</llo_original>
